<compile_context>
chip_gen: v7x
topology: tpu7x:2x2x1
jax: 0.10.0
libtpu: 0.0.40
codegen_flags: <defaults>
</compile_context>

<pallas_src>
import math
import functools

import jax
import jax.numpy as jnp
from jax.experimental import pallas as pl
from jax.experimental.pallas import tpu as pltpu


# ----------------------------- model hyper-params (small) -----------------------------
BATCH = 2
TIME_STEPS = 8          # max_len == seq len (positional encoding is added over time)
VOICES = 3              # embedding_size = 3 * voices = 9
D_MODEL = 32
NHEAD = 4
NUM_LAYERS = 2
DIM_FF = 64
EMBED = 3 * VOICES
LN_EPS = 1e-5           # torch.nn.LayerNorm default


# ----------------------------------- kernel helpers -----------------------------------
def _layer_norm(x, gamma, beta, eps=LN_EPS):
    mu = jnp.mean(x, axis=-1, keepdims=True)
    var = jnp.mean((x - mu) ** 2, axis=-1, keepdims=True)
    return (x - mu) * jax.lax.rsqrt(var + eps) * gamma + beta


def _bf16(x):
    return x.astype(jnp.bfloat16)


def _vmem_spec():
    return pl.BlockSpec(memory_space=pltpu.MemorySpace.VMEM)


# ------------------------------------ fused kernel -------------------------------------
def groove_fused_kernel(src_ref, pe_ref, w_in_ref, b_in_ref,
                        wqkv_ref, bqkv_ref, wo_ref, bo_ref,
                        w1_ref, b1_ref, w2_ref, b2_ref,
                        g1_ref, be1_ref, g2_ref, be2_ref,
                        gn_ref, bn_ref, w_out_ref, b_out_ref,
                        out_ref, *, nhead, num_layers, batch, time_steps, voices):
    BT = batch * time_steps
    D = w_in_ref.shape[1]
    dh = D // nhead
    scale = 1.0 / math.sqrt(dh)

    # ---- InputLayer: linearIn -> ReLU -> + positional encoding (2D (B*T, D)) ----
    x = jnp.dot(_bf16(src_ref[...]), w_in_ref[...],
                preferred_element_type=jnp.float32) + b_in_ref[...]
    x = jnp.maximum(x, 0.0) + pe_ref[...]                                   # (BT, D) f32

    # ---- TransformerEncoder: post-norm layers, statically unrolled ----
    for l in range(num_layers):
        bqkv = bqkv_ref[l]                  # (1, 3D)
        bo = bo_ref[l]                      # (1, D)
        b1 = b1_ref[l]                      # (1, F)
        b2 = b2_ref[l]                      # (1, D)
        g1, be1 = g1_ref[l], be1_ref[l]
        g2, be2 = g2_ref[l], be2_ref[l]

        # fused QKV projection: single (BT, D) x (D, 3D) matmul
        qkv = jnp.dot(_bf16(x), wqkv_ref[l],
                      preferred_element_type=jnp.float32) + bqkv            # (BT, 3D)
        qkv3 = qkv.reshape(batch, time_steps, 3 * D)
        q = qkv3[:, :, 0:D]
        k = qkv3[:, :, D:2 * D]
        v = qkv3[:, :, 2 * D:3 * D]

        # per-head scores/context (static unroll, 3D batched einsums); heads concatenated,
        # then a SINGLE (BT, D) x (D, D) output projection instead of 4 accumulated dots.
        heads = []
        for h in range(nhead):
            qh = _bf16(q[:, :, h * dh:(h + 1) * dh] * scale)
            kh = _bf16(k[:, :, h * dh:(h + 1) * dh])
            vh = _bf16(v[:, :, h * dh:(h + 1) * dh])
            s = jnp.einsum('btd,bsd->bts', qh, kh,
                           preferred_element_type=jnp.float32)              # (B, T, T)
            s = s - jnp.max(s, axis=-1, keepdims=True)                      # stable softmax
            p = jnp.exp(s)
            p = p * pl.reciprocal(jnp.sum(p, axis=-1, keepdims=True), approx=True)
            heads.append(jnp.einsum('bts,bsd->btd', _bf16(p), vh,
                                    preferred_element_type=jnp.float32))
        ctx = jnp.concatenate(heads, axis=-1).reshape(BT, D)
        attn = jnp.dot(_bf16(ctx), wo_ref[l],
                       preferred_element_type=jnp.float32) + bo

        x = _layer_norm(x + attn, g1, be1)

        # feed-forward: ReLU MLP
        ff = jnp.dot(_bf16(x), w1_ref[l], preferred_element_type=jnp.float32) + b1
        ff = jnp.maximum(ff, 0.0)
        ff = jnp.dot(_bf16(ff), w2_ref[l], preferred_element_type=jnp.float32) + b2

        x = _layer_norm(x + ff, g2, be2)

    # ---- final encoder LayerNorm + OutputLayer ----
    x = _layer_norm(x, gn_ref[...], bn_ref[...])
    y = jnp.dot(_bf16(x), w_out_ref[...],
                preferred_element_type=jnp.float32) + b_out_ref[...]        # (BT, 3*voices)

    hits = y[:, 0:voices]                                   # raw logits
    vels = jax.nn.sigmoid(y[:, voices:2 * voices])          # sigmoid(velocities)
    offs = jnp.tanh(y[:, 2 * voices:3 * voices]) * 0.5      # tanh(offsets) * 0.5
    # single lane-contiguous output slab -> one unmasked(-ish) store / one output DMA
    out_ref[...] = jnp.concatenate([hits, vels, offs], axis=-1).astype(out_ref.dtype)


# ------------------------------------ wrappers ------------------------------------------
def pack_params(params):
    """Stack per-layer params into (L, ...) arrays; pre-cast matmul weights to bf16."""
    stack = lambda name: jnp.stack([lp[name] for lp in params['layers']])
    return dict(
        w_in=_bf16(params['w_in']), b_in=params['b_in'],
        wqkv=_bf16(stack('wqkv')), bqkv=stack('bqkv'),
        wo=_bf16(stack('wo')), bo=stack('bo'),
        w1=_bf16(stack('w1')), b1=stack('b1'),
        w2=_bf16(stack('w2')), b2=stack('b2'),
        g1=stack('g1'), be1=stack('be1'),
        g2=stack('g2'), be2=stack('be2'),
        gn=params['gn'], bn=params['bn'],
        w_out=_bf16(params['w_out']), b_out=params['b_out'],
    )


def groove_transformer_forward(src, params):
    B, T, E = src.shape
    pk = pack_params(params)
    src2d = src.reshape(B * T, E)
    pe2d = jnp.tile(params['pe'][:T], (B, 1))        # (B*T, D), row b*T + t -> pe[t]

    kern = functools.partial(groove_fused_kernel, nhead=NHEAD, num_layers=NUM_LAYERS,
                             batch=B, time_steps=T, voices=VOICES)
    args = (src2d, pe2d, pk['w_in'], pk['b_in'],
            pk['wqkv'], pk['bqkv'], pk['wo'], pk['bo'],
            pk['w1'], pk['b1'], pk['w2'], pk['b2'],
            pk['g1'], pk['be1'], pk['g2'], pk['be2'],
            pk['gn'], pk['bn'], pk['w_out'], pk['b_out'])

    y = pl.pallas_call(
        kern,
        out_shape=jax.ShapeDtypeStruct((B * T, 3 * VOICES), jnp.float32),
        in_specs=[_vmem_spec() for _ in args],
        out_specs=_vmem_spec(),
    )(*args)

    y = y.reshape(B, T, 3 * VOICES)
    return y[..., :VOICES], y[..., VOICES:2 * VOICES], y[..., 2 * VOICES:]


# --------------------------------- parameter setup --------------------------------------
def make_positional_encoding(max_len, d_model):
    position = jnp.arange(max_len, dtype=jnp.float32)[:, None]
    div_term = jnp.exp(jnp.arange(0, d_model, 2, dtype=jnp.float32)
                       * (-math.log(10000.0) / d_model))
    pe = jnp.zeros((max_len, d_model), jnp.float32)
    pe = pe.at[:, 0::2].set(jnp.sin(position * div_term))
    pe = pe.at[:, 1::2].set(jnp.cos(position * div_term))   # d_model even
    return pe


class _KeyGen:
    def __init__(self, key):
        self._key = key

    def __call__(self):
        self._key, sub = jax.random.split(self._key)
        return sub


def init_params(key):
    kg = _KeyGen(key)

    def u(shape, scale=0.1):
        return jax.random.uniform(kg(), shape, jnp.float32, -scale, scale)

    params = {
        'w_in': u((EMBED, D_MODEL)),
        'b_in': u((1, D_MODEL)),
        'pe': make_positional_encoding(TIME_STEPS, D_MODEL),
        'w_out': u((D_MODEL, EMBED)),
        'b_out': u((1, EMBED)),
        'gn': jnp.ones((1, D_MODEL), jnp.float32),   # final encoder LayerNorm
        'bn': jnp.zeros((1, D_MODEL), jnp.float32),
        'layers': [],
    }
    for _ in range(NUM_LAYERS):
        params['layers'].append(dict(
            wqkv=u((D_MODEL, 3 * D_MODEL)), bqkv=u((1, 3 * D_MODEL)),
            wo=u((D_MODEL, D_MODEL)), bo=u((1, D_MODEL)),
            w1=u((D_MODEL, DIM_FF)), b1=u((1, DIM_FF)),
            w2=u((DIM_FF, D_MODEL)), b2=u((1, D_MODEL)),
            g1=jnp.ones((1, D_MODEL), jnp.float32), be1=jnp.zeros((1, D_MODEL), jnp.float32),
            g2=jnp.ones((1, D_MODEL), jnp.float32), be2=jnp.zeros((1, D_MODEL), jnp.float32),
        ))
    return params


# ---------------------------- pure-JAX reference (for checking) -------------------------
def reference_forward(src, params):
    def ln(x, g, b, eps=LN_EPS):
        mu = x.mean(-1, keepdims=True)
        var = ((x - mu) ** 2).mean(-1, keepdims=True)
        return (x - mu) / jnp.sqrt(var + eps) * g + b

    x = jnp.maximum(src @ params['w_in'] + params['b_in'], 0.0) + params['pe']
    for lp in params['layers']:
        B, T, D = x.shape
        dh = D // NHEAD
        qkv = x @ lp['wqkv'] + lp['bqkv']
        q, k, v = qkv[..., :D], qkv[..., D:2 * D], qkv[..., 2 * D:]
        qh = q.reshape(B, T, NHEAD, dh).transpose(0, 2, 1, 3)
        kh = k.reshape(B, T, NHEAD, dh).transpose(0, 2, 1, 3)
        vh = v.reshape(B, T, NHEAD, dh).transpose(0, 2, 1, 3)
        s = jnp.einsum('bhtd,bhsd->bhts', qh, kh) / math.sqrt(dh)
        p = jax.nn.softmax(s, axis=-1)
        o = jnp.einsum('bhts,bhsd->bhtd', p, vh).transpose(0, 2, 1, 3).reshape(B, T, D)
        attn = o @ lp['wo'] + lp['bo']
        x = ln(x + attn, lp['g1'], lp['be1'])
        ff = jnp.maximum(x @ lp['w1'] + lp['b1'], 0.0) @ lp['w2'] + lp['b2']
        x = ln(x + ff, lp['g2'], lp['be2'])
    x = ln(x, params['gn'], params['bn'])
    y = x @ params['w_out'] + params['b_out']
    V = VOICES
    return y[..., :V], jax.nn.sigmoid(y[..., V:2 * V]), jnp.tanh(y[..., 2 * V:]) * 0.5


# ----------------------------------------- main ------------------------------------------
if __name__ == "__main__":
    key = jax.random.PRNGKey(0)
    k_in, k_params = jax.random.split(key)

    src = jax.random.normal(k_in, (BATCH, TIME_STEPS, EMBED), jnp.float32)
    params = init_params(k_params)

    hits, vels, offs = groove_transformer_forward(src, params)
    jax.block_until_ready((hits, vels, offs))

    ref_h, ref_v, ref_o = reference_forward(src, params)
    assert hits.shape == (BATCH, TIME_STEPS, VOICES)
    assert vels.shape == (BATCH, TIME_STEPS, VOICES)
    assert offs.shape == (BATCH, TIME_STEPS, VOICES)
    assert jnp.allclose(hits, ref_h, atol=3e-2, rtol=3e-2)
    assert jnp.allclose(vels, ref_v, atol=3e-2, rtol=3e-2)
    assert jnp.allclose(offs, ref_o, atol=3e-2, rtol=3e-2)

    print("KERNEL_OK")
</pallas_src>

<mosaic_0001>
module attributes {stable_mosaic.version = 11 : i64} {
  func.func @groove_fused_kernel(%arg0: memref<16x9xf32, #tpu.memory_space<vmem>>, %arg1: memref<16x32xf32, #tpu.memory_space<vmem>>, %arg2: memref<9x32xbf16, #tpu.memory_space<vmem>>, %arg3: memref<1x32xf32, #tpu.memory_space<vmem>>, %arg4: memref<2x32x96xbf16, #tpu.memory_space<vmem>>, %arg5: memref<2x1x96xf32, #tpu.memory_space<vmem>>, %arg6: memref<2x32x32xbf16, #tpu.memory_space<vmem>>, %arg7: memref<2x1x32xf32, #tpu.memory_space<vmem>>, %arg8: memref<2x32x64xbf16, #tpu.memory_space<vmem>>, %arg9: memref<2x1x64xf32, #tpu.memory_space<vmem>>, %arg10: memref<2x64x32xbf16, #tpu.memory_space<vmem>>, %arg11: memref<2x1x32xf32, #tpu.memory_space<vmem>>, %arg12: memref<2x1x32xf32, #tpu.memory_space<vmem>>, %arg13: memref<2x1x32xf32, #tpu.memory_space<vmem>>, %arg14: memref<2x1x32xf32, #tpu.memory_space<vmem>>, %arg15: memref<2x1x32xf32, #tpu.memory_space<vmem>>, %arg16: memref<1x32xf32, #tpu.memory_space<vmem>>, %arg17: memref<1x32xf32, #tpu.memory_space<vmem>>, %arg18: memref<32x9xbf16, #tpu.memory_space<vmem>>, %arg19: memref<1x9xf32, #tpu.memory_space<vmem>>, %arg20: memref<16x9xf32, #tpu.memory_space<vmem>>) attributes {dimension_semantics = [], scalar_prefetch = 0 : i64, scratch_operands = 0 : i64, tpu.core_type = #tpu.core_type<tc>} {
    %c0 = arith.constant 0 : index
    %c0_0 = arith.constant 0 : index
    %0 = vector.load %arg0[%c0, %c0_0] : memref<16x9xf32, #tpu.memory_space<vmem>>, vector<16x9xf32>
    %1 = arith.truncf %0 : vector<16x9xf32> to vector<16x9xbf16>
    %c0_1 = arith.constant 0 : index
    %c0_2 = arith.constant 0 : index
    %2 = vector.load %arg2[%c0_1, %c0_2] : memref<9x32xbf16, #tpu.memory_space<vmem>>, vector<9x32xbf16>
    %cst = arith.constant dense<0.000000e+00> : vector<16x32xf32>
    %3 = tpu.matmul %1, %2, %cst {dimension_numbers = #tpu.dot_dimension_numbers<[1], [0], [0], [1], [0, 0, 1, 1], [], []>} : vector<16x9xbf16>, vector<9x32xbf16>, vector<16x32xf32> -> vector<16x32xf32>
    %c0_3 = arith.constant 0 : index
    %c0_4 = arith.constant 0 : index
    %4 = vector.load %arg3[%c0_3, %c0_4] : memref<1x32xf32, #tpu.memory_space<vmem>>, vector<1x32xf32>
    %5 = vector.broadcast %4 : vector<1x32xf32> to vector<16x32xf32>
    %6 = arith.addf %3, %5 : vector<16x32xf32>
    %cst_5 = arith.constant 0.000000e+00 : f32
    %7 = vector.broadcast %cst_5 : f32 to vector<16x32xf32>
    %8 = arith.maximumf %6, %7 : vector<16x32xf32>
    %c0_6 = arith.constant 0 : index
    %c0_7 = arith.constant 0 : index
    %9 = vector.load %arg1[%c0_6, %c0_7] : memref<16x32xf32, #tpu.memory_space<vmem>>, vector<16x32xf32>
    %10 = arith.addf %8, %9 : vector<16x32xf32>
    %c0_8 = arith.constant 0 : index
    %c0_9 = arith.constant 0 : index
    %c0_10 = arith.constant 0 : index
    %11 = vector.load %arg5[%c0_8, %c0_9, %c0_10] : memref<2x1x96xf32, #tpu.memory_space<vmem>>, vector<1x1x96xf32>
    %12 = vector.shape_cast %11 : vector<1x1x96xf32> to vector<1x96xf32>
    %c0_11 = arith.constant 0 : index
    %c0_12 = arith.constant 0 : index
    %c0_13 = arith.constant 0 : index
    %13 = vector.load %arg7[%c0_11, %c0_12, %c0_13] : memref<2x1x32xf32, #tpu.memory_space<vmem>>, vector<1x1x32xf32>
    %14 = vector.shape_cast %13 : vector<1x1x32xf32> to vector<1x32xf32>
    %c0_14 = arith.constant 0 : index
    %c0_15 = arith.constant 0 : index
    %c0_16 = arith.constant 0 : index
    %15 = vector.load %arg9[%c0_14, %c0_15, %c0_16] : memref<2x1x64xf32, #tpu.memory_space<vmem>>, vector<1x1x64xf32>
    %16 = vector.shape_cast %15 : vector<1x1x64xf32> to vector<1x64xf32>
    %c0_17 = arith.constant 0 : index
    %c0_18 = arith.constant 0 : index
    %c0_19 = arith.constant 0 : index
    %17 = vector.load %arg11[%c0_17, %c0_18, %c0_19] : memref<2x1x32xf32, #tpu.memory_space<vmem>>, vector<1x1x32xf32>
    %18 = vector.shape_cast %17 : vector<1x1x32xf32> to vector<1x32xf32>
    %c0_20 = arith.constant 0 : index
    %c0_21 = arith.constant 0 : index
    %c0_22 = arith.constant 0 : index
    %19 = vector.load %arg12[%c0_20, %c0_21, %c0_22] : memref<2x1x32xf32, #tpu.memory_space<vmem>>, vector<1x1x32xf32>
    %20 = vector.shape_cast %19 : vector<1x1x32xf32> to vector<1x32xf32>
    %c0_23 = arith.constant 0 : index
    %c0_24 = arith.constant 0 : index
    %c0_25 = arith.constant 0 : index
    %21 = vector.load %arg13[%c0_23, %c0_24, %c0_25] : memref<2x1x32xf32, #tpu.memory_space<vmem>>, vector<1x1x32xf32>
    %22 = vector.shape_cast %21 : vector<1x1x32xf32> to vector<1x32xf32>
    %c0_26 = arith.constant 0 : index
    %c0_27 = arith.constant 0 : index
    %c0_28 = arith.constant 0 : index
    %23 = vector.load %arg14[%c0_26, %c0_27, %c0_28] : memref<2x1x32xf32, #tpu.memory_space<vmem>>, vector<1x1x32xf32>
    %24 = vector.shape_cast %23 : vector<1x1x32xf32> to vector<1x32xf32>
    %c0_29 = arith.constant 0 : index
    %c0_30 = arith.constant 0 : index
    %c0_31 = arith.constant 0 : index
    %25 = vector.load %arg15[%c0_29, %c0_30, %c0_31] : memref<2x1x32xf32, #tpu.memory_space<vmem>>, vector<1x1x32xf32>
    %26 = vector.shape_cast %25 : vector<1x1x32xf32> to vector<1x32xf32>
    %27 = arith.truncf %10 : vector<16x32xf32> to vector<16x32xbf16>
    %c0_32 = arith.constant 0 : index
    %c0_33 = arith.constant 0 : index
    %c0_34 = arith.constant 0 : index
    %28 = vector.load %arg4[%c0_32, %c0_33, %c0_34] : memref<2x32x96xbf16, #tpu.memory_space<vmem>>, vector<1x32x96xbf16>
    %29 = vector.shape_cast %28 : vector<1x32x96xbf16> to vector<32x96xbf16>
    %cst_35 = arith.constant dense<0.000000e+00> : vector<16x96xf32>
    %30 = tpu.matmul %27, %29, %cst_35 {dimension_numbers = #tpu.dot_dimension_numbers<[1], [0], [0], [1], [0, 0, 1, 1], [], []>} : vector<16x32xbf16>, vector<32x96xbf16>, vector<16x96xf32> -> vector<16x96xf32>
    %31 = vector.broadcast %12 : vector<1x96xf32> to vector<16x96xf32>
    %32 = arith.addf %30, %31 : vector<16x96xf32>
    %33 = vector.shape_cast %32 : vector<16x96xf32> to vector<2x8x96xf32>
    %34 = vector.extract_strided_slice %33 {offsets = [0, 0, 0], sizes = [2, 8, 32], strides = [1, 1, 1]} : vector<2x8x96xf32> to vector<2x8x32xf32>
    %35 = vector.extract_strided_slice %33 {offsets = [0, 0, 32], sizes = [2, 8, 32], strides = [1, 1, 1]} : vector<2x8x96xf32> to vector<2x8x32xf32>
    %36 = vector.extract_strided_slice %33 {offsets = [0, 0, 64], sizes = [2, 8, 32], strides = [1, 1, 1]} : vector<2x8x96xf32> to vector<2x8x32xf32>
    %37 = vector.extract_strided_slice %34 {offsets = [0, 0, 0], sizes = [2, 8, 8], strides = [1, 1, 1]} : vector<2x8x32xf32> to vector<2x8x8xf32>
    %cst_36 = arith.constant 0.353553385 : f32
    %38 = vector.broadcast %cst_36 : f32 to vector<2x8x8xf32>
    %39 = arith.mulf %37, %38 : vector<2x8x8xf32>
    %40 = arith.truncf %39 : vector<2x8x8xf32> to vector<2x8x8xbf16>
    %41 = vector.extract_strided_slice %35 {offsets = [0, 0, 0], sizes = [2, 8, 8], strides = [1, 1, 1]} : vector<2x8x32xf32> to vector<2x8x8xf32>
    %42 = arith.truncf %41 : vector<2x8x8xf32> to vector<2x8x8xbf16>
    %43 = vector.extract_strided_slice %36 {offsets = [0, 0, 0], sizes = [2, 8, 8], strides = [1, 1, 1]} : vector<2x8x32xf32> to vector<2x8x8xf32>
    %44 = arith.truncf %43 : vector<2x8x8xf32> to vector<2x8x8xbf16>
    "tpu.trace_start"() <{level = 10 : i32, message = "btd,bsd->bts"}> : () -> ()
    %cst_37 = arith.constant dense<0.000000e+00> : vector<2x8x8xf32>
    %45 = tpu.matmul %40, %42, %cst_37 {dimension_numbers = #tpu.dot_dimension_numbers<[2], [2], [1], [1], [0, 0, 0, 1, 1, 1], [0], [0]>} : vector<2x8x8xbf16>, vector<2x8x8xbf16>, vector<2x8x8xf32> -> vector<2x8x8xf32>
    "tpu.trace_stop"() : () -> ()
    %cst_38 = arith.constant dense<0xFF800000> : vector<2x8xf32>
    %46 = vector.multi_reduction <maximumf>, %45, %cst_38 [2] : vector<2x8x8xf32> to vector<2x8xf32>
    %47 = vector.shape_cast %46 : vector<2x8xf32> to vector<2x8x1xf32>
    %48 = vector.broadcast %47 : vector<2x8x1xf32> to vector<2x8x8xf32>
    %49 = arith.subf %45, %48 : vector<2x8x8xf32>
    %50 = math.exp %49 : vector<2x8x8xf32>
    %cst_39 = arith.constant dense<0.000000e+00> : vector<2x8xf32>
    %51 = vector.multi_reduction <add>, %50, %cst_39 [2] : vector<2x8x8xf32> to vector<2x8xf32>
    %52 = vector.shape_cast %51 : vector<2x8xf32> to vector<2x8x1xf32>
    %53 = tpu.reciprocal %52 {approx = true} : vector<2x8x1xf32> -> vector<2x8x1xf32>
    %54 = vector.broadcast %53 : vector<2x8x1xf32> to vector<2x8x8xf32>
    %55 = arith.mulf %50, %54 : vector<2x8x8xf32>
    %56 = arith.truncf %55 : vector<2x8x8xf32> to vector<2x8x8xbf16>
    "tpu.trace_start"() <{level = 10 : i32, message = "bts,bsd->btd"}> : () -> ()
    %cst_40 = arith.constant dense<0.000000e+00> : vector<2x8x8xf32>
    %57 = tpu.matmul %56, %44, %cst_40 {dimension_numbers = #tpu.dot_dimension_numbers<[2], [1], [1], [2], [0, 0, 0, 1, 1, 2], [0], [0]>} : vector<2x8x8xbf16>, vector<2x8x8xbf16>, vector<2x8x8xf32> -> vector<2x8x8xf32>
    "tpu.trace_stop"() : () -> ()
    %58 = vector.extract_strided_slice %34 {offsets = [0, 0, 8], sizes = [2, 8, 8], strides = [1, 1, 1]} : vector<2x8x32xf32> to vector<2x8x8xf32>
    %cst_41 = arith.constant 0.353553385 : f32
    %59 = vector.broadcast %cst_41 : f32 to vector<2x8x8xf32>
    %60 = arith.mulf %58, %59 : vector<2x8x8xf32>
    %61 = arith.truncf %60 : vector<2x8x8xf32> to vector<2x8x8xbf16>
    %62 = vector.extract_strided_slice %35 {offsets = [0, 0, 8], sizes = [2, 8, 8], strides = [1, 1, 1]} : vector<2x8x32xf32> to vector<2x8x8xf32>
    %63 = arith.truncf %62 : vector<2x8x8xf32> to vector<2x8x8xbf16>
    %64 = vector.extract_strided_slice %36 {offsets = [0, 0, 8], sizes = [2, 8, 8], strides = [1, 1, 1]} : vector<2x8x32xf32> to vector<2x8x8xf32>
    %65 = arith.truncf %64 : vector<2x8x8xf32> to vector<2x8x8xbf16>
    "tpu.trace_start"() <{level = 10 : i32, message = "btd,bsd->bts"}> : () -> ()
    %cst_42 = arith.constant dense<0.000000e+00> : vector<2x8x8xf32>
    %66 = tpu.matmul %61, %63, %cst_42 {dimension_numbers = #tpu.dot_dimension_numbers<[2], [2], [1], [1], [0, 0, 0, 1, 1, 1], [0], [0]>} : vector<2x8x8xbf16>, vector<2x8x8xbf16>, vector<2x8x8xf32> -> vector<2x8x8xf32>
    "tpu.trace_stop"() : () -> ()
    %cst_43 = arith.constant dense<0xFF800000> : vector<2x8xf32>
    %67 = vector.multi_reduction <maximumf>, %66, %cst_43 [2] : vector<2x8x8xf32> to vector<2x8xf32>
    %68 = vector.shape_cast %67 : vector<2x8xf32> to vector<2x8x1xf32>
    %69 = vector.broadcast %68 : vector<2x8x1xf32> to vector<2x8x8xf32>
    %70 = arith.subf %66, %69 : vector<2x8x8xf32>
    %71 = math.exp %70 : vector<2x8x8xf32>
    %cst_44 = arith.constant dense<0.000000e+00> : vector<2x8xf32>
    %72 = vector.multi_reduction <add>, %71, %cst_44 [2] : vector<2x8x8xf32> to vector<2x8xf32>
    %73 = vector.shape_cast %72 : vector<2x8xf32> to vector<2x8x1xf32>
    %74 = tpu.reciprocal %73 {approx = true} : vector<2x8x1xf32> -> vector<2x8x1xf32>
    %75 = vector.broadcast %74 : vector<2x8x1xf32> to vector<2x8x8xf32>
    %76 = arith.mulf %71, %75 : vector<2x8x8xf32>
    %77 = arith.truncf %76 : vector<2x8x8xf32> to vector<2x8x8xbf16>
    "tpu.trace_start"() <{level = 10 : i32, message = "bts,bsd->btd"}> : () -> ()
    %cst_45 = arith.constant dense<0.000000e+00> : vector<2x8x8xf32>
    %78 = tpu.matmul %77, %65, %cst_45 {dimension_numbers = #tpu.dot_dimension_numbers<[2], [1], [1], [2], [0, 0, 0, 1, 1, 2], [0], [0]>} : vector<2x8x8xbf16>, vector<2x8x8xbf16>, vector<2x8x8xf32> -> vector<2x8x8xf32>
    "tpu.trace_stop"() : () -> ()
    %79 = vector.extract_strided_slice %34 {offsets = [0, 0, 16], sizes = [2, 8, 8], strides = [1, 1, 1]} : vector<2x8x32xf32> to vector<2x8x8xf32>
    %cst_46 = arith.constant 0.353553385 : f32
    %80 = vector.broadcast %cst_46 : f32 to vector<2x8x8xf32>
    %81 = arith.mulf %79, %80 : vector<2x8x8xf32>
    %82 = arith.truncf %81 : vector<2x8x8xf32> to vector<2x8x8xbf16>
    %83 = vector.extract_strided_slice %35 {offsets = [0, 0, 16], sizes = [2, 8, 8], strides = [1, 1, 1]} : vector<2x8x32xf32> to vector<2x8x8xf32>
    %84 = arith.truncf %83 : vector<2x8x8xf32> to vector<2x8x8xbf16>
    %85 = vector.extract_strided_slice %36 {offsets = [0, 0, 16], sizes = [2, 8, 8], strides = [1, 1, 1]} : vector<2x8x32xf32> to vector<2x8x8xf32>
    %86 = arith.truncf %85 : vector<2x8x8xf32> to vector<2x8x8xbf16>
    "tpu.trace_start"() <{level = 10 : i32, message = "btd,bsd->bts"}> : () -> ()
    %cst_47 = arith.constant dense<0.000000e+00> : vector<2x8x8xf32>
    %87 = tpu.matmul %82, %84, %cst_47 {dimension_numbers = #tpu.dot_dimension_numbers<[2], [2], [1], [1], [0, 0, 0, 1, 1, 1], [0], [0]>} : vector<2x8x8xbf16>, vector<2x8x8xbf16>, vector<2x8x8xf32> -> vector<2x8x8xf32>
    "tpu.trace_stop"() : () -> ()
    %cst_48 = arith.constant dense<0xFF800000> : vector<2x8xf32>
    %88 = vector.multi_reduction <maximumf>, %87, %cst_48 [2] : vector<2x8x8xf32> to vector<2x8xf32>
    %89 = vector.shape_cast %88 : vector<2x8xf32> to vector<2x8x1xf32>
    %90 = vector.broadcast %89 : vector<2x8x1xf32> to vector<2x8x8xf32>
    %91 = arith.subf %87, %90 : vector<2x8x8xf32>
    %92 = math.exp %91 : vector<2x8x8xf32>
    %cst_49 = arith.constant dense<0.000000e+00> : vector<2x8xf32>
    %93 = vector.multi_reduction <add>, %92, %cst_49 [2] : vector<2x8x8xf32> to vector<2x8xf32>
    %94 = vector.shape_cast %93 : vector<2x8xf32> to vector<2x8x1xf32>
    %95 = tpu.reciprocal %94 {approx = true} : vector<2x8x1xf32> -> vector<2x8x1xf32>
    %96 = vector.broadcast %95 : vector<2x8x1xf32> to vector<2x8x8xf32>
    %97 = arith.mulf %92, %96 : vector<2x8x8xf32>
    %98 = arith.truncf %97 : vector<2x8x8xf32> to vector<2x8x8xbf16>
    "tpu.trace_start"() <{level = 10 : i32, message = "bts,bsd->btd"}> : () -> ()
    %cst_50 = arith.constant dense<0.000000e+00> : vector<2x8x8xf32>
    %99 = tpu.matmul %98, %86, %cst_50 {dimension_numbers = #tpu.dot_dimension_numbers<[2], [1], [1], [2], [0, 0, 0, 1, 1, 2], [0], [0]>} : vector<2x8x8xbf16>, vector<2x8x8xbf16>, vector<2x8x8xf32> -> vector<2x8x8xf32>
    "tpu.trace_stop"() : () -> ()
    %100 = vector.extract_strided_slice %34 {offsets = [0, 0, 24], sizes = [2, 8, 8], strides = [1, 1, 1]} : vector<2x8x32xf32> to vector<2x8x8xf32>
    %cst_51 = arith.constant 0.353553385 : f32
    %101 = vector.broadcast %cst_51 : f32 to vector<2x8x8xf32>
    %102 = arith.mulf %100, %101 : vector<2x8x8xf32>
    %103 = arith.truncf %102 : vector<2x8x8xf32> to vector<2x8x8xbf16>
    %104 = vector.extract_strided_slice %35 {offsets = [0, 0, 24], sizes = [2, 8, 8], strides = [1, 1, 1]} : vector<2x8x32xf32> to vector<2x8x8xf32>
    %105 = arith.truncf %104 : vector<2x8x8xf32> to vector<2x8x8xbf16>
    %106 = vector.extract_strided_slice %36 {offsets = [0, 0, 24], sizes = [2, 8, 8], strides = [1, 1, 1]} : vector<2x8x32xf32> to vector<2x8x8xf32>
    %107 = arith.truncf %106 : vector<2x8x8xf32> to vector<2x8x8xbf16>
    "tpu.trace_start"() <{level = 10 : i32, message = "btd,bsd->bts"}> : () -> ()
    %cst_52 = arith.constant dense<0.000000e+00> : vector<2x8x8xf32>
    %108 = tpu.matmul %103, %105, %cst_52 {dimension_numbers = #tpu.dot_dimension_numbers<[2], [2], [1], [1], [0, 0, 0, 1, 1, 1], [0], [0]>} : vector<2x8x8xbf16>, vector<2x8x8xbf16>, vector<2x8x8xf32> -> vector<2x8x8xf32>
    "tpu.trace_stop"() : () -> ()
    %cst_53 = arith.constant dense<0xFF800000> : vector<2x8xf32>
    %109 = vector.multi_reduction <maximumf>, %108, %cst_53 [2] : vector<2x8x8xf32> to vector<2x8xf32>
    %110 = vector.shape_cast %109 : vector<2x8xf32> to vector<2x8x1xf32>
    %111 = vector.broadcast %110 : vector<2x8x1xf32> to vector<2x8x8xf32>
    %112 = arith.subf %108, %111 : vector<2x8x8xf32>
    %113 = math.exp %112 : vector<2x8x8xf32>
    %cst_54 = arith.constant dense<0.000000e+00> : vector<2x8xf32>
    %114 = vector.multi_reduction <add>, %113, %cst_54 [2] : vector<2x8x8xf32> to vector<2x8xf32>
    %115 = vector.shape_cast %114 : vector<2x8xf32> to vector<2x8x1xf32>
    %116 = tpu.reciprocal %115 {approx = true} : vector<2x8x1xf32> -> vector<2x8x1xf32>
    %117 = vector.broadcast %116 : vector<2x8x1xf32> to vector<2x8x8xf32>
    %118 = arith.mulf %113, %117 : vector<2x8x8xf32>
    %119 = arith.truncf %118 : vector<2x8x8xf32> to vector<2x8x8xbf16>
    "tpu.trace_start"() <{level = 10 : i32, message = "bts,bsd->btd"}> : () -> ()
    %cst_55 = arith.constant dense<0.000000e+00> : vector<2x8x8xf32>
    %120 = tpu.matmul %119, %107, %cst_55 {dimension_numbers = #tpu.dot_dimension_numbers<[2], [1], [1], [2], [0, 0, 0, 1, 1, 2], [0], [0]>} : vector<2x8x8xbf16>, vector<2x8x8xbf16>, vector<2x8x8xf32> -> vector<2x8x8xf32>
    "tpu.trace_stop"() : () -> ()
    %121 = tpu.concatenate %57, %78, %99, %120 in 2 : vector<2x8x8xf32>, vector<2x8x8xf32>, vector<2x8x8xf32>, vector<2x8x8xf32> -> vector<2x8x32xf32>
    %122 = vector.shape_cast %121 : vector<2x8x32xf32> to vector<16x32xf32>
    %123 = arith.truncf %122 : vector<16x32xf32> to vector<16x32xbf16>
    %c0_56 = arith.constant 0 : index
    %c0_57 = arith.constant 0 : index
    %c0_58 = arith.constant 0 : index
    %124 = vector.load %arg6[%c0_56, %c0_57, %c0_58] : memref<2x32x32xbf16, #tpu.memory_space<vmem>>, vector<1x32x32xbf16>
    %125 = vector.shape_cast %124 : vector<1x32x32xbf16> to vector<32x32xbf16>
    %cst_59 = arith.constant dense<0.000000e+00> : vector<16x32xf32>
    %126 = tpu.matmul %123, %125, %cst_59 {dimension_numbers = #tpu.dot_dimension_numbers<[1], [0], [0], [1], [0, 0, 1, 1], [], []>} : vector<16x32xbf16>, vector<32x32xbf16>, vector<16x32xf32> -> vector<16x32xf32>
    %127 = vector.broadcast %14 : vector<1x32xf32> to vector<16x32xf32>
    %128 = arith.addf %126, %127 : vector<16x32xf32>
    %129 = arith.addf %10, %128 : vector<16x32xf32>
    %cst_60 = arith.constant dense<0.000000e+00> : vector<16xf32>
    %130 = vector.multi_reduction <add>, %129, %cst_60 [1] : vector<16x32xf32> to vector<16xf32>
    %131 = vector.shape_cast %130 : vector<16xf32> to vector<16x1xf32>
    %cst_61 = arith.constant 3.200000e+01 : f32
    %132 = vector.broadcast %cst_61 : f32 to vector<16x1xf32>
    %133 = arith.divf %131, %132 : vector<16x1xf32>
    %134 = vector.broadcast %133 : vector<16x1xf32> to vector<16x32xf32>
    %135 = arith.subf %129, %134 : vector<16x32xf32>
    %136 = arith.mulf %135, %135 : vector<16x32xf32>
    %cst_62 = arith.constant dense<0.000000e+00> : vector<16xf32>
    %137 = vector.multi_reduction <add>, %136, %cst_62 [1] : vector<16x32xf32> to vector<16xf32>
    %138 = vector.shape_cast %137 : vector<16xf32> to vector<16x1xf32>
    %cst_63 = arith.constant 3.200000e+01 : f32
    %139 = vector.broadcast %cst_63 : f32 to vector<16x1xf32>
    %140 = arith.divf %138, %139 : vector<16x1xf32>
    %141 = vector.broadcast %133 : vector<16x1xf32> to vector<16x32xf32>
    %142 = arith.subf %129, %141 : vector<16x32xf32>
    %cst_64 = arith.constant 9.99999974E-6 : f32
    %143 = vector.broadcast %cst_64 : f32 to vector<16x1xf32>
    %144 = arith.addf %140, %143 : vector<16x1xf32>
    %145 = math.rsqrt %144 : vector<16x1xf32>
    %146 = vector.broadcast %145 : vector<16x1xf32> to vector<16x32xf32>
    %147 = arith.mulf %142, %146 : vector<16x32xf32>
    %148 = vector.broadcast %20 : vector<1x32xf32> to vector<16x32xf32>
    %149 = arith.mulf %147, %148 : vector<16x32xf32>
    %150 = vector.broadcast %22 : vector<1x32xf32> to vector<16x32xf32>
    %151 = arith.addf %149, %150 : vector<16x32xf32>
    %152 = arith.truncf %151 : vector<16x32xf32> to vector<16x32xbf16>
    %c0_65 = arith.constant 0 : index
    %c0_66 = arith.constant 0 : index
    %c0_67 = arith.constant 0 : index
    %153 = vector.load %arg8[%c0_65, %c0_66, %c0_67] : memref<2x32x64xbf16, #tpu.memory_space<vmem>>, vector<1x32x64xbf16>
    %154 = vector.shape_cast %153 : vector<1x32x64xbf16> to vector<32x64xbf16>
    %cst_68 = arith.constant dense<0.000000e+00> : vector<16x64xf32>
    %155 = tpu.matmul %152, %154, %cst_68 {dimension_numbers = #tpu.dot_dimension_numbers<[1], [0], [0], [1], [0, 0, 1, 1], [], []>} : vector<16x32xbf16>, vector<32x64xbf16>, vector<16x64xf32> -> vector<16x64xf32>
    %156 = vector.broadcast %16 : vector<1x64xf32> to vector<16x64xf32>
    %157 = arith.addf %155, %156 : vector<16x64xf32>
    %cst_69 = arith.constant 0.000000e+00 : f32
    %158 = vector.broadcast %cst_69 : f32 to vector<16x64xf32>
    %159 = arith.maximumf %157, %158 : vector<16x64xf32>
    %160 = arith.truncf %159 : vector<16x64xf32> to vector<16x64xbf16>
    %c0_70 = arith.constant 0 : index
    %c0_71 = arith.constant 0 : index
    %c0_72 = arith.constant 0 : index
    %161 = vector.load %arg10[%c0_70, %c0_71, %c0_72] : memref<2x64x32xbf16, #tpu.memory_space<vmem>>, vector<1x64x32xbf16>
    %162 = vector.shape_cast %161 : vector<1x64x32xbf16> to vector<64x32xbf16>
    %cst_73 = arith.constant dense<0.000000e+00> : vector<16x32xf32>
    %163 = tpu.matmul %160, %162, %cst_73 {dimension_numbers = #tpu.dot_dimension_numbers<[1], [0], [0], [1], [0, 0, 1, 1], [], []>} : vector<16x64xbf16>, vector<64x32xbf16>, vector<16x32xf32> -> vector<16x32xf32>
    %164 = vector.broadcast %18 : vector<1x32xf32> to vector<16x32xf32>
    %165 = arith.addf %163, %164 : vector<16x32xf32>
    %166 = arith.addf %151, %165 : vector<16x32xf32>
    %cst_74 = arith.constant dense<0.000000e+00> : vector<16xf32>
    %167 = vector.multi_reduction <add>, %166, %cst_74 [1] : vector<16x32xf32> to vector<16xf32>
    %168 = vector.shape_cast %167 : vector<16xf32> to vector<16x1xf32>
    %cst_75 = arith.constant 3.200000e+01 : f32
    %169 = vector.broadcast %cst_75 : f32 to vector<16x1xf32>
    %170 = arith.divf %168, %169 : vector<16x1xf32>
    %171 = vector.broadcast %170 : vector<16x1xf32> to vector<16x32xf32>
    %172 = arith.subf %166, %171 : vector<16x32xf32>
    %173 = arith.mulf %172, %172 : vector<16x32xf32>
    %cst_76 = arith.constant dense<0.000000e+00> : vector<16xf32>
    %174 = vector.multi_reduction <add>, %173, %cst_76 [1] : vector<16x32xf32> to vector<16xf32>
    %175 = vector.shape_cast %174 : vector<16xf32> to vector<16x1xf32>
    %cst_77 = arith.constant 3.200000e+01 : f32
    %176 = vector.broadcast %cst_77 : f32 to vector<16x1xf32>
    %177 = arith.divf %175, %176 : vector<16x1xf32>
    %178 = vector.broadcast %170 : vector<16x1xf32> to vector<16x32xf32>
    %179 = arith.subf %166, %178 : vector<16x32xf32>
    %cst_78 = arith.constant 9.99999974E-6 : f32
    %180 = vector.broadcast %cst_78 : f32 to vector<16x1xf32>
    %181 = arith.addf %177, %180 : vector<16x1xf32>
    %182 = math.rsqrt %181 : vector<16x1xf32>
    %183 = vector.broadcast %182 : vector<16x1xf32> to vector<16x32xf32>
    %184 = arith.mulf %179, %183 : vector<16x32xf32>
    %185 = vector.broadcast %24 : vector<1x32xf32> to vector<16x32xf32>
    %186 = arith.mulf %184, %185 : vector<16x32xf32>
    %187 = vector.broadcast %26 : vector<1x32xf32> to vector<16x32xf32>
    %188 = arith.addf %186, %187 : vector<16x32xf32>
    %c1 = arith.constant 1 : index
    %c0_79 = arith.constant 0 : index
    %c0_80 = arith.constant 0 : index
    %189 = vector.load %arg5[%c1, %c0_79, %c0_80] : memref<2x1x96xf32, #tpu.memory_space<vmem>>, vector<1x1x96xf32>
    %190 = vector.shape_cast %189 : vector<1x1x96xf32> to vector<1x96xf32>
    %c1_81 = arith.constant 1 : index
    %c0_82 = arith.constant 0 : index
    %c0_83 = arith.constant 0 : index
    %191 = vector.load %arg7[%c1_81, %c0_82, %c0_83] : memref<2x1x32xf32, #tpu.memory_space<vmem>>, vector<1x1x32xf32>
    %192 = vector.shape_cast %191 : vector<1x1x32xf32> to vector<1x32xf32>
    %c1_84 = arith.constant 1 : index
    %c0_85 = arith.constant 0 : index
    %c0_86 = arith.constant 0 : index
    %193 = vector.load %arg9[%c1_84, %c0_85, %c0_86] : memref<2x1x64xf32, #tpu.memory_space<vmem>>, vector<1x1x64xf32>
    %194 = vector.shape_cast %193 : vector<1x1x64xf32> to vector<1x64xf32>
    %c1_87 = arith.constant 1 : index
    %c0_88 = arith.constant 0 : index
    %c0_89 = arith.constant 0 : index
    %195 = vector.load %arg11[%c1_87, %c0_88, %c0_89] : memref<2x1x32xf32, #tpu.memory_space<vmem>>, vector<1x1x32xf32>
    %196 = vector.shape_cast %195 : vector<1x1x32xf32> to vector<1x32xf32>
    %c1_90 = arith.constant 1 : index
    %c0_91 = arith.constant 0 : index
    %c0_92 = arith.constant 0 : index
    %197 = vector.load %arg12[%c1_90, %c0_91, %c0_92] : memref<2x1x32xf32, #tpu.memory_space<vmem>>, vector<1x1x32xf32>
    %198 = vector.shape_cast %197 : vector<1x1x32xf32> to vector<1x32xf32>
    %c1_93 = arith.constant 1 : index
    %c0_94 = arith.constant 0 : index
    %c0_95 = arith.constant 0 : index
    %199 = vector.load %arg13[%c1_93, %c0_94, %c0_95] : memref<2x1x32xf32, #tpu.memory_space<vmem>>, vector<1x1x32xf32>
    %200 = vector.shape_cast %199 : vector<1x1x32xf32> to vector<1x32xf32>
    %c1_96 = arith.constant 1 : index
    %c0_97 = arith.constant 0 : index
    %c0_98 = arith.constant 0 : index
    %201 = vector.load %arg14[%c1_96, %c0_97, %c0_98] : memref<2x1x32xf32, #tpu.memory_space<vmem>>, vector<1x1x32xf32>
    %202 = vector.shape_cast %201 : vector<1x1x32xf32> to vector<1x32xf32>
    %c1_99 = arith.constant 1 : index
    %c0_100 = arith.constant 0 : index
    %c0_101 = arith.constant 0 : index
    %203 = vector.load %arg15[%c1_99, %c0_100, %c0_101] : memref<2x1x32xf32, #tpu.memory_space<vmem>>, vector<1x1x32xf32>
    %204 = vector.shape_cast %203 : vector<1x1x32xf32> to vector<1x32xf32>
    %205 = arith.truncf %188 : vector<16x32xf32> to vector<16x32xbf16>
    %c1_102 = arith.constant 1 : index
    %c0_103 = arith.constant 0 : index
    %c0_104 = arith.constant 0 : index
    %206 = vector.load %arg4[%c1_102, %c0_103, %c0_104] : memref<2x32x96xbf16, #tpu.memory_space<vmem>>, vector<1x32x96xbf16>
    %207 = vector.shape_cast %206 : vector<1x32x96xbf16> to vector<32x96xbf16>
    %cst_105 = arith.constant dense<0.000000e+00> : vector<16x96xf32>
    %208 = tpu.matmul %205, %207, %cst_105 {dimension_numbers = #tpu.dot_dimension_numbers<[1], [0], [0], [1], [0, 0, 1, 1], [], []>} : vector<16x32xbf16>, vector<32x96xbf16>, vector<16x96xf32> -> vector<16x96xf32>
    %209 = vector.broadcast %190 : vector<1x96xf32> to vector<16x96xf32>
    %210 = arith.addf %208, %209 : vector<16x96xf32>
    %211 = vector.shape_cast %210 : vector<16x96xf32> to vector<2x8x96xf32>
    %212 = vector.extract_strided_slice %211 {offsets = [0, 0, 0], sizes = [2, 8, 32], strides = [1, 1, 1]} : vector<2x8x96xf32> to vector<2x8x32xf32>
    %213 = vector.extract_strided_slice %211 {offsets = [0, 0, 32], sizes = [2, 8, 32], strides = [1, 1, 1]} : vector<2x8x96xf32> to vector<2x8x32xf32>
    %214 = vector.extract_strided_slice %211 {offsets = [0, 0, 64], sizes = [2, 8, 32], strides = [1, 1, 1]} : vector<2x8x96xf32> to vector<2x8x32xf32>
    %215 = vector.extract_strided_slice %212 {offsets = [0, 0, 0], sizes = [2, 8, 8], strides = [1, 1, 1]} : vector<2x8x32xf32> to vector<2x8x8xf32>
    %cst_106 = arith.constant 0.353553385 : f32
    %216 = vector.broadcast %cst_106 : f32 to vector<2x8x8xf32>
    %217 = arith.mulf %215, %216 : vector<2x8x8xf32>
    %218 = arith.truncf %217 : vector<2x8x8xf32> to vector<2x8x8xbf16>
    %219 = vector.extract_strided_slice %213 {offsets = [0, 0, 0], sizes = [2, 8, 8], strides = [1, 1, 1]} : vector<2x8x32xf32> to vector<2x8x8xf32>
    %220 = arith.truncf %219 : vector<2x8x8xf32> to vector<2x8x8xbf16>
    %221 = vector.extract_strided_slice %214 {offsets = [0, 0, 0], sizes = [2, 8, 8], strides = [1, 1, 1]} : vector<2x8x32xf32> to vector<2x8x8xf32>
    %222 = arith.truncf %221 : vector<2x8x8xf32> to vector<2x8x8xbf16>
    "tpu.trace_start"() <{level = 10 : i32, message = "btd,bsd->bts"}> : () -> ()
    %cst_107 = arith.constant dense<0.000000e+00> : vector<2x8x8xf32>
    %223 = tpu.matmul %218, %220, %cst_107 {dimension_numbers = #tpu.dot_dimension_numbers<[2], [2], [1], [1], [0, 0, 0, 1, 1, 1], [0], [0]>} : vector<2x8x8xbf16>, vector<2x8x8xbf16>, vector<2x8x8xf32> -> vector<2x8x8xf32>
    "tpu.trace_stop"() : () -> ()
    %cst_108 = arith.constant dense<0xFF800000> : vector<2x8xf32>
    %224 = vector.multi_reduction <maximumf>, %223, %cst_108 [2] : vector<2x8x8xf32> to vector<2x8xf32>
    %225 = vector.shape_cast %224 : vector<2x8xf32> to vector<2x8x1xf32>
    %226 = vector.broadcast %225 : vector<2x8x1xf32> to vector<2x8x8xf32>
    %227 = arith.subf %223, %226 : vector<2x8x8xf32>
    %228 = math.exp %227 : vector<2x8x8xf32>
    %cst_109 = arith.constant dense<0.000000e+00> : vector<2x8xf32>
    %229 = vector.multi_reduction <add>, %228, %cst_109 [2] : vector<2x8x8xf32> to vector<2x8xf32>
    %230 = vector.shape_cast %229 : vector<2x8xf32> to vector<2x8x1xf32>
    %231 = tpu.reciprocal %230 {approx = true} : vector<2x8x1xf32> -> vector<2x8x1xf32>
    %232 = vector.broadcast %231 : vector<2x8x1xf32> to vector<2x8x8xf32>
    %233 = arith.mulf %228, %232 : vector<2x8x8xf32>
    %234 = arith.truncf %233 : vector<2x8x8xf32> to vector<2x8x8xbf16>
    "tpu.trace_start"() <{level = 10 : i32, message = "bts,bsd->btd"}> : () -> ()
    %cst_110 = arith.constant dense<0.000000e+00> : vector<2x8x8xf32>
    %235 = tpu.matmul %234, %222, %cst_110 {dimension_numbers = #tpu.dot_dimension_numbers<[2], [1], [1], [2], [0, 0, 0, 1, 1, 2], [0], [0]>} : vector<2x8x8xbf16>, vector<2x8x8xbf16>, vector<2x8x8xf32> -> vector<2x8x8xf32>
    "tpu.trace_stop"() : () -> ()
    %236 = vector.extract_strided_slice %212 {offsets = [0, 0, 8], sizes = [2, 8, 8], strides = [1, 1, 1]} : vector<2x8x32xf32> to vector<2x8x8xf32>
    %cst_111 = arith.constant 0.353553385 : f32
    %237 = vector.broadcast %cst_111 : f32 to vector<2x8x8xf32>
    %238 = arith.mulf %236, %237 : vector<2x8x8xf32>
    %239 = arith.truncf %238 : vector<2x8x8xf32> to vector<2x8x8xbf16>
    %240 = vector.extract_strided_slice %213 {offsets = [0, 0, 8], sizes = [2, 8, 8], strides = [1, 1, 1]} : vector<2x8x32xf32> to vector<2x8x8xf32>
    %241 = arith.truncf %240 : vector<2x8x8xf32> to vector<2x8x8xbf16>
    %242 = vector.extract_strided_slice %214 {offsets = [0, 0, 8], sizes = [2, 8, 8], strides = [1, 1, 1]} : vector<2x8x32xf32> to vector<2x8x8xf32>
    %243 = arith.truncf %242 : vector<2x8x8xf32> to vector<2x8x8xbf16>
    "tpu.trace_start"() <{level = 10 : i32, message = "btd,bsd->bts"}> : () -> ()
    %cst_112 = arith.constant dense<0.000000e+00> : vector<2x8x8xf32>
    %244 = tpu.matmul %239, %241, %cst_112 {dimension_numbers = #tpu.dot_dimension_numbers<[2], [2], [1], [1], [0, 0, 0, 1, 1, 1], [0], [0]>} : vector<2x8x8xbf16>, vector<2x8x8xbf16>, vector<2x8x8xf32> -> vector<2x8x8xf32>
    "tpu.trace_stop"() : () -> ()
    %cst_113 = arith.constant dense<0xFF800000> : vector<2x8xf32>
    %245 = vector.multi_reduction <maximumf>, %244, %cst_113 [2] : vector<2x8x8xf32> to vector<2x8xf32>
    %246 = vector.shape_cast %245 : vector<2x8xf32> to vector<2x8x1xf32>
    %247 = vector.broadcast %246 : vector<2x8x1xf32> to vector<2x8x8xf32>
    %248 = arith.subf %244, %247 : vector<2x8x8xf32>
    %249 = math.exp %248 : vector<2x8x8xf32>
    %cst_114 = arith.constant dense<0.000000e+00> : vector<2x8xf32>
    %250 = vector.multi_reduction <add>, %249, %cst_114 [2] : vector<2x8x8xf32> to vector<2x8xf32>
    %251 = vector.shape_cast %250 : vector<2x8xf32> to vector<2x8x1xf32>
    %252 = tpu.reciprocal %251 {approx = true} : vector<2x8x1xf32> -> vector<2x8x1xf32>
    %253 = vector.broadcast %252 : vector<2x8x1xf32> to vector<2x8x8xf32>
    %254 = arith.mulf %249, %253 : vector<2x8x8xf32>
    %255 = arith.truncf %254 : vector<2x8x8xf32> to vector<2x8x8xbf16>
    "tpu.trace_start"() <{level = 10 : i32, message = "bts,bsd->btd"}> : () -> ()
    %cst_115 = arith.constant dense<0.000000e+00> : vector<2x8x8xf32>
    %256 = tpu.matmul %255, %243, %cst_115 {dimension_numbers = #tpu.dot_dimension_numbers<[2], [1], [1], [2], [0, 0, 0, 1, 1, 2], [0], [0]>} : vector<2x8x8xbf16>, vector<2x8x8xbf16>, vector<2x8x8xf32> -> vector<2x8x8xf32>
    "tpu.trace_stop"() : () -> ()
    %257 = vector.extract_strided_slice %212 {offsets = [0, 0, 16], sizes = [2, 8, 8], strides = [1, 1, 1]} : vector<2x8x32xf32> to vector<2x8x8xf32>
    %cst_116 = arith.constant 0.353553385 : f32
    %258 = vector.broadcast %cst_116 : f32 to vector<2x8x8xf32>
    %259 = arith.mulf %257, %258 : vector<2x8x8xf32>
    %260 = arith.truncf %259 : vector<2x8x8xf32> to vector<2x8x8xbf16>
    %261 = vector.extract_strided_slice %213 {offsets = [0, 0, 16], sizes = [2, 8, 8], strides = [1, 1, 1]} : vector<2x8x32xf32> to vector<2x8x8xf32>
    %262 = arith.truncf %261 : vector<2x8x8xf32> to vector<2x8x8xbf16>
    %263 = vector.extract_strided_slice %214 {offsets = [0, 0, 16], sizes = [2, 8, 8], strides = [1, 1, 1]} : vector<2x8x32xf32> to vector<2x8x8xf32>
    %264 = arith.truncf %263 : vector<2x8x8xf32> to vector<2x8x8xbf16>
    "tpu.trace_start"() <{level = 10 : i32, message = "btd,bsd->bts"}> : () -> ()
    %cst_117 = arith.constant dense<0.000000e+00> : vector<2x8x8xf32>
    %265 = tpu.matmul %260, %262, %cst_117 {dimension_numbers = #tpu.dot_dimension_numbers<[2], [2], [1], [1], [0, 0, 0, 1, 1, 1], [0], [0]>} : vector<2x8x8xbf16>, vector<2x8x8xbf16>, vector<2x8x8xf32> -> vector<2x8x8xf32>
    "tpu.trace_stop"() : () -> ()
    %cst_118 = arith.constant dense<0xFF800000> : vector<2x8xf32>
    %266 = vector.multi_reduction <maximumf>, %265, %cst_118 [2] : vector<2x8x8xf32> to vector<2x8xf32>
    %267 = vector.shape_cast %266 : vector<2x8xf32> to vector<2x8x1xf32>
    %268 = vector.broadcast %267 : vector<2x8x1xf32> to vector<2x8x8xf32>
    %269 = arith.subf %265, %268 : vector<2x8x8xf32>
    %270 = math.exp %269 : vector<2x8x8xf32>
    %cst_119 = arith.constant dense<0.000000e+00> : vector<2x8xf32>
    %271 = vector.multi_reduction <add>, %270, %cst_119 [2] : vector<2x8x8xf32> to vector<2x8xf32>
    %272 = vector.shape_cast %271 : vector<2x8xf32> to vector<2x8x1xf32>
    %273 = tpu.reciprocal %272 {approx = true} : vector<2x8x1xf32> -> vector<2x8x1xf32>
    %274 = vector.broadcast %273 : vector<2x8x1xf32> to vector<2x8x8xf32>
    %275 = arith.mulf %270, %274 : vector<2x8x8xf32>
    %276 = arith.truncf %275 : vector<2x8x8xf32> to vector<2x8x8xbf16>
    "tpu.trace_start"() <{level = 10 : i32, message = "bts,bsd->btd"}> : () -> ()
    %cst_120 = arith.constant dense<0.000000e+00> : vector<2x8x8xf32>
    %277 = tpu.matmul %276, %264, %cst_120 {dimension_numbers = #tpu.dot_dimension_numbers<[2], [1], [1], [2], [0, 0, 0, 1, 1, 2], [0], [0]>} : vector<2x8x8xbf16>, vector<2x8x8xbf16>, vector<2x8x8xf32> -> vector<2x8x8xf32>
    "tpu.trace_stop"() : () -> ()
    %278 = vector.extract_strided_slice %212 {offsets = [0, 0, 24], sizes = [2, 8, 8], strides = [1, 1, 1]} : vector<2x8x32xf32> to vector<2x8x8xf32>
    %cst_121 = arith.constant 0.353553385 : f32
    %279 = vector.broadcast %cst_121 : f32 to vector<2x8x8xf32>
    %280 = arith.mulf %278, %279 : vector<2x8x8xf32>
    %281 = arith.truncf %280 : vector<2x8x8xf32> to vector<2x8x8xbf16>
    %282 = vector.extract_strided_slice %213 {offsets = [0, 0, 24], sizes = [2, 8, 8], strides = [1, 1, 1]} : vector<2x8x32xf32> to vector<2x8x8xf32>
    %283 = arith.truncf %282 : vector<2x8x8xf32> to vector<2x8x8xbf16>
    %284 = vector.extract_strided_slice %214 {offsets = [0, 0, 24], sizes = [2, 8, 8], strides = [1, 1, 1]} : vector<2x8x32xf32> to vector<2x8x8xf32>
    %285 = arith.truncf %284 : vector<2x8x8xf32> to vector<2x8x8xbf16>
    "tpu.trace_start"() <{level = 10 : i32, message = "btd,bsd->bts"}> : () -> ()
    %cst_122 = arith.constant dense<0.000000e+00> : vector<2x8x8xf32>
    %286 = tpu.matmul %281, %283, %cst_122 {dimension_numbers = #tpu.dot_dimension_numbers<[2], [2], [1], [1], [0, 0, 0, 1, 1, 1], [0], [0]>} : vector<2x8x8xbf16>, vector<2x8x8xbf16>, vector<2x8x8xf32> -> vector<2x8x8xf32>
    "tpu.trace_stop"() : () -> ()
    %cst_123 = arith.constant dense<0xFF800000> : vector<2x8xf32>
    %287 = vector.multi_reduction <maximumf>, %286, %cst_123 [2] : vector<2x8x8xf32> to vector<2x8xf32>
    %288 = vector.shape_cast %287 : vector<2x8xf32> to vector<2x8x1xf32>
    %289 = vector.broadcast %288 : vector<2x8x1xf32> to vector<2x8x8xf32>
    %290 = arith.subf %286, %289 : vector<2x8x8xf32>
    %291 = math.exp %290 : vector<2x8x8xf32>
    %cst_124 = arith.constant dense<0.000000e+00> : vector<2x8xf32>
    %292 = vector.multi_reduction <add>, %291, %cst_124 [2] : vector<2x8x8xf32> to vector<2x8xf32>
    %293 = vector.shape_cast %292 : vector<2x8xf32> to vector<2x8x1xf32>
    %294 = tpu.reciprocal %293 {approx = true} : vector<2x8x1xf32> -> vector<2x8x1xf32>
    %295 = vector.broadcast %294 : vector<2x8x1xf32> to vector<2x8x8xf32>
    %296 = arith.mulf %291, %295 : vector<2x8x8xf32>
    %297 = arith.truncf %296 : vector<2x8x8xf32> to vector<2x8x8xbf16>
    "tpu.trace_start"() <{level = 10 : i32, message = "bts,bsd->btd"}> : () -> ()
    %cst_125 = arith.constant dense<0.000000e+00> : vector<2x8x8xf32>
    %298 = tpu.matmul %297, %285, %cst_125 {dimension_numbers = #tpu.dot_dimension_numbers<[2], [1], [1], [2], [0, 0, 0, 1, 1, 2], [0], [0]>} : vector<2x8x8xbf16>, vector<2x8x8xbf16>, vector<2x8x8xf32> -> vector<2x8x8xf32>
    "tpu.trace_stop"() : () -> ()
    %299 = tpu.concatenate %235, %256, %277, %298 in 2 : vector<2x8x8xf32>, vector<2x8x8xf32>, vector<2x8x8xf32>, vector<2x8x8xf32> -> vector<2x8x32xf32>
    %300 = vector.shape_cast %299 : vector<2x8x32xf32> to vector<16x32xf32>
    %301 = arith.truncf %300 : vector<16x32xf32> to vector<16x32xbf16>
    %c1_126 = arith.constant 1 : index
    %c0_127 = arith.constant 0 : index
    %c0_128 = arith.constant 0 : index
    %302 = vector.load %arg6[%c1_126, %c0_127, %c0_128] : memref<2x32x32xbf16, #tpu.memory_space<vmem>>, vector<1x32x32xbf16>
    %303 = vector.shape_cast %302 : vector<1x32x32xbf16> to vector<32x32xbf16>
    %cst_129 = arith.constant dense<0.000000e+00> : vector<16x32xf32>
    %304 = tpu.matmul %301, %303, %cst_129 {dimension_numbers = #tpu.dot_dimension_numbers<[1], [0], [0], [1], [0, 0, 1, 1], [], []>} : vector<16x32xbf16>, vector<32x32xbf16>, vector<16x32xf32> -> vector<16x32xf32>
    %305 = vector.broadcast %192 : vector<1x32xf32> to vector<16x32xf32>
    %306 = arith.addf %304, %305 : vector<16x32xf32>
    %307 = arith.addf %188, %306 : vector<16x32xf32>
    %cst_130 = arith.constant dense<0.000000e+00> : vector<16xf32>
    %308 = vector.multi_reduction <add>, %307, %cst_130 [1] : vector<16x32xf32> to vector<16xf32>
    %309 = vector.shape_cast %308 : vector<16xf32> to vector<16x1xf32>
    %cst_131 = arith.constant 3.200000e+01 : f32
    %310 = vector.broadcast %cst_131 : f32 to vector<16x1xf32>
    %311 = arith.divf %309, %310 : vector<16x1xf32>
    %312 = vector.broadcast %311 : vector<16x1xf32> to vector<16x32xf32>
    %313 = arith.subf %307, %312 : vector<16x32xf32>
    %314 = arith.mulf %313, %313 : vector<16x32xf32>
    %cst_132 = arith.constant dense<0.000000e+00> : vector<16xf32>
    %315 = vector.multi_reduction <add>, %314, %cst_132 [1] : vector<16x32xf32> to vector<16xf32>
    %316 = vector.shape_cast %315 : vector<16xf32> to vector<16x1xf32>
    %cst_133 = arith.constant 3.200000e+01 : f32
    %317 = vector.broadcast %cst_133 : f32 to vector<16x1xf32>
    %318 = arith.divf %316, %317 : vector<16x1xf32>
    %319 = vector.broadcast %311 : vector<16x1xf32> to vector<16x32xf32>
    %320 = arith.subf %307, %319 : vector<16x32xf32>
    %cst_134 = arith.constant 9.99999974E-6 : f32
    %321 = vector.broadcast %cst_134 : f32 to vector<16x1xf32>
    %322 = arith.addf %318, %321 : vector<16x1xf32>
    %323 = math.rsqrt %322 : vector<16x1xf32>
    %324 = vector.broadcast %323 : vector<16x1xf32> to vector<16x32xf32>
    %325 = arith.mulf %320, %324 : vector<16x32xf32>
    %326 = vector.broadcast %198 : vector<1x32xf32> to vector<16x32xf32>
    %327 = arith.mulf %325, %326 : vector<16x32xf32>
    %328 = vector.broadcast %200 : vector<1x32xf32> to vector<16x32xf32>
    %329 = arith.addf %327, %328 : vector<16x32xf32>
    %330 = arith.truncf %329 : vector<16x32xf32> to vector<16x32xbf16>
    %c1_135 = arith.constant 1 : index
    %c0_136 = arith.constant 0 : index
    %c0_137 = arith.constant 0 : index
    %331 = vector.load %arg8[%c1_135, %c0_136, %c0_137] : memref<2x32x64xbf16, #tpu.memory_space<vmem>>, vector<1x32x64xbf16>
    %332 = vector.shape_cast %331 : vector<1x32x64xbf16> to vector<32x64xbf16>
    %cst_138 = arith.constant dense<0.000000e+00> : vector<16x64xf32>
    %333 = tpu.matmul %330, %332, %cst_138 {dimension_numbers = #tpu.dot_dimension_numbers<[1], [0], [0], [1], [0, 0, 1, 1], [], []>} : vector<16x32xbf16>, vector<32x64xbf16>, vector<16x64xf32> -> vector<16x64xf32>
    %334 = vector.broadcast %194 : vector<1x64xf32> to vector<16x64xf32>
    %335 = arith.addf %333, %334 : vector<16x64xf32>
    %cst_139 = arith.constant 0.000000e+00 : f32
    %336 = vector.broadcast %cst_139 : f32 to vector<16x64xf32>
    %337 = arith.maximumf %335, %336 : vector<16x64xf32>
    %338 = arith.truncf %337 : vector<16x64xf32> to vector<16x64xbf16>
    %c1_140 = arith.constant 1 : index
    %c0_141 = arith.constant 0 : index
    %c0_142 = arith.constant 0 : index
    %339 = vector.load %arg10[%c1_140, %c0_141, %c0_142] : memref<2x64x32xbf16, #tpu.memory_space<vmem>>, vector<1x64x32xbf16>
    %340 = vector.shape_cast %339 : vector<1x64x32xbf16> to vector<64x32xbf16>
    %cst_143 = arith.constant dense<0.000000e+00> : vector<16x32xf32>
    %341 = tpu.matmul %338, %340, %cst_143 {dimension_numbers = #tpu.dot_dimension_numbers<[1], [0], [0], [1], [0, 0, 1, 1], [], []>} : vector<16x64xbf16>, vector<64x32xbf16>, vector<16x32xf32> -> vector<16x32xf32>
    %342 = vector.broadcast %196 : vector<1x32xf32> to vector<16x32xf32>
    %343 = arith.addf %341, %342 : vector<16x32xf32>
    %344 = arith.addf %329, %343 : vector<16x32xf32>
    %cst_144 = arith.constant dense<0.000000e+00> : vector<16xf32>
    %345 = vector.multi_reduction <add>, %344, %cst_144 [1] : vector<16x32xf32> to vector<16xf32>
    %346 = vector.shape_cast %345 : vector<16xf32> to vector<16x1xf32>
    %cst_145 = arith.constant 3.200000e+01 : f32
    %347 = vector.broadcast %cst_145 : f32 to vector<16x1xf32>
    %348 = arith.divf %346, %347 : vector<16x1xf32>
    %349 = vector.broadcast %348 : vector<16x1xf32> to vector<16x32xf32>
    %350 = arith.subf %344, %349 : vector<16x32xf32>
    %351 = arith.mulf %350, %350 : vector<16x32xf32>
    %cst_146 = arith.constant dense<0.000000e+00> : vector<16xf32>
    %352 = vector.multi_reduction <add>, %351, %cst_146 [1] : vector<16x32xf32> to vector<16xf32>
    %353 = vector.shape_cast %352 : vector<16xf32> to vector<16x1xf32>
    %cst_147 = arith.constant 3.200000e+01 : f32
    %354 = vector.broadcast %cst_147 : f32 to vector<16x1xf32>
    %355 = arith.divf %353, %354 : vector<16x1xf32>
    %356 = vector.broadcast %348 : vector<16x1xf32> to vector<16x32xf32>
    %357 = arith.subf %344, %356 : vector<16x32xf32>
    %cst_148 = arith.constant 9.99999974E-6 : f32
    %358 = vector.broadcast %cst_148 : f32 to vector<16x1xf32>
    %359 = arith.addf %355, %358 : vector<16x1xf32>
    %360 = math.rsqrt %359 : vector<16x1xf32>
    %361 = vector.broadcast %360 : vector<16x1xf32> to vector<16x32xf32>
    %362 = arith.mulf %357, %361 : vector<16x32xf32>
    %363 = vector.broadcast %202 : vector<1x32xf32> to vector<16x32xf32>
    %364 = arith.mulf %362, %363 : vector<16x32xf32>
    %365 = vector.broadcast %204 : vector<1x32xf32> to vector<16x32xf32>
    %366 = arith.addf %364, %365 : vector<16x32xf32>
    %c0_149 = arith.constant 0 : index
    %c0_150 = arith.constant 0 : index
    %367 = vector.load %arg16[%c0_149, %c0_150] : memref<1x32xf32, #tpu.memory_space<vmem>>, vector<1x32xf32>
    %c0_151 = arith.constant 0 : index
    %c0_152 = arith.constant 0 : index
    %368 = vector.load %arg17[%c0_151, %c0_152] : memref<1x32xf32, #tpu.memory_space<vmem>>, vector<1x32xf32>
    %cst_153 = arith.constant dense<0.000000e+00> : vector<16xf32>
    %369 = vector.multi_reduction <add>, %366, %cst_153 [1] : vector<16x32xf32> to vector<16xf32>
    %370 = vector.shape_cast %369 : vector<16xf32> to vector<16x1xf32>
    %cst_154 = arith.constant 3.200000e+01 : f32
    %371 = vector.broadcast %cst_154 : f32 to vector<16x1xf32>
    %372 = arith.divf %370, %371 : vector<16x1xf32>
    %373 = vector.broadcast %372 : vector<16x1xf32> to vector<16x32xf32>
    %374 = arith.subf %366, %373 : vector<16x32xf32>
    %375 = arith.mulf %374, %374 : vector<16x32xf32>
    %cst_155 = arith.constant dense<0.000000e+00> : vector<16xf32>
    %376 = vector.multi_reduction <add>, %375, %cst_155 [1] : vector<16x32xf32> to vector<16xf32>
    %377 = vector.shape_cast %376 : vector<16xf32> to vector<16x1xf32>
    %cst_156 = arith.constant 3.200000e+01 : f32
    %378 = vector.broadcast %cst_156 : f32 to vector<16x1xf32>
    %379 = arith.divf %377, %378 : vector<16x1xf32>
    %380 = vector.broadcast %372 : vector<16x1xf32> to vector<16x32xf32>
    %381 = arith.subf %366, %380 : vector<16x32xf32>
    %cst_157 = arith.constant 9.99999974E-6 : f32
    %382 = vector.broadcast %cst_157 : f32 to vector<16x1xf32>
    %383 = arith.addf %379, %382 : vector<16x1xf32>
    %384 = math.rsqrt %383 : vector<16x1xf32>
    %385 = vector.broadcast %384 : vector<16x1xf32> to vector<16x32xf32>
    %386 = arith.mulf %381, %385 : vector<16x32xf32>
    %387 = vector.broadcast %367 : vector<1x32xf32> to vector<16x32xf32>
    %388 = arith.mulf %386, %387 : vector<16x32xf32>
    %389 = vector.broadcast %368 : vector<1x32xf32> to vector<16x32xf32>
    %390 = arith.addf %388, %389 : vector<16x32xf32>
    %391 = arith.truncf %390 : vector<16x32xf32> to vector<16x32xbf16>
    %c0_158 = arith.constant 0 : index
    %c0_159 = arith.constant 0 : index
    %392 = vector.load %arg18[%c0_158, %c0_159] : memref<32x9xbf16, #tpu.memory_space<vmem>>, vector<32x9xbf16>
    %cst_160 = arith.constant dense<0.000000e+00> : vector<16x9xf32>
    %393 = tpu.matmul %391, %392, %cst_160 {dimension_numbers = #tpu.dot_dimension_numbers<[1], [0], [0], [1], [0, 0, 1, 1], [], []>} : vector<16x32xbf16>, vector<32x9xbf16>, vector<16x9xf32> -> vector<16x9xf32>
    %c0_161 = arith.constant 0 : index
    %c0_162 = arith.constant 0 : index
    %394 = vector.load %arg19[%c0_161, %c0_162] : memref<1x9xf32, #tpu.memory_space<vmem>>, vector<1x9xf32>
    %395 = vector.broadcast %394 : vector<1x9xf32> to vector<16x9xf32>
    %396 = arith.addf %393, %395 : vector<16x9xf32>
    %397 = vector.extract_strided_slice %396 {offsets = [0, 0], sizes = [16, 3], strides = [1, 1]} : vector<16x9xf32> to vector<16x3xf32>
    %398 = vector.extract_strided_slice %396 {offsets = [0, 3], sizes = [16, 3], strides = [1, 1]} : vector<16x9xf32> to vector<16x3xf32>
    %399 = arith.negf %398 : vector<16x3xf32>
    %400 = math.exp %399 : vector<16x3xf32>
    %cst_163 = arith.constant 1.000000e+00 : f32
    %401 = vector.broadcast %cst_163 : f32 to vector<16x3xf32>
    %402 = arith.addf %401, %400 : vector<16x3xf32>
    %403 = arith.divf %401, %402 : vector<16x3xf32>
    %404 = vector.extract_strided_slice %396 {offsets = [0, 6], sizes = [16, 3], strides = [1, 1]} : vector<16x9xf32> to vector<16x3xf32>
    %405 = math.tanh %404 : vector<16x3xf32>
    %cst_164 = arith.constant 5.000000e-01 : f32
    %406 = vector.broadcast %cst_164 : f32 to vector<16x3xf32>
    %407 = arith.mulf %405, %406 : vector<16x3xf32>
    %408 = tpu.concatenate %397, %403, %407 in 1 : vector<16x3xf32>, vector<16x3xf32>, vector<16x3xf32> -> vector<16x9xf32>
    %c0_165 = arith.constant 0 : index
    %c0_166 = arith.constant 0 : index
    %409 = vector.load %arg20[%c0_165, %c0_166] : memref<16x9xf32, #tpu.memory_space<vmem>>, vector<16x9xf32>
    tpu.vector_store %arg20[%c0_165, %c0_166], %408 {strides = array<i32>} : memref<16x9xf32, #tpu.memory_space<vmem>>, vector<16x9xf32>,
    return
  }
}

</mosaic_0001>

<llo_original>
// kernel: tpu_custom_call.1
$region0: #{tpu_custom_call.1}
  #allocation0 [shape = 'u32[]', space=smem, size = 0x4, offset = 0x4, fixed_abs, tag = 'smem constant byte address 0x4 - core index']
  #allocation1 [shape = 'u32[144,128]{1,0:T(1,128)}', space=vmem, size = 0x12000, scoped, tag = 'internal scratch']
  %s0 = inlined_call_operand.vmem [shape: f32[16,9], index: 0, kind: input, shape index: {}]
  %s1 = inlined_call_operand.hbm [shape: f32[16,32], index: 1, kind: input, shape index: {}]
  %s2 = inlined_call_operand.vmem [shape: bf16[9,32], index: 2, kind: input, shape index: {}]
  %s3 = inlined_call_operand.vmem [shape: f32[1,32], index: 3, kind: input, shape index: {}]
  %s4 = inlined_call_operand.vmem [shape: bf16[2,32,96], index: 4, kind: input, shape index: {}]
  %s5 = inlined_call_operand.hbm [shape: f32[2,1,96], index: 5, kind: input, shape index: {}]
  %s6 = inlined_call_operand.vmem [shape: bf16[2,32,32], index: 6, kind: input, shape index: {}]
  %s7 = inlined_call_operand.hbm [shape: f32[2,1,32], index: 7, kind: input, shape index: {}]
  %s8 = inlined_call_operand.vmem [shape: bf16[2,32,64], index: 8, kind: input, shape index: {}]
  %s9 = inlined_call_operand.hbm [shape: f32[2,1,64], index: 9, kind: input, shape index: {}]
  %s10 = inlined_call_operand.vmem [shape: bf16[2,64,32], index: 10, kind: input, shape index: {}]
  %s11 = inlined_call_operand.hbm [shape: f32[2,1,32], index: 11, kind: input, shape index: {}]
  %s12 = inlined_call_operand.vmem [shape: f32[2,1,32], index: 12, kind: input, shape index: {}]
  %s13 = inlined_call_operand.vmem [shape: f32[2,1,32], index: 13, kind: input, shape index: {}]
  %s14 = inlined_call_operand.vmem [shape: f32[2,1,32], index: 14, kind: input, shape index: {}]
  %s15 = inlined_call_operand.vmem [shape: f32[2,1,32], index: 15, kind: input, shape index: {}]
  %s16 = inlined_call_operand.vmem [shape: f32[1,32], index: 16, kind: input, shape index: {}]
  %s17 = inlined_call_operand.vmem [shape: f32[1,32], index: 17, kind: input, shape index: {}]
  %s18 = inlined_call_operand.vmem [shape: bf16[32,9], index: 18, kind: input, shape index: {}]
  %s19 = inlined_call_operand.vmem [shape: f32[1,9], index: 19, kind: input, shape index: {}]
  %s20 = inlined_call_operand.hbm [shape: f32[16,9], index: 20, kind: output, shape index: {}]
  %s21 = sld [smem:[#allocation0]]
  $region110: #{tpu_custom_call.1} parent=0
    _
  %s23 = ssub.s32 1, %s21
  %s24 = scalar_select 0, %s23, %s21
  $region1: #{tpu_custom_call.1} parent=0
    #allocation2 [shape = 'u8[8192]{0}', space=vmem, size = 0x2000, scoped, tag = 'input window, operand 1, single buffered']
    #allocation3 [shape = 's32[1]{0}', space=sflag, size = 0x4, scoped, tag = 'scoped memory for tpu_custom_call.1']
    #allocation4 [shape = 's32[1]{0}', space=sflag, size = 0x4, scoped, tag = 'scoped memory for tpu_custom_call.1']
    #allocation5 [shape = 'u8[1024]{0}', space=vmem, size = 0x400, scoped, tag = 'input window, operand 5, single buffered']
    #allocation6 [shape = 's32[1]{0}', space=sflag, size = 0x4, scoped, tag = 'scoped memory for tpu_custom_call.1']
    #allocation7 [shape = 'u8[1024]{0}', space=vmem, size = 0x400, scoped, tag = 'input window, operand 7, single buffered']
    #allocation8 [shape = 'u8[1024]{0}', space=vmem, size = 0x400, scoped, tag = 'input window, operand 9, single buffered']
    #allocation9 [shape = 's32[1]{0}', space=sflag, size = 0x4, scoped, tag = 'scoped memory for tpu_custom_call.1']
    #allocation10 [shape = 'u8[1024]{0}', space=vmem, size = 0x400, scoped, tag = 'input window, operand 11, single buffered']
    #allocation11 [shape = 'u8[8192]{0}', space=vmem, size = 0x2000, scoped, tag = 'output window, operand 0, single buffered']
    %25 = vsyncpa [#allocation3], 0
    %26 = vsyncpa [#allocation6], 0
    %27 = vsyncpa [#allocation9], 0
    %28 = vsyncpa [#allocation4], 0
    // Predicated region
    $region2: #{tpu_custom_call.1} parent=1 // pred_check
      _
    $region3: #{tpu_custom_call.1} parent=1 // pred_check_branch
      %30 = sbr.rel (0) target = $region5
    $region4: #{tpu_custom_call.1} parent=1 // pred_region
      _
    $region5: #{tpu_custom_call.1} parent=1 // pred_fallthru
      _
    // Predicated region
    $region6: #{tpu_custom_call.1} parent=1 // pred_check
      _
    $region7: #{tpu_custom_call.1} parent=1 // pred_check_branch
      %32 = sbr.rel (0) target = $region9
    $region8: #{tpu_custom_call.1} parent=1 // pred_region
      %s34 = ssub.s32 256, 256
      %35 = vsyncadd [#allocation3], %s34
      %s36 = sshll.u32 [#allocation2], 4
      %s37 = int_to_ptr.vmem [resolvable:$true] %s36
      %42 = dma.hbm_to_vmem [thread:$0]  %s1, 256, %s37, [#allocation3], 128, 128, 8
    $region9: #{tpu_custom_call.1} parent=1 // pred_fallthru
      _
    // Predicated region
    $region10: #{tpu_custom_call.1} parent=1 // pred_check
      _
    $region11: #{tpu_custom_call.1} parent=1 // pred_check_branch
      %44 = sbr.rel (0) target = $region13
    $region12: #{tpu_custom_call.1} parent=1 // pred_region
      _
    $region13: #{tpu_custom_call.1} parent=1 // pred_fallthru
      _
    // Predicated region
    $region14: #{tpu_custom_call.1} parent=1 // pred_check
      _
    $region15: #{tpu_custom_call.1} parent=1 // pred_check_branch
      %46 = sbr.rel (0) target = $region17
    $region16: #{tpu_custom_call.1} parent=1 // pred_region
      _
    $region17: #{tpu_custom_call.1} parent=1 // pred_fallthru
      _
    // Predicated region
    $region18: #{tpu_custom_call.1} parent=1 // pred_check
      _
    $region19: #{tpu_custom_call.1} parent=1 // pred_check_branch
      %48 = sbr.rel (0) target = $region21
    $region20: #{tpu_custom_call.1} parent=1 // pred_region
      _
    $region21: #{tpu_custom_call.1} parent=1 // pred_fallthru
      _
    // Predicated region
    $region22: #{tpu_custom_call.1} parent=1 // pred_check
      _
    $region23: #{tpu_custom_call.1} parent=1 // pred_check_branch
      %50 = sbr.rel (0) target = $region25
    $region24: #{tpu_custom_call.1} parent=1 // pred_region
      %s52 = ssub.s32 32, 32
      %53 = vsyncadd [#allocation6], %s52
      %s54 = sshll.u32 [#allocation5], 4
      %s55 = int_to_ptr.vmem [resolvable:$true] %s54
      %60 = dma.hbm_to_vmem [thread:$0]  %s5, 32, %s55, [#allocation6], 16, 16, 1
    $region25: #{tpu_custom_call.1} parent=1 // pred_fallthru
      _
    // Predicated region
    $region26: #{tpu_custom_call.1} parent=1 // pred_check
      _
    $region27: #{tpu_custom_call.1} parent=1 // pred_check_branch
      %62 = sbr.rel (0) target = $region29
    $region28: #{tpu_custom_call.1} parent=1 // pred_region
      _
    $region29: #{tpu_custom_call.1} parent=1 // pred_fallthru
      _
    // Predicated region
    $region30: #{tpu_custom_call.1} parent=1 // pred_check
      _
    $region31: #{tpu_custom_call.1} parent=1 // pred_check_branch
      %64 = sbr.rel (0) target = $region33
    $region32: #{tpu_custom_call.1} parent=1 // pred_region
      %s66 = ssub.s32 32, 32
      %67 = vsyncadd [#allocation6], %s66
      %s68 = sshll.u32 [#allocation7], 4
      %s69 = int_to_ptr.vmem [resolvable:$true] %s68
      %74 = dma.hbm_to_vmem [thread:$0]  %s7, 32, %s69, [#allocation6], 16, 16, 1
    $region33: #{tpu_custom_call.1} parent=1 // pred_fallthru
      _
    // Predicated region
    $region34: #{tpu_custom_call.1} parent=1 // pred_check
      _
    $region35: #{tpu_custom_call.1} parent=1 // pred_check_branch
      %76 = sbr.rel (0) target = $region37
    $region36: #{tpu_custom_call.1} parent=1 // pred_region
      _
    $region37: #{tpu_custom_call.1} parent=1 // pred_fallthru
      _
    // Predicated region
    $region38: #{tpu_custom_call.1} parent=1 // pred_check
      _
    $region39: #{tpu_custom_call.1} parent=1 // pred_check_branch
      %78 = sbr.rel (0) target = $region41
    $region40: #{tpu_custom_call.1} parent=1 // pred_region
      %s80 = ssub.s32 32, 32
      %81 = vsyncadd [#allocation9], %s80
      %s82 = sshll.u32 [#allocation8], 4
      %s83 = int_to_ptr.vmem [resolvable:$true] %s82
      %88 = dma.hbm_to_vmem [thread:$0]  %s9, 32, %s83, [#allocation9], 16, 16, 1
    $region41: #{tpu_custom_call.1} parent=1 // pred_fallthru
      _
    // Predicated region
    $region42: #{tpu_custom_call.1} parent=1 // pred_check
      _
    $region43: #{tpu_custom_call.1} parent=1 // pred_check_branch
      %90 = sbr.rel (0) target = $region45
    $region44: #{tpu_custom_call.1} parent=1 // pred_region
      _
    $region45: #{tpu_custom_call.1} parent=1 // pred_fallthru
      _
    // Predicated region
    $region46: #{tpu_custom_call.1} parent=1 // pred_check
      _
    $region47: #{tpu_custom_call.1} parent=1 // pred_check_branch
      %92 = sbr.rel (0) target = $region49
    $region48: #{tpu_custom_call.1} parent=1 // pred_region
      %s94 = ssub.s32 32, 32
      %95 = vsyncadd [#allocation9], %s94
      %s96 = sshll.u32 [#allocation10], 4
      %s97 = int_to_ptr.vmem [resolvable:$true] %s96
      %102 = dma.hbm_to_vmem [thread:$0]  %s11, 32, %s97, [#allocation9], 16, 16, 1
    $region49: #{tpu_custom_call.1} parent=1 // pred_fallthru
      _
    // Predicated region
    $region50: #{tpu_custom_call.1} parent=1 // pred_check
      _
    $region51: #{tpu_custom_call.1} parent=1 // pred_check_branch
      %104 = sbr.rel (0) target = $region53
    $region52: #{tpu_custom_call.1} parent=1 // pred_region
      _
    $region53: #{tpu_custom_call.1} parent=1 // pred_fallthru
      _
    // Predicated region
    $region54: #{tpu_custom_call.1} parent=1 // pred_check
      _
    $region55: #{tpu_custom_call.1} parent=1 // pred_check_branch
      %106 = sbr.rel (0) target = $region57
    $region56: #{tpu_custom_call.1} parent=1 // pred_region
      _
    $region57: #{tpu_custom_call.1} parent=1 // pred_fallthru
      _
    // Predicated region
    $region58: #{tpu_custom_call.1} parent=1 // pred_check
      _
    $region59: #{tpu_custom_call.1} parent=1 // pred_check_branch
      %108 = sbr.rel (0) target = $region61
    $region60: #{tpu_custom_call.1} parent=1 // pred_region
      _
    $region61: #{tpu_custom_call.1} parent=1 // pred_fallthru
      _
    // Predicated region
    $region62: #{tpu_custom_call.1} parent=1 // pred_check
      _
    $region63: #{tpu_custom_call.1} parent=1 // pred_check_branch
      %110 = sbr.rel (0) target = $region65
    $region64: #{tpu_custom_call.1} parent=1 // pred_region
      _
    $region65: #{tpu_custom_call.1} parent=1 // pred_fallthru
      _
    // Predicated region
    $region66: #{tpu_custom_call.1} parent=1 // pred_check
      _
    $region67: #{tpu_custom_call.1} parent=1 // pred_check_branch
      %112 = sbr.rel (0) target = $region69
    $region68: #{tpu_custom_call.1} parent=1 // pred_region
      _
    $region69: #{tpu_custom_call.1} parent=1 // pred_fallthru
      _
    // Predicated region
    $region70: #{tpu_custom_call.1} parent=1 // pred_check
      _
    $region71: #{tpu_custom_call.1} parent=1 // pred_check_branch
      %114 = sbr.rel (0) target = $region73
    $region72: #{tpu_custom_call.1} parent=1 // pred_region
      _
    $region73: #{tpu_custom_call.1} parent=1 // pred_fallthru
      _
    // Predicated region
    $region74: #{tpu_custom_call.1} parent=1 // pred_check
      _
    $region75: #{tpu_custom_call.1} parent=1 // pred_check_branch
      %116 = sbr.rel (0) target = $region77
    $region76: #{tpu_custom_call.1} parent=1 // pred_region
      _
    $region77: #{tpu_custom_call.1} parent=1 // pred_fallthru
      _
    // Predicated region
    $region78: #{tpu_custom_call.1} parent=1 // pred_check
      _
    $region79: #{tpu_custom_call.1} parent=1 // pred_check_branch
      %118 = sbr.rel (0) target = $region81
    $region80: #{tpu_custom_call.1} parent=1 // pred_region
      _
    $region81: #{tpu_custom_call.1} parent=1 // pred_fallthru
      _
    // Predicated region
    $region82: #{tpu_custom_call.1} parent=1 // pred_check
      _
    $region83: #{tpu_custom_call.1} parent=1 // pred_check_branch
      %120 = sbr.rel (0) target = $region85
    $region84: #{tpu_custom_call.1} parent=1 // pred_region
      %121 = dma.done [#allocation3], 256
    $region85: #{tpu_custom_call.1} parent=1 // pred_fallthru
      _
    // Predicated region
    $region86: #{tpu_custom_call.1} parent=1 // pred_check
      _
    $region87: #{tpu_custom_call.1} parent=1 // pred_check_branch
      %123 = sbr.rel (0) target = $region89
    $region88: #{tpu_custom_call.1} parent=1 // pred_region
      %124 = dma.done [#allocation6], 32
    $region89: #{tpu_custom_call.1} parent=1 // pred_fallthru
      _
    // Predicated region
    $region90: #{tpu_custom_call.1} parent=1 // pred_check
      _
    $region91: #{tpu_custom_call.1} parent=1 // pred_check_branch
      %126 = sbr.rel (0) target = $region93
    $region92: #{tpu_custom_call.1} parent=1 // pred_region
      %127 = dma.done [#allocation6], 32
    $region93: #{tpu_custom_call.1} parent=1 // pred_fallthru
      _
    // Predicated region
    $region94: #{tpu_custom_call.1} parent=1 // pred_check
      _
    $region95: #{tpu_custom_call.1} parent=1 // pred_check_branch
      %129 = sbr.rel (0) target = $region97
    $region96: #{tpu_custom_call.1} parent=1 // pred_region
      %130 = dma.done [#allocation9], 32
    $region97: #{tpu_custom_call.1} parent=1 // pred_fallthru
      _
    // Predicated region
    $region98: #{tpu_custom_call.1} parent=1 // pred_check
      _
    $region99: #{tpu_custom_call.1} parent=1 // pred_check_branch
      %132 = sbr.rel (0) target = $region101
    $region100: #{tpu_custom_call.1} parent=1 // pred_region
      %133 = dma.done [#allocation9], 32
    $region101: #{tpu_custom_call.1} parent=1 // pred_fallthru
      _
    %v135 = vld [vmem:[%s0] sm:$0xff]
    %v136 = vld [vmem:[%s0 + $0x8] sm:$0xff]
    %v137 = vpack.c.bf16 %v136, %v135
    %v138 = vld [vmem:[%s2] sm:$0xf]
    %v139 = vld [vmem:[%s2 + $0x4] sm:$0x1]
    %v140 = vld [vmem:[%s3] sm:$0x1]
    %v142 = vlaneseq
    %v143 = vshrl.u32 %v142, 7
    %v144 = vsub.s32 0, %v143
    %v145 = vrot.slane %v140, %v144
    %v149 = vunpack.c.l.b16 %v138
    %v150 = vunpack.c.l.b16 %v139
    %v151 = vpack.c.b16 %v150, %v149
    %vm152 = vcmask 72704
    %v154 = vsel %vm152, %v137, 0
    %vm156 = vcmask 1043456
    %vm157 = vcmask 1044480
    %v158 = vsel %vm156, 4294967295, 65535
    %v159 = vsel %vm157, %v158, 0
    %v161 = vand.u32 %v151, %v159
    %163 = vmatprep.subr.bf16.mxu0 0
    %164 = vmatpush1.bf16.msra.mxu0 %v161
    %165 = vmatprep.subr.bf16.mxu0 0
    %166 = vmatpush1.bf16.msra.mxu0 0
    %167 = vmatprep.subr.bf16.mxu0 0
    %168 = vmatpush1.bf16.msra.mxu0 0
    %169 = vmatprep.subr.bf16.mxu0 0
    %170 = vmatpush1.bf16.msra.mxu0 0
    %171 = vmatprep.subr.bf16.mxu0 0
    %172 = vmatpush1.bf16.msra.mxu0 0
    %173 = vmatprep.subr.bf16.mxu0 0
    %174 = vmatpush1.bf16.msra.mxu0 0
    %175 = vmatprep.subr.bf16.mxu0 0
    %176 = vmatpush1.bf16.msra.mxu0 0
    %177 = vmatprep.subr.bf16.mxu0 0
    %178 = vmatpush1.bf16.msra.mxu0 0
    %179 = vmatprep.subr.bf16.mxu0 0
    %180 = vmatpush1.bf16.msra.mxu0 0
    %181 = vmatprep.subr.bf16.mxu0 0
    %182 = vmatpush1.bf16.msra.mxu0 0
    %183 = vmatprep.subr.bf16.mxu0 0
    %184 = vmatpush1.bf16.msra.mxu0 0
    %185 = vmatprep.subr.bf16.mxu0 0
    %186 = vmatpush1.bf16.msra.mxu0 0
    %187 = vmatprep.subr.bf16.mxu0 0
    %188 = vmatpush1.bf16.msra.mxu0 0
    %189 = vmatprep.subr.bf16.mxu0 0
    %190 = vmatpush1.bf16.msra.mxu0 0
    %191 = vmatprep.subr.bf16.mxu0 0
    %192 = vmatpush1.bf16.msra.mxu0 0
    %193 = vmatprep.subr.bf16.mxu0 0
    %194 = vmatpush1.bf16.msra.mxu0 0
    %195 = vmatprep.mubr.bf16.mxu0 0
    %196 = vmatmul.mubr.bf16.gmra.mrb[0].mxu0 %v154
    %v197 = vpop.f32.mrb[0].mxu0
    %v198 = vadd.f32 %v145, %v197
    %v199 = vpop.f32.mrb[0].mxu0
    %v200 = vpop.f32.mrb[0].mxu0
    %v201 = vadd.f32 %v145, %v200
    %v202 = vpop.f32.mrb[0].mxu0
    %203 = vdwg.mxu0
    %v204 = vmax.f32 %v198, 0.0
    %v205 = vmax.f32 %v201, 0.0
    %v206 = vld [vmem:[#allocation2] sm:$0xff]
    %v207 = vld [vmem:[#allocation2 + $0x8] sm:$0xff]
    %v208 = vadd.f32 %v204, %v206
    %v209 = vadd.f32 %v205, %v207
    %v210 = vld [vmem:[#allocation5] sm:$0x1]
    %v211 = vld [vmem:[#allocation7] sm:$0x1]
    %v212 = vld [vmem:[#allocation8] sm:$0x1]
    %v213 = vld [vmem:[#allocation10] sm:$0x1]
    %v214 = vld [vmem:[%s12] sm:$0x1]
    %v215 = vld [vmem:[%s13] sm:$0x1]
    %v216 = vld [vmem:[%s14] sm:$0x1]
    %v217 = vld [vmem:[%s15] sm:$0x1]
    %v218 = vpack.c.bf16 %v209, %v208
    %v219 = vld [vmem:[%s4] sm:$0xf]
    %v220 = vld [vmem:[%s4 + $0x4] sm:$0xf]
    %v221 = vld [vmem:[%s4 + $0x8] sm:$0xf]
    %v222 = vld [vmem:[%s4 + $0xc] sm:$0xf]
    %v224 = vlaneseq
    %v225 = vshrl.u32 %v224, 7
    %v226 = vsub.s32 0, %v225
    %v227 = vrot.slane %v210, %v226
    %v233 = vunpack.c.l.b16 %v219
    %v234 = vunpack.c.l.b16 %v220
    %v235 = vunpack.c.l.b16 %v221
    %v236 = vunpack.c.l.b16 %v222
    %v237 = vpack.c.b16 %v234, %v233
    %v238 = vpack.c.b16 %v236, %v235
    %vm241 = vcmask 261120
    %v243 = vsel %vm241, %v218, 0
    %245 = vmatprep.subr.bf16.mxu0 0
    %246 = vmatpush1.bf16.msra.mxu0 %v237
    %247 = vmatprep.subr.bf16.mxu0 0
    %248 = vmatpush1.bf16.msra.mxu0 %v238
    %249 = vmatprep.subr.bf16.mxu0 0
    %250 = vmatpush1.bf16.msra.mxu0 0
    %251 = vmatprep.subr.bf16.mxu0 0
    %252 = vmatpush1.bf16.msra.mxu0 0
    %253 = vmatprep.subr.bf16.mxu0 0
    %254 = vmatpush1.bf16.msra.mxu0 0
    %255 = vmatprep.subr.bf16.mxu0 0
    %256 = vmatpush1.bf16.msra.mxu0 0
    %257 = vmatprep.subr.bf16.mxu0 0
    %258 = vmatpush1.bf16.msra.mxu0 0
    %259 = vmatprep.subr.bf16.mxu0 0
    %260 = vmatpush1.bf16.msra.mxu0 0
    %261 = vmatprep.subr.bf16.mxu0 0
    %262 = vmatpush1.bf16.msra.mxu0 0
    %263 = vmatprep.subr.bf16.mxu0 0
    %264 = vmatpush1.bf16.msra.mxu0 0
    %265 = vmatprep.subr.bf16.mxu0 0
    %266 = vmatpush1.bf16.msra.mxu0 0
    %267 = vmatprep.subr.bf16.mxu0 0
    %268 = vmatpush1.bf16.msra.mxu0 0
    %269 = vmatprep.subr.bf16.mxu0 0
    %270 = vmatpush1.bf16.msra.mxu0 0
    %271 = vmatprep.subr.bf16.mxu0 0
    %272 = vmatpush1.bf16.msra.mxu0 0
    %273 = vmatprep.subr.bf16.mxu0 0
    %274 = vmatpush1.bf16.msra.mxu0 0
    %275 = vmatprep.subr.bf16.mxu0 0
    %276 = vmatpush1.bf16.msra.mxu0 0
    %277 = vmatprep.mubr.bf16.mxu0 0
    %278 = vmatmul.mubr.bf16.gmra.mrb[0].mxu0 %v243
    %v279 = vpop.f32.mrb[0].mxu0
    %v280 = vadd.f32 %v227, %v279
    %v281 = vpop.f32.mrb[0].mxu0
    %v282 = vpop.f32.mrb[0].mxu0
    %v283 = vadd.f32 %v227, %v282
    %v284 = vpop.f32.mrb[0].mxu0
    %285 = vdwg.mxu0
    %v286 = vmul.f32 %v280, 0.35355338
    %v287 = vmul.f32 %v283, 0.35355338
    %v288 = vpack.c.bf16 %v286, %v286
    %v289 = vpack.c.bf16 %v287, %v287
    %v290 = vpack.c.bf16 %v280, %v280
    %v291 = vpack.c.bf16 %v283, %v283
    %293 = vrot.lane.b32.xlu0 %v290, 96
    %v294 = vpop.permute.xlu0 %293
    %vm295 = vcmask 64512
    %v297 = vsel %vm295, %v288, 0
    %v300 = vsel %vm295, %v294, 0
    %302 = vmatprep.subr.bf16.mxu0 0
    %303 = vmatpush1.bf16.xpose.msra.mxu0 %v300
    %304 = vmatprep.subr.bf16.mxu0 0
    %305 = vmatpush1.bf16.xpose.msra.mxu0 0
    %306 = vmatprep.subr.bf16.mxu0 0
    %307 = vmatpush1.bf16.xpose.msra.mxu0 0
    %308 = vmatprep.subr.bf16.mxu0 0
    %309 = vmatpush1.bf16.xpose.msra.mxu0 0
    %310 = vmatprep.subr.bf16.mxu0 0
    %311 = vmatpush1.bf16.xpose.msra.mxu0 0
    %312 = vmatprep.subr.bf16.mxu0 0
    %313 = vmatpush1.bf16.xpose.msra.mxu0 0
    %314 = vmatprep.subr.bf16.mxu0 0
    %315 = vmatpush1.bf16.xpose.msra.mxu0 0
    %316 = vmatprep.subr.bf16.mxu0 0
    %317 = vmatpush1.bf16.xpose.msra.mxu0 0
    %318 = vmatprep.subr.bf16.mxu0 0
    %319 = vmatpush1.bf16.xpose.msra.mxu0 0
    %320 = vmatprep.subr.bf16.mxu0 0
    %321 = vmatpush1.bf16.xpose.msra.mxu0 0
    %322 = vmatprep.subr.bf16.mxu0 0
    %323 = vmatpush1.bf16.xpose.msra.mxu0 0
    %324 = vmatprep.subr.bf16.mxu0 0
    %325 = vmatpush1.bf16.xpose.msra.mxu0 0
    %326 = vmatprep.subr.bf16.mxu0 0
    %327 = vmatpush1.bf16.xpose.msra.mxu0 0
    %328 = vmatprep.subr.bf16.mxu0 0
    %329 = vmatpush1.bf16.xpose.msra.mxu0 0
    %330 = vmatprep.subr.bf16.mxu0 0
    %331 = vmatpush1.bf16.xpose.msra.mxu0 0
    %332 = vmatprep.subr.bf16.mxu0 0
    %333 = vmatpush1.bf16.xpose.msra.mxu0 0
    %334 = vmatprep.mubr.bf16.mxu0 0
    %335 = vmatmul.mubr.bf16.gmra.mrb[0].mxu0 %v297
    %v336 = vpop.f32.mrb[0].mxu0
    %v337 = vadd.f32 0.0, %v336
    %v338 = vpop.f32.mrb[0].mxu0
    %v339 = vpop.f32.mrb[0].mxu0
    %v340 = vpop.f32.mrb[0].mxu0
    %341 = vdwg.mxu0
    %343 = vrot.lane.b32.xlu0 %v291, 96
    %v344 = vpop.permute.xlu0 %343
    %v346 = vsel %vm295, %v289, 0
    %v349 = vsel %vm295, %v344, 0
    %351 = vmatprep.subr.bf16.mxu0 0
    %352 = vmatpush1.bf16.xpose.msra.mxu0 %v349
    %353 = vmatprep.subr.bf16.mxu0 0
    %354 = vmatpush1.bf16.xpose.msra.mxu0 0
    %355 = vmatprep.subr.bf16.mxu0 0
    %356 = vmatpush1.bf16.xpose.msra.mxu0 0
    %357 = vmatprep.subr.bf16.mxu0 0
    %358 = vmatpush1.bf16.xpose.msra.mxu0 0
    %359 = vmatprep.subr.bf16.mxu0 0
    %360 = vmatpush1.bf16.xpose.msra.mxu0 0
    %361 = vmatprep.subr.bf16.mxu0 0
    %362 = vmatpush1.bf16.xpose.msra.mxu0 0
    %363 = vmatprep.subr.bf16.mxu0 0
    %364 = vmatpush1.bf16.xpose.msra.mxu0 0
    %365 = vmatprep.subr.bf16.mxu0 0
    %366 = vmatpush1.bf16.xpose.msra.mxu0 0
    %367 = vmatprep.subr.bf16.mxu0 0
    %368 = vmatpush1.bf16.xpose.msra.mxu0 0
    %369 = vmatprep.subr.bf16.mxu0 0
    %370 = vmatpush1.bf16.xpose.msra.mxu0 0
    %371 = vmatprep.subr.bf16.mxu0 0
    %372 = vmatpush1.bf16.xpose.msra.mxu0 0
    %373 = vmatprep.subr.bf16.mxu0 0
    %374 = vmatpush1.bf16.xpose.msra.mxu0 0
    %375 = vmatprep.subr.bf16.mxu0 0
    %376 = vmatpush1.bf16.xpose.msra.mxu0 0
    %377 = vmatprep.subr.bf16.mxu0 0
    %378 = vmatpush1.bf16.xpose.msra.mxu0 0
    %379 = vmatprep.subr.bf16.mxu0 0
    %380 = vmatpush1.bf16.xpose.msra.mxu0 0
    %381 = vmatprep.subr.bf16.mxu0 0
    %382 = vmatpush1.bf16.xpose.msra.mxu0 0
    %383 = vmatprep.mubr.bf16.mxu0 0
    %384 = vmatmul.mubr.bf16.gmra.mrb[0].mxu0 %v346
    %v385 = vpop.f32.mrb[0].mxu0
    %v386 = vadd.f32 0.0, %v385
    %v387 = vpop.f32.mrb[0].mxu0
    %v388 = vpop.f32.mrb[0].mxu0
    %v389 = vpop.f32.mrb[0].mxu0
    %390 = vdwg.mxu0
    %v391 = vsel %vm295, %v337, -inf
    %392 = vmax.xlane.f32.xlu0 %v391
    %v393 = vpop.xlane.xlu0 %392
    %v394 = vsel %vm295, %v386, -inf
    %395 = vmax.xlane.f32.xlu0 %v394
    %v396 = vpop.xlane.xlu0 %395
    %v397 = vsub.f32 %v337, %v393
    %v398 = vsub.f32 %v386, %v396
    %v399 = vmul.f32 %v397, 1.442695
    %v400 = vpow.pop %v399
    %v401 = vmul.f32 %v398, 1.442695
    %v402 = vpow.pop %v401
    %v403 = vsel %vm295, %v400, 0.0
    %404 = vadd.xlane.f32.xlu0 %v403
    %v405 = vpop.xlane.xlu0 %404
    %v406 = vsel %vm295, %v402, 0.0
    %407 = vadd.xlane.f32.xlu0 %v406
    %v408 = vpop.xlane.xlu0 %407
    %v409 = vrcp.pop %v405
    %v410 = vrcp.pop %v408
    %v411 = vmul.f32 %v400, %v409
    %v412 = vmul.f32 %v402, %v410
    %v413 = vpack.c.bf16 %v411, %v411
    %v414 = vpack.c.bf16 %v412, %v412
    %415 = vrot.lane.b32.xlu0 %v290, 64
    %v416 = vpop.permute.xlu0 %415
    %v418 = vsel %vm295, %v413, 0
    %v421 = vsel %vm156, %v416, 0
    %423 = vmatprep.subr.bf16.mxu0 0
    %424 = vmatpush1.bf16.msra.mxu0 %v421
    %425 = vmatprep.subr.bf16.mxu0 0
    %426 = vmatpush1.bf16.msra.mxu0 0
    %427 = vmatprep.subr.bf16.mxu0 0
    %428 = vmatpush1.bf16.msra.mxu0 0
    %429 = vmatprep.subr.bf16.mxu0 0
    %430 = vmatpush1.bf16.msra.mxu0 0
    %431 = vmatprep.subr.bf16.mxu0 0
    %432 = vmatpush1.bf16.msra.mxu0 0
    %433 = vmatprep.subr.bf16.mxu0 0
    %434 = vmatpush1.bf16.msra.mxu0 0
    %435 = vmatprep.subr.bf16.mxu0 0
    %436 = vmatpush1.bf16.msra.mxu0 0
    %437 = vmatprep.subr.bf16.mxu0 0
    %438 = vmatpush1.bf16.msra.mxu0 0
    %439 = vmatprep.subr.bf16.mxu0 0
    %440 = vmatpush1.bf16.msra.mxu0 0
    %441 = vmatprep.subr.bf16.mxu0 0
    %442 = vmatpush1.bf16.msra.mxu0 0
    %443 = vmatprep.subr.bf16.mxu0 0
    %444 = vmatpush1.bf16.msra.mxu0 0
    %445 = vmatprep.subr.bf16.mxu0 0
    %446 = vmatpush1.bf16.msra.mxu0 0
    %447 = vmatprep.subr.bf16.mxu0 0
    %448 = vmatpush1.bf16.msra.mxu0 0
    %449 = vmatprep.subr.bf16.mxu0 0
    %450 = vmatpush1.bf16.msra.mxu0 0
    %451 = vmatprep.subr.bf16.mxu0 0
    %452 = vmatpush1.bf16.msra.mxu0 0
    %453 = vmatprep.subr.bf16.mxu0 0
    %454 = vmatpush1.bf16.msra.mxu0 0
    %455 = vmatprep.mubr.bf16.mxu0 0
    %456 = vmatmul.mubr.bf16.gmra.mrb[0].mxu0 %v418
    %v457 = vpop.f32.mrb[0].mxu0
    %v458 = vadd.f32 0.0, %v457
    %v459 = vpop.f32.mrb[0].mxu0
    %v460 = vpop.f32.mrb[0].mxu0
    %v461 = vpop.f32.mrb[0].mxu0
    %462 = vdwg.mxu0
    %463 = vrot.lane.b32.xlu0 %v291, 64
    %v464 = vpop.permute.xlu0 %463
    %v466 = vsel %vm295, %v414, 0
    %v469 = vsel %vm156, %v464, 0
    %471 = vmatprep.subr.bf16.mxu0 0
    %472 = vmatpush1.bf16.msra.mxu0 %v469
    %473 = vmatprep.subr.bf16.mxu0 0
    %474 = vmatpush1.bf16.msra.mxu0 0
    %475 = vmatprep.subr.bf16.mxu0 0
    %476 = vmatpush1.bf16.msra.mxu0 0
    %477 = vmatprep.subr.bf16.mxu0 0
    %478 = vmatpush1.bf16.msra.mxu0 0
    %479 = vmatprep.subr.bf16.mxu0 0
    %480 = vmatpush1.bf16.msra.mxu0 0
    %481 = vmatprep.subr.bf16.mxu0 0
    %482 = vmatpush1.bf16.msra.mxu0 0
    %483 = vmatprep.subr.bf16.mxu0 0
    %484 = vmatpush1.bf16.msra.mxu0 0
    %485 = vmatprep.subr.bf16.mxu0 0
    %486 = vmatpush1.bf16.msra.mxu0 0
    %487 = vmatprep.subr.bf16.mxu0 0
    %488 = vmatpush1.bf16.msra.mxu0 0
    %489 = vmatprep.subr.bf16.mxu0 0
    %490 = vmatpush1.bf16.msra.mxu0 0
    %491 = vmatprep.subr.bf16.mxu0 0
    %492 = vmatpush1.bf16.msra.mxu0 0
    %493 = vmatprep.subr.bf16.mxu0 0
    %494 = vmatpush1.bf16.msra.mxu0 0
    %495 = vmatprep.subr.bf16.mxu0 0
    %496 = vmatpush1.bf16.msra.mxu0 0
    %497 = vmatprep.subr.bf16.mxu0 0
    %498 = vmatpush1.bf16.msra.mxu0 0
    %499 = vmatprep.subr.bf16.mxu0 0
    %500 = vmatpush1.bf16.msra.mxu0 0
    %501 = vmatprep.subr.bf16.mxu0 0
    %502 = vmatpush1.bf16.msra.mxu0 0
    %503 = vmatprep.mubr.bf16.mxu0 0
    %504 = vmatmul.mubr.bf16.gmra.mrb[0].mxu0 %v466
    %v505 = vpop.f32.mrb[0].mxu0
    %v506 = vadd.f32 0.0, %v505
    %v507 = vpop.f32.mrb[0].mxu0
    %v508 = vpop.f32.mrb[0].mxu0
    %v509 = vpop.f32.mrb[0].mxu0
    %510 = vdwg.mxu0
    %512 = vrot.lane.b32.xlu0 %v288, 120
    %v513 = vpop.permute.xlu0 %512
    %514 = vrot.lane.b32.xlu0 %v290, 88
    %v515 = vpop.permute.xlu0 %514
    %v517 = vsel %vm295, %v513, 0
    %v520 = vsel %vm295, %v515, 0
    %522 = vmatprep.subr.bf16.mxu0 0
    %523 = vmatpush1.bf16.xpose.msra.mxu0 %v520
    %524 = vmatprep.subr.bf16.mxu0 0
    %525 = vmatpush1.bf16.xpose.msra.mxu0 0
    %526 = vmatprep.subr.bf16.mxu0 0
    %527 = vmatpush1.bf16.xpose.msra.mxu0 0
    %528 = vmatprep.subr.bf16.mxu0 0
    %529 = vmatpush1.bf16.xpose.msra.mxu0 0
    %530 = vmatprep.subr.bf16.mxu0 0
    %531 = vmatpush1.bf16.xpose.msra.mxu0 0
    %532 = vmatprep.subr.bf16.mxu0 0
    %533 = vmatpush1.bf16.xpose.msra.mxu0 0
    %534 = vmatprep.subr.bf16.mxu0 0
    %535 = vmatpush1.bf16.xpose.msra.mxu0 0
    %536 = vmatprep.subr.bf16.mxu0 0
    %537 = vmatpush1.bf16.xpose.msra.mxu0 0
    %538 = vmatprep.subr.bf16.mxu0 0
    %539 = vmatpush1.bf16.xpose.msra.mxu0 0
    %540 = vmatprep.subr.bf16.mxu0 0
    %541 = vmatpush1.bf16.xpose.msra.mxu0 0
    %542 = vmatprep.subr.bf16.mxu0 0
    %543 = vmatpush1.bf16.xpose.msra.mxu0 0
    %544 = vmatprep.subr.bf16.mxu0 0
    %545 = vmatpush1.bf16.xpose.msra.mxu0 0
    %546 = vmatprep.subr.bf16.mxu0 0
    %547 = vmatpush1.bf16.xpose.msra.mxu0 0
    %548 = vmatprep.subr.bf16.mxu0 0
    %549 = vmatpush1.bf16.xpose.msra.mxu0 0
    %550 = vmatprep.subr.bf16.mxu0 0
    %551 = vmatpush1.bf16.xpose.msra.mxu0 0
    %552 = vmatprep.subr.bf16.mxu0 0
    %553 = vmatpush1.bf16.xpose.msra.mxu0 0
    %554 = vmatprep.mubr.bf16.mxu0 0
    %555 = vmatmul.mubr.bf16.gmra.mrb[0].mxu0 %v517
    %v556 = vpop.f32.mrb[0].mxu0
    %v557 = vadd.f32 0.0, %v556
    %v558 = vpop.f32.mrb[0].mxu0
    %v559 = vpop.f32.mrb[0].mxu0
    %v560 = vpop.f32.mrb[0].mxu0
    %561 = vdwg.mxu0
    %563 = vrot.lane.b32.xlu0 %v289, 120
    %v564 = vpop.permute.xlu0 %563
    %565 = vrot.lane.b32.xlu0 %v291, 88
    %v566 = vpop.permute.xlu0 %565
    %v568 = vsel %vm295, %v564, 0
    %v571 = vsel %vm295, %v566, 0
    %573 = vmatprep.subr.bf16.mxu0 0
    %574 = vmatpush1.bf16.xpose.msra.mxu0 %v571
    %575 = vmatprep.subr.bf16.mxu0 0
    %576 = vmatpush1.bf16.xpose.msra.mxu0 0
    %577 = vmatprep.subr.bf16.mxu0 0
    %578 = vmatpush1.bf16.xpose.msra.mxu0 0
    %579 = vmatprep.subr.bf16.mxu0 0
    %580 = vmatpush1.bf16.xpose.msra.mxu0 0
    %581 = vmatprep.subr.bf16.mxu0 0
    %582 = vmatpush1.bf16.xpose.msra.mxu0 0
    %583 = vmatprep.subr.bf16.mxu0 0
    %584 = vmatpush1.bf16.xpose.msra.mxu0 0
    %585 = vmatprep.subr.bf16.mxu0 0
    %586 = vmatpush1.bf16.xpose.msra.mxu0 0
    %587 = vmatprep.subr.bf16.mxu0 0
    %588 = vmatpush1.bf16.xpose.msra.mxu0 0
    %589 = vmatprep.subr.bf16.mxu0 0
    %590 = vmatpush1.bf16.xpose.msra.mxu0 0
    %591 = vmatprep.subr.bf16.mxu0 0
    %592 = vmatpush1.bf16.xpose.msra.mxu0 0
    %593 = vmatprep.subr.bf16.mxu0 0
    %594 = vmatpush1.bf16.xpose.msra.mxu0 0
    %595 = vmatprep.subr.bf16.mxu0 0
    %596 = vmatpush1.bf16.xpose.msra.mxu0 0
    %597 = vmatprep.subr.bf16.mxu0 0
    %598 = vmatpush1.bf16.xpose.msra.mxu0 0
    %599 = vmatprep.subr.bf16.mxu0 0
    %600 = vmatpush1.bf16.xpose.msra.mxu0 0
    %601 = vmatprep.subr.bf16.mxu0 0
    %602 = vmatpush1.bf16.xpose.msra.mxu0 0
    %603 = vmatprep.subr.bf16.mxu0 0
    %604 = vmatpush1.bf16.xpose.msra.mxu0 0
    %605 = vmatprep.mubr.bf16.mxu0 0
    %606 = vmatmul.mubr.bf16.gmra.mrb[0].mxu0 %v568
    %v607 = vpop.f32.mrb[0].mxu0
    %v608 = vadd.f32 0.0, %v607
    %v609 = vpop.f32.mrb[0].mxu0
    %v610 = vpop.f32.mrb[0].mxu0
    %v611 = vpop.f32.mrb[0].mxu0
    %612 = vdwg.mxu0
    %v613 = vsel %vm295, %v557, -inf
    %614 = vmax.xlane.f32.xlu0 %v613
    %v615 = vpop.xlane.xlu0 %614
    %v616 = vsel %vm295, %v608, -inf
    %617 = vmax.xlane.f32.xlu0 %v616
    %v618 = vpop.xlane.xlu0 %617
    %v619 = vsub.f32 %v557, %v615
    %v620 = vsub.f32 %v608, %v618
    %v621 = vmul.f32 %v619, 1.442695
    %v622 = vpow.pop %v621
    %v623 = vmul.f32 %v620, 1.442695
    %v624 = vpow.pop %v623
    %v625 = vsel %vm295, %v622, 0.0
    %626 = vadd.xlane.f32.xlu0 %v625
    %v627 = vpop.xlane.xlu0 %626
    %v628 = vsel %vm295, %v624, 0.0
    %629 = vadd.xlane.f32.xlu0 %v628
    %v630 = vpop.xlane.xlu0 %629
    %v631 = vrcp.pop %v627
    %v632 = vrcp.pop %v630
    %v633 = vmul.f32 %v622, %v631
    %v634 = vmul.f32 %v624, %v632
    %v635 = vpack.c.bf16 %v633, %v633
    %v636 = vpack.c.bf16 %v634, %v634
    %637 = vrot.lane.b32.xlu0 %v290, 56
    %v638 = vpop.permute.xlu0 %637
    %v640 = vsel %vm295, %v635, 0
    %v643 = vsel %vm156, %v638, 0
    %645 = vmatprep.subr.bf16.mxu0 0
    %646 = vmatpush1.bf16.msra.mxu0 %v643
    %647 = vmatprep.subr.bf16.mxu0 0
    %648 = vmatpush1.bf16.msra.mxu0 0
    %649 = vmatprep.subr.bf16.mxu0 0
    %650 = vmatpush1.bf16.msra.mxu0 0
    %651 = vmatprep.subr.bf16.mxu0 0
    %652 = vmatpush1.bf16.msra.mxu0 0
    %653 = vmatprep.subr.bf16.mxu0 0
    %654 = vmatpush1.bf16.msra.mxu0 0
    %655 = vmatprep.subr.bf16.mxu0 0
    %656 = vmatpush1.bf16.msra.mxu0 0
    %657 = vmatprep.subr.bf16.mxu0 0
    %658 = vmatpush1.bf16.msra.mxu0 0
    %659 = vmatprep.subr.bf16.mxu0 0
    %660 = vmatpush1.bf16.msra.mxu0 0
    %661 = vmatprep.subr.bf16.mxu0 0
    %662 = vmatpush1.bf16.msra.mxu0 0
    %663 = vmatprep.subr.bf16.mxu0 0
    %664 = vmatpush1.bf16.msra.mxu0 0
    %665 = vmatprep.subr.bf16.mxu0 0
    %666 = vmatpush1.bf16.msra.mxu0 0
    %667 = vmatprep.subr.bf16.mxu0 0
    %668 = vmatpush1.bf16.msra.mxu0 0
    %669 = vmatprep.subr.bf16.mxu0 0
    %670 = vmatpush1.bf16.msra.mxu0 0
    %671 = vmatprep.subr.bf16.mxu0 0
    %672 = vmatpush1.bf16.msra.mxu0 0
    %673 = vmatprep.subr.bf16.mxu0 0
    %674 = vmatpush1.bf16.msra.mxu0 0
    %675 = vmatprep.subr.bf16.mxu0 0
    %676 = vmatpush1.bf16.msra.mxu0 0
    %677 = vmatprep.mubr.bf16.mxu0 0
    %678 = vmatmul.mubr.bf16.gmra.mrb[0].mxu0 %v640
    %v679 = vpop.f32.mrb[0].mxu0
    %v680 = vadd.f32 0.0, %v679
    %v681 = vpop.f32.mrb[0].mxu0
    %v682 = vpop.f32.mrb[0].mxu0
    %v683 = vpop.f32.mrb[0].mxu0
    %684 = vdwg.mxu0
    %685 = vrot.lane.b32.xlu0 %v291, 56
    %v686 = vpop.permute.xlu0 %685
    %v688 = vsel %vm295, %v636, 0
    %v691 = vsel %vm156, %v686, 0
    %693 = vmatprep.subr.bf16.mxu0 0
    %694 = vmatpush1.bf16.msra.mxu0 %v691
    %695 = vmatprep.subr.bf16.mxu0 0
    %696 = vmatpush1.bf16.msra.mxu0 0
    %697 = vmatprep.subr.bf16.mxu0 0
    %698 = vmatpush1.bf16.msra.mxu0 0
    %699 = vmatprep.subr.bf16.mxu0 0
    %700 = vmatpush1.bf16.msra.mxu0 0
    %701 = vmatprep.subr.bf16.mxu0 0
    %702 = vmatpush1.bf16.msra.mxu0 0
    %703 = vmatprep.subr.bf16.mxu0 0
    %704 = vmatpush1.bf16.msra.mxu0 0
    %705 = vmatprep.subr.bf16.mxu0 0
    %706 = vmatpush1.bf16.msra.mxu0 0
    %707 = vmatprep.subr.bf16.mxu0 0
    %708 = vmatpush1.bf16.msra.mxu0 0
    %709 = vmatprep.subr.bf16.mxu0 0
    %710 = vmatpush1.bf16.msra.mxu0 0
    %711 = vmatprep.subr.bf16.mxu0 0
    %712 = vmatpush1.bf16.msra.mxu0 0
    %713 = vmatprep.subr.bf16.mxu0 0
    %714 = vmatpush1.bf16.msra.mxu0 0
    %715 = vmatprep.subr.bf16.mxu0 0
    %716 = vmatpush1.bf16.msra.mxu0 0
    %717 = vmatprep.subr.bf16.mxu0 0
    %718 = vmatpush1.bf16.msra.mxu0 0
    %719 = vmatprep.subr.bf16.mxu0 0
    %720 = vmatpush1.bf16.msra.mxu0 0
    %721 = vmatprep.subr.bf16.mxu0 0
    %722 = vmatpush1.bf16.msra.mxu0 0
    %723 = vmatprep.subr.bf16.mxu0 0
    %724 = vmatpush1.bf16.msra.mxu0 0
    %725 = vmatprep.mubr.bf16.mxu0 0
    %726 = vmatmul.mubr.bf16.gmra.mrb[0].mxu0 %v688
    %v727 = vpop.f32.mrb[0].mxu0
    %v728 = vadd.f32 0.0, %v727
    %v729 = vpop.f32.mrb[0].mxu0
    %v730 = vpop.f32.mrb[0].mxu0
    %v731 = vpop.f32.mrb[0].mxu0
    %732 = vdwg.mxu0
    %733 = vrot.lane.b32.xlu0 %v288, 112
    %v734 = vpop.permute.xlu0 %733
    %735 = vrot.lane.b32.xlu0 %v290, 80
    %v736 = vpop.permute.xlu0 %735
    %v738 = vsel %vm295, %v734, 0
    %v741 = vsel %vm295, %v736, 0
    %743 = vmatprep.subr.bf16.mxu0 0
    %744 = vmatpush1.bf16.xpose.msra.mxu0 %v741
    %745 = vmatprep.subr.bf16.mxu0 0
    %746 = vmatpush1.bf16.xpose.msra.mxu0 0
    %747 = vmatprep.subr.bf16.mxu0 0
    %748 = vmatpush1.bf16.xpose.msra.mxu0 0
    %749 = vmatprep.subr.bf16.mxu0 0
    %750 = vmatpush1.bf16.xpose.msra.mxu0 0
    %751 = vmatprep.subr.bf16.mxu0 0
    %752 = vmatpush1.bf16.xpose.msra.mxu0 0
    %753 = vmatprep.subr.bf16.mxu0 0
    %754 = vmatpush1.bf16.xpose.msra.mxu0 0
    %755 = vmatprep.subr.bf16.mxu0 0
    %756 = vmatpush1.bf16.xpose.msra.mxu0 0
    %757 = vmatprep.subr.bf16.mxu0 0
    %758 = vmatpush1.bf16.xpose.msra.mxu0 0
    %759 = vmatprep.subr.bf16.mxu0 0
    %760 = vmatpush1.bf16.xpose.msra.mxu0 0
    %761 = vmatprep.subr.bf16.mxu0 0
    %762 = vmatpush1.bf16.xpose.msra.mxu0 0
    %763 = vmatprep.subr.bf16.mxu0 0
    %764 = vmatpush1.bf16.xpose.msra.mxu0 0
    %765 = vmatprep.subr.bf16.mxu0 0
    %766 = vmatpush1.bf16.xpose.msra.mxu0 0
    %767 = vmatprep.subr.bf16.mxu0 0
    %768 = vmatpush1.bf16.xpose.msra.mxu0 0
    %769 = vmatprep.subr.bf16.mxu0 0
    %770 = vmatpush1.bf16.xpose.msra.mxu0 0
    %771 = vmatprep.subr.bf16.mxu0 0
    %772 = vmatpush1.bf16.xpose.msra.mxu0 0
    %773 = vmatprep.subr.bf16.mxu0 0
    %774 = vmatpush1.bf16.xpose.msra.mxu0 0
    %775 = vmatprep.mubr.bf16.mxu0 0
    %776 = vmatmul.mubr.bf16.gmra.mrb[0].mxu0 %v738
    %v777 = vpop.f32.mrb[0].mxu0
    %v778 = vadd.f32 0.0, %v777
    %v779 = vpop.f32.mrb[0].mxu0
    %v780 = vpop.f32.mrb[0].mxu0
    %v781 = vpop.f32.mrb[0].mxu0
    %782 = vdwg.mxu0
    %783 = vrot.lane.b32.xlu0 %v289, 112
    %v784 = vpop.permute.xlu0 %783
    %785 = vrot.lane.b32.xlu0 %v291, 80
    %v786 = vpop.permute.xlu0 %785
    %v788 = vsel %vm295, %v784, 0
    %v791 = vsel %vm295, %v786, 0
    %793 = vmatprep.subr.bf16.mxu0 0
    %794 = vmatpush1.bf16.xpose.msra.mxu0 %v791
    %795 = vmatprep.subr.bf16.mxu0 0
    %796 = vmatpush1.bf16.xpose.msra.mxu0 0
    %797 = vmatprep.subr.bf16.mxu0 0
    %798 = vmatpush1.bf16.xpose.msra.mxu0 0
    %799 = vmatprep.subr.bf16.mxu0 0
    %800 = vmatpush1.bf16.xpose.msra.mxu0 0
    %801 = vmatprep.subr.bf16.mxu0 0
    %802 = vmatpush1.bf16.xpose.msra.mxu0 0
    %803 = vmatprep.subr.bf16.mxu0 0
    %804 = vmatpush1.bf16.xpose.msra.mxu0 0
    %805 = vmatprep.subr.bf16.mxu0 0
    %806 = vmatpush1.bf16.xpose.msra.mxu0 0
    %807 = vmatprep.subr.bf16.mxu0 0
    %808 = vmatpush1.bf16.xpose.msra.mxu0 0
    %809 = vmatprep.subr.bf16.mxu0 0
    %810 = vmatpush1.bf16.xpose.msra.mxu0 0
    %811 = vmatprep.subr.bf16.mxu0 0
    %812 = vmatpush1.bf16.xpose.msra.mxu0 0
    %813 = vmatprep.subr.bf16.mxu0 0
    %814 = vmatpush1.bf16.xpose.msra.mxu0 0
    %815 = vmatprep.subr.bf16.mxu0 0
    %816 = vmatpush1.bf16.xpose.msra.mxu0 0
    %817 = vmatprep.subr.bf16.mxu0 0
    %818 = vmatpush1.bf16.xpose.msra.mxu0 0
    %819 = vmatprep.subr.bf16.mxu0 0
    %820 = vmatpush1.bf16.xpose.msra.mxu0 0
    %821 = vmatprep.subr.bf16.mxu0 0
    %822 = vmatpush1.bf16.xpose.msra.mxu0 0
    %823 = vmatprep.subr.bf16.mxu0 0
    %824 = vmatpush1.bf16.xpose.msra.mxu0 0
    %825 = vmatprep.mubr.bf16.mxu0 0
    %826 = vmatmul.mubr.bf16.gmra.mrb[0].mxu0 %v788
    %v827 = vpop.f32.mrb[0].mxu0
    %v828 = vadd.f32 0.0, %v827
    %v829 = vpop.f32.mrb[0].mxu0
    %v830 = vpop.f32.mrb[0].mxu0
    %v831 = vpop.f32.mrb[0].mxu0
    %832 = vdwg.mxu0
    %v833 = vsel %vm295, %v778, -inf
    %834 = vmax.xlane.f32.xlu0 %v833
    %v835 = vpop.xlane.xlu0 %834
    %v836 = vsel %vm295, %v828, -inf
    %837 = vmax.xlane.f32.xlu0 %v836
    %v838 = vpop.xlane.xlu0 %837
    %v839 = vsub.f32 %v778, %v835
    %v840 = vsub.f32 %v828, %v838
    %v841 = vmul.f32 %v839, 1.442695
    %v842 = vpow.pop %v841
    %v843 = vmul.f32 %v840, 1.442695
    %v844 = vpow.pop %v843
    %v845 = vsel %vm295, %v842, 0.0
    %846 = vadd.xlane.f32.xlu0 %v845
    %v847 = vpop.xlane.xlu0 %846
    %v848 = vsel %vm295, %v844, 0.0
    %849 = vadd.xlane.f32.xlu0 %v848
    %v850 = vpop.xlane.xlu0 %849
    %v851 = vrcp.pop %v847
    %v852 = vrcp.pop %v850
    %v853 = vmul.f32 %v842, %v851
    %v854 = vmul.f32 %v844, %v852
    %v855 = vpack.c.bf16 %v853, %v853
    %v856 = vpack.c.bf16 %v854, %v854
    %857 = vrot.lane.b32.xlu0 %v290, 48
    %v858 = vpop.permute.xlu0 %857
    %v860 = vsel %vm295, %v855, 0
    %v863 = vsel %vm156, %v858, 0
    %865 = vmatprep.subr.bf16.mxu0 0
    %866 = vmatpush1.bf16.msra.mxu0 %v863
    %867 = vmatprep.subr.bf16.mxu0 0
    %868 = vmatpush1.bf16.msra.mxu0 0
    %869 = vmatprep.subr.bf16.mxu0 0
    %870 = vmatpush1.bf16.msra.mxu0 0
    %871 = vmatprep.subr.bf16.mxu0 0
    %872 = vmatpush1.bf16.msra.mxu0 0
    %873 = vmatprep.subr.bf16.mxu0 0
    %874 = vmatpush1.bf16.msra.mxu0 0
    %875 = vmatprep.subr.bf16.mxu0 0
    %876 = vmatpush1.bf16.msra.mxu0 0
    %877 = vmatprep.subr.bf16.mxu0 0
    %878 = vmatpush1.bf16.msra.mxu0 0
    %879 = vmatprep.subr.bf16.mxu0 0
    %880 = vmatpush1.bf16.msra.mxu0 0
    %881 = vmatprep.subr.bf16.mxu0 0
    %882 = vmatpush1.bf16.msra.mxu0 0
    %883 = vmatprep.subr.bf16.mxu0 0
    %884 = vmatpush1.bf16.msra.mxu0 0
    %885 = vmatprep.subr.bf16.mxu0 0
    %886 = vmatpush1.bf16.msra.mxu0 0
    %887 = vmatprep.subr.bf16.mxu0 0
    %888 = vmatpush1.bf16.msra.mxu0 0
    %889 = vmatprep.subr.bf16.mxu0 0
    %890 = vmatpush1.bf16.msra.mxu0 0
    %891 = vmatprep.subr.bf16.mxu0 0
    %892 = vmatpush1.bf16.msra.mxu0 0
    %893 = vmatprep.subr.bf16.mxu0 0
    %894 = vmatpush1.bf16.msra.mxu0 0
    %895 = vmatprep.subr.bf16.mxu0 0
    %896 = vmatpush1.bf16.msra.mxu0 0
    %897 = vmatprep.mubr.bf16.mxu0 0
    %898 = vmatmul.mubr.bf16.gmra.mrb[0].mxu0 %v860
    %v899 = vpop.f32.mrb[0].mxu0
    %v900 = vadd.f32 0.0, %v899
    %v901 = vpop.f32.mrb[0].mxu0
    %v902 = vpop.f32.mrb[0].mxu0
    %v903 = vpop.f32.mrb[0].mxu0
    %904 = vdwg.mxu0
    %905 = vrot.lane.b32.xlu0 %v291, 48
    %v906 = vpop.permute.xlu0 %905
    %v908 = vsel %vm295, %v856, 0
    %v911 = vsel %vm156, %v906, 0
    %913 = vmatprep.subr.bf16.mxu0 0
    %914 = vmatpush1.bf16.msra.mxu0 %v911
    %915 = vmatprep.subr.bf16.mxu0 0
    %916 = vmatpush1.bf16.msra.mxu0 0
    %917 = vmatprep.subr.bf16.mxu0 0
    %918 = vmatpush1.bf16.msra.mxu0 0
    %919 = vmatprep.subr.bf16.mxu0 0
    %920 = vmatpush1.bf16.msra.mxu0 0
    %921 = vmatprep.subr.bf16.mxu0 0
    %922 = vmatpush1.bf16.msra.mxu0 0
    %923 = vmatprep.subr.bf16.mxu0 0
    %924 = vmatpush1.bf16.msra.mxu0 0
    %925 = vmatprep.subr.bf16.mxu0 0
    %926 = vmatpush1.bf16.msra.mxu0 0
    %927 = vmatprep.subr.bf16.mxu0 0
    %928 = vmatpush1.bf16.msra.mxu0 0
    %929 = vmatprep.subr.bf16.mxu0 0
    %930 = vmatpush1.bf16.msra.mxu0 0
    %931 = vmatprep.subr.bf16.mxu0 0
    %932 = vmatpush1.bf16.msra.mxu0 0
    %933 = vmatprep.subr.bf16.mxu0 0
    %934 = vmatpush1.bf16.msra.mxu0 0
    %935 = vmatprep.subr.bf16.mxu0 0
    %936 = vmatpush1.bf16.msra.mxu0 0
    %937 = vmatprep.subr.bf16.mxu0 0
    %938 = vmatpush1.bf16.msra.mxu0 0
    %939 = vmatprep.subr.bf16.mxu0 0
    %940 = vmatpush1.bf16.msra.mxu0 0
    %941 = vmatprep.subr.bf16.mxu0 0
    %942 = vmatpush1.bf16.msra.mxu0 0
    %943 = vmatprep.subr.bf16.mxu0 0
    %944 = vmatpush1.bf16.msra.mxu0 0
    %945 = vmatprep.mubr.bf16.mxu0 0
    %946 = vmatmul.mubr.bf16.gmra.mrb[0].mxu0 %v908
    %v947 = vpop.f32.mrb[0].mxu0
    %v948 = vadd.f32 0.0, %v947
    %v949 = vpop.f32.mrb[0].mxu0
    %v950 = vpop.f32.mrb[0].mxu0
    %v951 = vpop.f32.mrb[0].mxu0
    %952 = vdwg.mxu0
    %953 = vrot.lane.b32.xlu0 %v288, 104
    %v954 = vpop.permute.xlu0 %953
    %955 = vrot.lane.b32.xlu0 %v290, 72
    %v956 = vpop.permute.xlu0 %955
    %v958 = vsel %vm295, %v954, 0
    %v961 = vsel %vm295, %v956, 0
    %963 = vmatprep.subr.bf16.mxu0 0
    %964 = vmatpush1.bf16.xpose.msra.mxu0 %v961
    %965 = vmatprep.subr.bf16.mxu0 0
    %966 = vmatpush1.bf16.xpose.msra.mxu0 0
    %967 = vmatprep.subr.bf16.mxu0 0
    %968 = vmatpush1.bf16.xpose.msra.mxu0 0
    %969 = vmatprep.subr.bf16.mxu0 0
    %970 = vmatpush1.bf16.xpose.msra.mxu0 0
    %971 = vmatprep.subr.bf16.mxu0 0
    %972 = vmatpush1.bf16.xpose.msra.mxu0 0
    %973 = vmatprep.subr.bf16.mxu0 0
    %974 = vmatpush1.bf16.xpose.msra.mxu0 0
    %975 = vmatprep.subr.bf16.mxu0 0
    %976 = vmatpush1.bf16.xpose.msra.mxu0 0
    %977 = vmatprep.subr.bf16.mxu0 0
    %978 = vmatpush1.bf16.xpose.msra.mxu0 0
    %979 = vmatprep.subr.bf16.mxu0 0
    %980 = vmatpush1.bf16.xpose.msra.mxu0 0
    %981 = vmatprep.subr.bf16.mxu0 0
    %982 = vmatpush1.bf16.xpose.msra.mxu0 0
    %983 = vmatprep.subr.bf16.mxu0 0
    %984 = vmatpush1.bf16.xpose.msra.mxu0 0
    %985 = vmatprep.subr.bf16.mxu0 0
    %986 = vmatpush1.bf16.xpose.msra.mxu0 0
    %987 = vmatprep.subr.bf16.mxu0 0
    %988 = vmatpush1.bf16.xpose.msra.mxu0 0
    %989 = vmatprep.subr.bf16.mxu0 0
    %990 = vmatpush1.bf16.xpose.msra.mxu0 0
    %991 = vmatprep.subr.bf16.mxu0 0
    %992 = vmatpush1.bf16.xpose.msra.mxu0 0
    %993 = vmatprep.subr.bf16.mxu0 0
    %994 = vmatpush1.bf16.xpose.msra.mxu0 0
    %995 = vmatprep.mubr.bf16.mxu0 0
    %996 = vmatmul.mubr.bf16.gmra.mrb[0].mxu0 %v958
    %v997 = vpop.f32.mrb[0].mxu0
    %v998 = vadd.f32 0.0, %v997
    %v999 = vpop.f32.mrb[0].mxu0
    %v1000 = vpop.f32.mrb[0].mxu0
    %v1001 = vpop.f32.mrb[0].mxu0
    %1002 = vdwg.mxu0
    %1003 = vrot.lane.b32.xlu0 %v289, 104
    %v1004 = vpop.permute.xlu0 %1003
    %1005 = vrot.lane.b32.xlu0 %v291, 72
    %v1006 = vpop.permute.xlu0 %1005
    %v1008 = vsel %vm295, %v1004, 0
    %v1011 = vsel %vm295, %v1006, 0
    %1013 = vmatprep.subr.bf16.mxu0 0
    %1014 = vmatpush1.bf16.xpose.msra.mxu0 %v1011
    %1015 = vmatprep.subr.bf16.mxu0 0
    %1016 = vmatpush1.bf16.xpose.msra.mxu0 0
    %1017 = vmatprep.subr.bf16.mxu0 0
    %1018 = vmatpush1.bf16.xpose.msra.mxu0 0
    %1019 = vmatprep.subr.bf16.mxu0 0
    %1020 = vmatpush1.bf16.xpose.msra.mxu0 0
    %1021 = vmatprep.subr.bf16.mxu0 0
    %1022 = vmatpush1.bf16.xpose.msra.mxu0 0
    %1023 = vmatprep.subr.bf16.mxu0 0
    %1024 = vmatpush1.bf16.xpose.msra.mxu0 0
    %1025 = vmatprep.subr.bf16.mxu0 0
    %1026 = vmatpush1.bf16.xpose.msra.mxu0 0
    %1027 = vmatprep.subr.bf16.mxu0 0
    %1028 = vmatpush1.bf16.xpose.msra.mxu0 0
    %1029 = vmatprep.subr.bf16.mxu0 0
    %1030 = vmatpush1.bf16.xpose.msra.mxu0 0
    %1031 = vmatprep.subr.bf16.mxu0 0
    %1032 = vmatpush1.bf16.xpose.msra.mxu0 0
    %1033 = vmatprep.subr.bf16.mxu0 0
    %1034 = vmatpush1.bf16.xpose.msra.mxu0 0
    %1035 = vmatprep.subr.bf16.mxu0 0
    %1036 = vmatpush1.bf16.xpose.msra.mxu0 0
    %1037 = vmatprep.subr.bf16.mxu0 0
    %1038 = vmatpush1.bf16.xpose.msra.mxu0 0
    %1039 = vmatprep.subr.bf16.mxu0 0
    %1040 = vmatpush1.bf16.xpose.msra.mxu0 0
    %1041 = vmatprep.subr.bf16.mxu0 0
    %1042 = vmatpush1.bf16.xpose.msra.mxu0 0
    %1043 = vmatprep.subr.bf16.mxu0 0
    %1044 = vmatpush1.bf16.xpose.msra.mxu0 0
    %1045 = vmatprep.mubr.bf16.mxu0 0
    %1046 = vmatmul.mubr.bf16.gmra.mrb[0].mxu0 %v1008
    %v1047 = vpop.f32.mrb[0].mxu0
    %v1048 = vadd.f32 0.0, %v1047
    %v1049 = vpop.f32.mrb[0].mxu0
    %v1050 = vpop.f32.mrb[0].mxu0
    %v1051 = vpop.f32.mrb[0].mxu0
    %1052 = vdwg.mxu0
    %v1053 = vsel %vm295, %v998, -inf
    %1054 = vmax.xlane.f32.xlu0 %v1053
    %v1055 = vpop.xlane.xlu0 %1054
    %v1056 = vsel %vm295, %v1048, -inf
    %1057 = vmax.xlane.f32.xlu0 %v1056
    %v1058 = vpop.xlane.xlu0 %1057
    %v1059 = vsub.f32 %v998, %v1055
    %v1060 = vsub.f32 %v1048, %v1058
    %v1061 = vmul.f32 %v1059, 1.442695
    %v1062 = vpow.pop %v1061
    %v1063 = vmul.f32 %v1060, 1.442695
    %v1064 = vpow.pop %v1063
    %v1065 = vsel %vm295, %v1062, 0.0
    %1066 = vadd.xlane.f32.xlu0 %v1065
    %v1067 = vpop.xlane.xlu0 %1066
    %v1068 = vsel %vm295, %v1064, 0.0
    %1069 = vadd.xlane.f32.xlu0 %v1068
    %v1070 = vpop.xlane.xlu0 %1069
    %v1071 = vrcp.pop %v1067
    %v1072 = vrcp.pop %v1070
    %v1073 = vmul.f32 %v1062, %v1071
    %v1074 = vmul.f32 %v1064, %v1072
    %v1075 = vpack.c.bf16 %v1073, %v1073
    %v1076 = vpack.c.bf16 %v1074, %v1074
    %1077 = vrot.lane.b32.xlu0 %v290, 40
    %v1078 = vpop.permute.xlu0 %1077
    %v1080 = vsel %vm295, %v1075, 0
    %v1083 = vsel %vm156, %v1078, 0
    %1085 = vmatprep.subr.bf16.mxu0 0
    %1086 = vmatpush1.bf16.msra.mxu0 %v1083
    %1087 = vmatprep.subr.bf16.mxu0 0
    %1088 = vmatpush1.bf16.msra.mxu0 0
    %1089 = vmatprep.subr.bf16.mxu0 0
    %1090 = vmatpush1.bf16.msra.mxu0 0
    %1091 = vmatprep.subr.bf16.mxu0 0
    %1092 = vmatpush1.bf16.msra.mxu0 0
    %1093 = vmatprep.subr.bf16.mxu0 0
    %1094 = vmatpush1.bf16.msra.mxu0 0
    %1095 = vmatprep.subr.bf16.mxu0 0
    %1096 = vmatpush1.bf16.msra.mxu0 0
    %1097 = vmatprep.subr.bf16.mxu0 0
    %1098 = vmatpush1.bf16.msra.mxu0 0
    %1099 = vmatprep.subr.bf16.mxu0 0
    %1100 = vmatpush1.bf16.msra.mxu0 0
    %1101 = vmatprep.subr.bf16.mxu0 0
    %1102 = vmatpush1.bf16.msra.mxu0 0
    %1103 = vmatprep.subr.bf16.mxu0 0
    %1104 = vmatpush1.bf16.msra.mxu0 0
    %1105 = vmatprep.subr.bf16.mxu0 0
    %1106 = vmatpush1.bf16.msra.mxu0 0
    %1107 = vmatprep.subr.bf16.mxu0 0
    %1108 = vmatpush1.bf16.msra.mxu0 0
    %1109 = vmatprep.subr.bf16.mxu0 0
    %1110 = vmatpush1.bf16.msra.mxu0 0
    %1111 = vmatprep.subr.bf16.mxu0 0
    %1112 = vmatpush1.bf16.msra.mxu0 0
    %1113 = vmatprep.subr.bf16.mxu0 0
    %1114 = vmatpush1.bf16.msra.mxu0 0
    %1115 = vmatprep.subr.bf16.mxu0 0
    %1116 = vmatpush1.bf16.msra.mxu0 0
    %1117 = vmatprep.mubr.bf16.mxu0 0
    %1118 = vmatmul.mubr.bf16.gmra.mrb[0].mxu0 %v1080
    %v1119 = vpop.f32.mrb[0].mxu0
    %v1120 = vadd.f32 0.0, %v1119
    %v1121 = vpop.f32.mrb[0].mxu0
    %v1122 = vpop.f32.mrb[0].mxu0
    %v1123 = vpop.f32.mrb[0].mxu0
    %1124 = vdwg.mxu0
    %1125 = vrot.lane.b32.xlu0 %v291, 40
    %v1126 = vpop.permute.xlu0 %1125
    %v1128 = vsel %vm295, %v1076, 0
    %v1131 = vsel %vm156, %v1126, 0
    %1133 = vmatprep.subr.bf16.mxu0 0
    %1134 = vmatpush1.bf16.msra.mxu0 %v1131
    %1135 = vmatprep.subr.bf16.mxu0 0
    %1136 = vmatpush1.bf16.msra.mxu0 0
    %1137 = vmatprep.subr.bf16.mxu0 0
    %1138 = vmatpush1.bf16.msra.mxu0 0
    %1139 = vmatprep.subr.bf16.mxu0 0
    %1140 = vmatpush1.bf16.msra.mxu0 0
    %1141 = vmatprep.subr.bf16.mxu0 0
    %1142 = vmatpush1.bf16.msra.mxu0 0
    %1143 = vmatprep.subr.bf16.mxu0 0
    %1144 = vmatpush1.bf16.msra.mxu0 0
    %1145 = vmatprep.subr.bf16.mxu0 0
    %1146 = vmatpush1.bf16.msra.mxu0 0
    %1147 = vmatprep.subr.bf16.mxu0 0
    %1148 = vmatpush1.bf16.msra.mxu0 0
    %1149 = vmatprep.subr.bf16.mxu0 0
    %1150 = vmatpush1.bf16.msra.mxu0 0
    %1151 = vmatprep.subr.bf16.mxu0 0
    %1152 = vmatpush1.bf16.msra.mxu0 0
    %1153 = vmatprep.subr.bf16.mxu0 0
    %1154 = vmatpush1.bf16.msra.mxu0 0
    %1155 = vmatprep.subr.bf16.mxu0 0
    %1156 = vmatpush1.bf16.msra.mxu0 0
    %1157 = vmatprep.subr.bf16.mxu0 0
    %1158 = vmatpush1.bf16.msra.mxu0 0
    %1159 = vmatprep.subr.bf16.mxu0 0
    %1160 = vmatpush1.bf16.msra.mxu0 0
    %1161 = vmatprep.subr.bf16.mxu0 0
    %1162 = vmatpush1.bf16.msra.mxu0 0
    %1163 = vmatprep.subr.bf16.mxu0 0
    %1164 = vmatpush1.bf16.msra.mxu0 0
    %1165 = vmatprep.mubr.bf16.mxu0 0
    %1166 = vmatmul.mubr.bf16.gmra.mrb[0].mxu0 %v1128
    %v1167 = vpop.f32.mrb[0].mxu0
    %v1168 = vadd.f32 0.0, %v1167
    %v1169 = vpop.f32.mrb[0].mxu0
    %v1170 = vpop.f32.mrb[0].mxu0
    %v1171 = vpop.f32.mrb[0].mxu0
    %1172 = vdwg.mxu0
    %1175 = vrot.lane.b32.xlu0 %v680, 8
    %v1176 = vpop.permute.xlu0 %1175
    %1177 = vrot.lane.b32.xlu0 %v728, 8
    %v1178 = vpop.permute.xlu0 %1177
    %1183 = vrot.lane.b32.xlu0 %v900, 16
    %v1184 = vpop.permute.xlu0 %1183
    %1185 = vrot.lane.b32.xlu0 %v948, 16
    %v1186 = vpop.permute.xlu0 %1185
    %1191 = vrot.lane.b32.xlu0 %v1120, 24
    %v1192 = vpop.permute.xlu0 %1191
    %1193 = vrot.lane.b32.xlu0 %v1168, 24
    %v1194 = vpop.permute.xlu0 %1193
    %v1197 = vsel %vm295, %v458, %v1176
    %v1198 = vsel %vm295, %v506, %v1178
    %vm1199 = vcmask 130048
    %v1200 = vsel %vm1199, %v1197, %v1184
    %v1201 = vsel %vm1199, %v1198, %v1186
    %vm1202 = vcmask 195584
    %v1203 = vsel %vm1202, %v1200, %v1192
    %v1204 = vsel %vm1202, %v1201, %v1194
    %v1205 = vpack.c.bf16 %v1204, %v1203
    %v1206 = vld [vmem:[%s6] sm:$0xf]
    %v1207 = vld [vmem:[%s6 + $0x4] sm:$0xf]
    %v1208 = vld [vmem:[%s6 + $0x8] sm:$0xf]
    %v1209 = vld [vmem:[%s6 + $0xc] sm:$0xf]
    %v1211 = vlaneseq
    %v1212 = vshrl.u32 %v1211, 7
    %v1213 = vsub.s32 0, %v1212
    %v1214 = vrot.slane %v211, %v1213
    %v1220 = vunpack.c.l.b16 %v1206
    %v1221 = vunpack.c.l.b16 %v1207
    %v1222 = vunpack.c.l.b16 %v1208
    %v1223 = vunpack.c.l.b16 %v1209
    %v1224 = vpack.c.b16 %v1221, %v1220
    %v1225 = vpack.c.b16 %v1223, %v1222
    %v1229 = vsel %vm241, %v1205, 0
    %1231 = vmatprep.subr.bf16.mxu0 0
    %1232 = vmatpush1.bf16.msra.mxu0 %v1224
    %1233 = vmatprep.subr.bf16.mxu0 0
    %1234 = vmatpush1.bf16.msra.mxu0 %v1225
    %1235 = vmatprep.subr.bf16.mxu0 0
    %1236 = vmatpush1.bf16.msra.mxu0 0
    %1237 = vmatprep.subr.bf16.mxu0 0
    %1238 = vmatpush1.bf16.msra.mxu0 0
    %1239 = vmatprep.subr.bf16.mxu0 0
    %1240 = vmatpush1.bf16.msra.mxu0 0
    %1241 = vmatprep.subr.bf16.mxu0 0
    %1242 = vmatpush1.bf16.msra.mxu0 0
    %1243 = vmatprep.subr.bf16.mxu0 0
    %1244 = vmatpush1.bf16.msra.mxu0 0
    %1245 = vmatprep.subr.bf16.mxu0 0
    %1246 = vmatpush1.bf16.msra.mxu0 0
    %1247 = vmatprep.subr.bf16.mxu0 0
    %1248 = vmatpush1.bf16.msra.mxu0 0
    %1249 = vmatprep.subr.bf16.mxu0 0
    %1250 = vmatpush1.bf16.msra.mxu0 0
    %1251 = vmatprep.subr.bf16.mxu0 0
    %1252 = vmatpush1.bf16.msra.mxu0 0
    %1253 = vmatprep.subr.bf16.mxu0 0
    %1254 = vmatpush1.bf16.msra.mxu0 0
    %1255 = vmatprep.subr.bf16.mxu0 0
    %1256 = vmatpush1.bf16.msra.mxu0 0
    %1257 = vmatprep.subr.bf16.mxu0 0
    %1258 = vmatpush1.bf16.msra.mxu0 0
    %1259 = vmatprep.subr.bf16.mxu0 0
    %1260 = vmatpush1.bf16.msra.mxu0 0
    %1261 = vmatprep.subr.bf16.mxu0 0
    %1262 = vmatpush1.bf16.msra.mxu0 0
    %1263 = vmatprep.mubr.bf16.mxu0 0
    %1264 = vmatmul.mubr.bf16.gmra.mrb[0].mxu0 %v1229
    %v1265 = vpop.f32.mrb[0].mxu0
    %v1266 = vadd.f32 %v1214, %v1265
    %v1267 = vpop.f32.mrb[0].mxu0
    %v1268 = vpop.f32.mrb[0].mxu0
    %v1269 = vadd.f32 %v1214, %v1268
    %v1270 = vpop.f32.mrb[0].mxu0
    %1271 = vdwg.mxu0
    %v1272 = vadd.f32 %v208, %v1266
    %v1273 = vadd.f32 %v209, %v1269
    %v1274 = vsel %vm241, %v1272, 0.0
    %1275 = vadd.xlane.f32.xlu0 %v1274
    %v1276 = vpop.xlane.xlu0 %1275
    %v1277 = vsel %vm241, %v1273, 0.0
    %1278 = vadd.xlane.f32.xlu0 %v1277
    %v1279 = vpop.xlane.xlu0 %1278
    %v1280 = vrcp.pop 32.0
    %v1281 = vmul.f32 %v1276, %v1280
    %v1282 = vmul.f32 %v1279, %v1280
    %v1283 = vsub.f32 %v1272, %v1281
    %v1284 = vsub.f32 %v1273, %v1282
    %v1285 = vmul.f32 %v1283, %v1283
    %v1286 = vmul.f32 %v1284, %v1284
    %v1287 = vsel %vm241, %v1285, 0.0
    %1288 = vadd.xlane.f32.xlu0 %v1287
    %v1289 = vpop.xlane.xlu0 %1288
    %v1290 = vsel %vm241, %v1286, 0.0
    %1291 = vadd.xlane.f32.xlu0 %v1290
    %v1292 = vpop.xlane.xlu0 %1291
    %v1293 = vmul.f32 %v1289, %v1280
    %v1294 = vmul.f32 %v1292, %v1280
    %v1295 = vadd.f32 %v1293, 1e-05
    %v1296 = vadd.f32 %v1294, 1e-05
    %v1297 = vrsqrt.pop %v1295
    %v1298 = vrsqrt.pop %v1296
    %v1299 = vmul.f32 %v1283, %v1297
    %v1300 = vmul.f32 %v1284, %v1298
    %v1302 = vlaneseq
    %v1303 = vshrl.u32 %v1302, 7
    %v1304 = vsub.s32 0, %v1303
    %v1305 = vrot.slane %v214, %v1304
    %v1307 = vmul.f32 %v1299, %v1305
    %v1308 = vmul.f32 %v1300, %v1305
    %v1310 = vlaneseq
    %v1311 = vshrl.u32 %v1310, 7
    %v1312 = vsub.s32 0, %v1311
    %v1313 = vrot.slane %v215, %v1312
    %v1315 = vadd.f32 %v1307, %v1313
    %v1316 = vadd.f32 %v1308, %v1313
    %v1317 = vpack.c.bf16 %v1316, %v1315
    %v1318 = vld [vmem:[%s8] sm:$0xf]
    %v1319 = vld [vmem:[%s8 + $0x4] sm:$0xf]
    %v1320 = vld [vmem:[%s8 + $0x8] sm:$0xf]
    %v1321 = vld [vmem:[%s8 + $0xc] sm:$0xf]
    %v1323 = vlaneseq
    %v1324 = vshrl.u32 %v1323, 7
    %v1325 = vsub.s32 0, %v1324
    %v1326 = vrot.slane %v212, %v1325
    %v1332 = vunpack.c.l.b16 %v1318
    %v1333 = vunpack.c.l.b16 %v1319
    %v1334 = vunpack.c.l.b16 %v1320
    %v1335 = vunpack.c.l.b16 %v1321
    %v1336 = vpack.c.b16 %v1333, %v1332
    %v1337 = vpack.c.b16 %v1335, %v1334
    %v1341 = vsel %vm241, %v1317, 0
    %1343 = vmatprep.subr.bf16.mxu0 0
    %1344 = vmatpush1.bf16.msra.mxu0 %v1336
    %1345 = vmatprep.subr.bf16.mxu0 0
    %1346 = vmatpush1.bf16.msra.mxu0 %v1337
    %1347 = vmatprep.subr.bf16.mxu0 0
    %1348 = vmatpush1.bf16.msra.mxu0 0
    %1349 = vmatprep.subr.bf16.mxu0 0
    %1350 = vmatpush1.bf16.msra.mxu0 0
    %1351 = vmatprep.subr.bf16.mxu0 0
    %1352 = vmatpush1.bf16.msra.mxu0 0
    %1353 = vmatprep.subr.bf16.mxu0 0
    %1354 = vmatpush1.bf16.msra.mxu0 0
    %1355 = vmatprep.subr.bf16.mxu0 0
    %1356 = vmatpush1.bf16.msra.mxu0 0
    %1357 = vmatprep.subr.bf16.mxu0 0
    %1358 = vmatpush1.bf16.msra.mxu0 0
    %1359 = vmatprep.subr.bf16.mxu0 0
    %1360 = vmatpush1.bf16.msra.mxu0 0
    %1361 = vmatprep.subr.bf16.mxu0 0
    %1362 = vmatpush1.bf16.msra.mxu0 0
    %1363 = vmatprep.subr.bf16.mxu0 0
    %1364 = vmatpush1.bf16.msra.mxu0 0
    %1365 = vmatprep.subr.bf16.mxu0 0
    %1366 = vmatpush1.bf16.msra.mxu0 0
    %1367 = vmatprep.subr.bf16.mxu0 0
    %1368 = vmatpush1.bf16.msra.mxu0 0
    %1369 = vmatprep.subr.bf16.mxu0 0
    %1370 = vmatpush1.bf16.msra.mxu0 0
    %1371 = vmatprep.subr.bf16.mxu0 0
    %1372 = vmatpush1.bf16.msra.mxu0 0
    %1373 = vmatprep.subr.bf16.mxu0 0
    %1374 = vmatpush1.bf16.msra.mxu0 0
    %1375 = vmatprep.mubr.bf16.mxu0 0
    %1376 = vmatmul.mubr.bf16.gmra.mrb[0].mxu0 %v1341
    %v1377 = vpop.f32.mrb[0].mxu0
    %v1378 = vadd.f32 %v1326, %v1377
    %v1379 = vpop.f32.mrb[0].mxu0
    %v1380 = vpop.f32.mrb[0].mxu0
    %v1381 = vadd.f32 %v1326, %v1380
    %v1382 = vpop.f32.mrb[0].mxu0
    %1383 = vdwg.mxu0
    %v1384 = vmax.f32 %v1378, 0.0
    %v1385 = vmax.f32 %v1381, 0.0
    %v1386 = vpack.c.bf16 %v1385, %v1384
    %v1387 = vld [vmem:[%s10] sm:$0xf]
    %v1388 = vld [vmem:[%s10 + $0x4] sm:$0xf]
    %v1389 = vld [vmem:[%s10 + $0x8] sm:$0xf]
    %v1390 = vld [vmem:[%s10 + $0xc] sm:$0xf]
    %v1391 = vld [vmem:[%s10 + $0x10] sm:$0xf]
    %v1392 = vld [vmem:[%s10 + $0x14] sm:$0xf]
    %v1393 = vld [vmem:[%s10 + $0x18] sm:$0xf]
    %v1394 = vld [vmem:[%s10 + $0x1c] sm:$0xf]
    %v1396 = vlaneseq
    %v1397 = vshrl.u32 %v1396, 7
    %v1398 = vsub.s32 0, %v1397
    %v1399 = vrot.slane %v213, %v1398
    %v1409 = vunpack.c.l.b16 %v1387
    %v1410 = vunpack.c.l.b16 %v1388
    %v1411 = vunpack.c.l.b16 %v1389
    %v1412 = vunpack.c.l.b16 %v1390
    %v1413 = vunpack.c.l.b16 %v1391
    %v1414 = vunpack.c.l.b16 %v1392
    %v1415 = vunpack.c.l.b16 %v1393
    %v1416 = vunpack.c.l.b16 %v1394
    %v1417 = vpack.c.b16 %v1410, %v1409
    %v1418 = vpack.c.b16 %v1412, %v1411
    %v1419 = vpack.c.b16 %v1414, %v1413
    %v1420 = vpack.c.b16 %v1416, %v1415
    %vm1425 = vcmask 523264
    %v1427 = vsel %vm1425, %v1386, 0
    %1429 = vmatprep.subr.bf16.mxu0 0
    %1430 = vmatpush1.bf16.msra.mxu0 %v1417
    %1431 = vmatprep.subr.bf16.mxu0 0
    %1432 = vmatpush1.bf16.msra.mxu0 %v1418
    %1433 = vmatprep.subr.bf16.mxu0 0
    %1434 = vmatpush1.bf16.msra.mxu0 %v1419
    %1435 = vmatprep.subr.bf16.mxu0 0
    %1436 = vmatpush1.bf16.msra.mxu0 %v1420
    %1437 = vmatprep.subr.bf16.mxu0 0
    %1438 = vmatpush1.bf16.msra.mxu0 0
    %1439 = vmatprep.subr.bf16.mxu0 0
    %1440 = vmatpush1.bf16.msra.mxu0 0
    %1441 = vmatprep.subr.bf16.mxu0 0
    %1442 = vmatpush1.bf16.msra.mxu0 0
    %1443 = vmatprep.subr.bf16.mxu0 0
    %1444 = vmatpush1.bf16.msra.mxu0 0
    %1445 = vmatprep.subr.bf16.mxu0 0
    %1446 = vmatpush1.bf16.msra.mxu0 0
    %1447 = vmatprep.subr.bf16.mxu0 0
    %1448 = vmatpush1.bf16.msra.mxu0 0
    %1449 = vmatprep.subr.bf16.mxu0 0
    %1450 = vmatpush1.bf16.msra.mxu0 0
    %1451 = vmatprep.subr.bf16.mxu0 0
    %1452 = vmatpush1.bf16.msra.mxu0 0
    %1453 = vmatprep.subr.bf16.mxu0 0
    %1454 = vmatpush1.bf16.msra.mxu0 0
    %1455 = vmatprep.subr.bf16.mxu0 0
    %1456 = vmatpush1.bf16.msra.mxu0 0
    %1457 = vmatprep.subr.bf16.mxu0 0
    %1458 = vmatpush1.bf16.msra.mxu0 0
    %1459 = vmatprep.subr.bf16.mxu0 0
    %1460 = vmatpush1.bf16.msra.mxu0 0
    %1461 = vmatprep.mubr.bf16.mxu0 0
    %1462 = vmatmul.mubr.bf16.gmra.mrb[0].mxu0 %v1427
    %v1463 = vpop.f32.mrb[0].mxu0
    %v1464 = vadd.f32 %v1399, %v1463
    %v1465 = vpop.f32.mrb[0].mxu0
    %v1466 = vpop.f32.mrb[0].mxu0
    %v1467 = vadd.f32 %v1399, %v1466
    %v1468 = vpop.f32.mrb[0].mxu0
    %1469 = vdwg.mxu0
    %v1470 = vadd.f32 %v1315, %v1464
    %v1471 = vadd.f32 %v1316, %v1467
    %v1472 = vsel %vm241, %v1470, 0.0
    %1473 = vadd.xlane.f32.xlu0 %v1472
    %v1474 = vpop.xlane.xlu0 %1473
    %v1475 = vsel %vm241, %v1471, 0.0
    %1476 = vadd.xlane.f32.xlu0 %v1475
    %v1477 = vpop.xlane.xlu0 %1476
    %v1478 = vmul.f32 %v1474, %v1280
    %v1479 = vmul.f32 %v1477, %v1280
    %v1480 = vsub.f32 %v1470, %v1478
    %v1481 = vsub.f32 %v1471, %v1479
    %v1482 = vmul.f32 %v1480, %v1480
    %v1483 = vmul.f32 %v1481, %v1481
    %v1484 = vsel %vm241, %v1482, 0.0
    %1485 = vadd.xlane.f32.xlu0 %v1484
    %v1486 = vpop.xlane.xlu0 %1485
    %v1487 = vsel %vm241, %v1483, 0.0
    %1488 = vadd.xlane.f32.xlu0 %v1487
    %v1489 = vpop.xlane.xlu0 %1488
    %v1490 = vmul.f32 %v1486, %v1280
    %v1491 = vmul.f32 %v1489, %v1280
    %v1492 = vadd.f32 %v1490, 1e-05
    %v1493 = vadd.f32 %v1491, 1e-05
    %v1494 = vrsqrt.pop %v1492
    %v1495 = vrsqrt.pop %v1493
    %v1496 = vmul.f32 %v1480, %v1494
    %v1497 = vmul.f32 %v1481, %v1495
    %v1499 = vlaneseq
    %v1500 = vshrl.u32 %v1499, 7
    %v1501 = vsub.s32 0, %v1500
    %v1502 = vrot.slane %v216, %v1501
    %v1504 = vmul.f32 %v1496, %v1502
    %v1505 = vmul.f32 %v1497, %v1502
    %v1507 = vlaneseq
    %v1508 = vshrl.u32 %v1507, 7
    %v1509 = vsub.s32 0, %v1508
    %v1510 = vrot.slane %v217, %v1509
    %v1512 = vadd.f32 %v1504, %v1510
    %v1513 = vadd.f32 %v1505, %v1510
    %s1514 = scalar_lea.vmem [#allocation5], 1
    %v1515 = vld [vmem:[%s1514] sm:$0x1]
    %s1516 = scalar_lea.vmem [#allocation7], 1
    %v1517 = vld [vmem:[%s1516] sm:$0x1]
    %s1518 = scalar_lea.vmem [#allocation8], 1
    %v1519 = vld [vmem:[%s1518] sm:$0x1]
    %s1520 = scalar_lea.vmem [#allocation10], 1
    %v1521 = vld [vmem:[%s1520] sm:$0x1]
    %s1522 = scalar_lea.vmem %s12, 1
    %v1523 = vld [vmem:[%s1522] sm:$0x1]
    %s1524 = scalar_lea.vmem %s13, 1
    %v1525 = vld [vmem:[%s1524] sm:$0x1]
    %s1526 = scalar_lea.vmem %s14, 1
    %v1527 = vld [vmem:[%s1526] sm:$0x1]
    %s1528 = scalar_lea.vmem %s15, 1
    %v1529 = vld [vmem:[%s1528] sm:$0x1]
    %v1530 = vpack.c.bf16 %v1513, %v1512
    %s1531 = scalar_lea.vmem %s4, 16
    %v1532 = vld [vmem:[%s1531] sm:$0xf]
    %v1533 = vld [vmem:[%s1531 + $0x4] sm:$0xf]
    %v1534 = vld [vmem:[%s1531 + $0x8] sm:$0xf]
    %v1535 = vld [vmem:[%s1531 + $0xc] sm:$0xf]
    %v1537 = vlaneseq
    %v1538 = vshrl.u32 %v1537, 7
    %v1539 = vsub.s32 0, %v1538
    %v1540 = vrot.slane %v1515, %v1539
    %v1546 = vunpack.c.l.b16 %v1532
    %v1547 = vunpack.c.l.b16 %v1533
    %v1548 = vunpack.c.l.b16 %v1534
    %v1549 = vunpack.c.l.b16 %v1535
    %v1550 = vpack.c.b16 %v1547, %v1546
    %v1551 = vpack.c.b16 %v1549, %v1548
    %v1555 = vsel %vm241, %v1530, 0
    %1557 = vmatprep.subr.bf16.mxu0 0
    %1558 = vmatpush1.bf16.msra.mxu0 %v1550
    %1559 = vmatprep.subr.bf16.mxu0 0
    %1560 = vmatpush1.bf16.msra.mxu0 %v1551
    %1561 = vmatprep.subr.bf16.mxu0 0
    %1562 = vmatpush1.bf16.msra.mxu0 0
    %1563 = vmatprep.subr.bf16.mxu0 0
    %1564 = vmatpush1.bf16.msra.mxu0 0
    %1565 = vmatprep.subr.bf16.mxu0 0
    %1566 = vmatpush1.bf16.msra.mxu0 0
    %1567 = vmatprep.subr.bf16.mxu0 0
    %1568 = vmatpush1.bf16.msra.mxu0 0
    %1569 = vmatprep.subr.bf16.mxu0 0
    %1570 = vmatpush1.bf16.msra.mxu0 0
    %1571 = vmatprep.subr.bf16.mxu0 0
    %1572 = vmatpush1.bf16.msra.mxu0 0
    %1573 = vmatprep.subr.bf16.mxu0 0
    %1574 = vmatpush1.bf16.msra.mxu0 0
    %1575 = vmatprep.subr.bf16.mxu0 0
    %1576 = vmatpush1.bf16.msra.mxu0 0
    %1577 = vmatprep.subr.bf16.mxu0 0
    %1578 = vmatpush1.bf16.msra.mxu0 0
    %1579 = vmatprep.subr.bf16.mxu0 0
    %1580 = vmatpush1.bf16.msra.mxu0 0
    %1581 = vmatprep.subr.bf16.mxu0 0
    %1582 = vmatpush1.bf16.msra.mxu0 0
    %1583 = vmatprep.subr.bf16.mxu0 0
    %1584 = vmatpush1.bf16.msra.mxu0 0
    %1585 = vmatprep.subr.bf16.mxu0 0
    %1586 = vmatpush1.bf16.msra.mxu0 0
    %1587 = vmatprep.subr.bf16.mxu0 0
    %1588 = vmatpush1.bf16.msra.mxu0 0
    %1589 = vmatprep.mubr.bf16.mxu0 0
    %1590 = vmatmul.mubr.bf16.gmra.mrb[0].mxu0 %v1555
    %v1591 = vpop.f32.mrb[0].mxu0
    %v1592 = vadd.f32 %v1540, %v1591
    %v1593 = vpop.f32.mrb[0].mxu0
    %v1594 = vpop.f32.mrb[0].mxu0
    %v1595 = vadd.f32 %v1540, %v1594
    %v1596 = vpop.f32.mrb[0].mxu0
    %1597 = vdwg.mxu0
    %v1598 = vmul.f32 %v1592, 0.35355338
    %v1599 = vmul.f32 %v1595, 0.35355338
    %v1600 = vpack.c.bf16 %v1598, %v1598
    %v1601 = vpack.c.bf16 %v1599, %v1599
    %v1602 = vpack.c.bf16 %v1592, %v1592
    %v1603 = vpack.c.bf16 %v1595, %v1595
    %1605 = vrot.lane.b32.xlu0 %v1602, 96
    %v1606 = vpop.permute.xlu0 %1605
    %v1608 = vsel %vm295, %v1600, 0
    %v1611 = vsel %vm295, %v1606, 0
    %1613 = vmatprep.subr.bf16.mxu0 0
    %1614 = vmatpush1.bf16.xpose.msra.mxu0 %v1611
    %1615 = vmatprep.subr.bf16.mxu0 0
    %1616 = vmatpush1.bf16.xpose.msra.mxu0 0
    %1617 = vmatprep.subr.bf16.mxu0 0
    %1618 = vmatpush1.bf16.xpose.msra.mxu0 0
    %1619 = vmatprep.subr.bf16.mxu0 0
    %1620 = vmatpush1.bf16.xpose.msra.mxu0 0
    %1621 = vmatprep.subr.bf16.mxu0 0
    %1622 = vmatpush1.bf16.xpose.msra.mxu0 0
    %1623 = vmatprep.subr.bf16.mxu0 0
    %1624 = vmatpush1.bf16.xpose.msra.mxu0 0
    %1625 = vmatprep.subr.bf16.mxu0 0
    %1626 = vmatpush1.bf16.xpose.msra.mxu0 0
    %1627 = vmatprep.subr.bf16.mxu0 0
    %1628 = vmatpush1.bf16.xpose.msra.mxu0 0
    %1629 = vmatprep.subr.bf16.mxu0 0
    %1630 = vmatpush1.bf16.xpose.msra.mxu0 0
    %1631 = vmatprep.subr.bf16.mxu0 0
    %1632 = vmatpush1.bf16.xpose.msra.mxu0 0
    %1633 = vmatprep.subr.bf16.mxu0 0
    %1634 = vmatpush1.bf16.xpose.msra.mxu0 0
    %1635 = vmatprep.subr.bf16.mxu0 0
    %1636 = vmatpush1.bf16.xpose.msra.mxu0 0
    %1637 = vmatprep.subr.bf16.mxu0 0
    %1638 = vmatpush1.bf16.xpose.msra.mxu0 0
    %1639 = vmatprep.subr.bf16.mxu0 0
    %1640 = vmatpush1.bf16.xpose.msra.mxu0 0
    %1641 = vmatprep.subr.bf16.mxu0 0
    %1642 = vmatpush1.bf16.xpose.msra.mxu0 0
    %1643 = vmatprep.subr.bf16.mxu0 0
    %1644 = vmatpush1.bf16.xpose.msra.mxu0 0
    %1645 = vmatprep.mubr.bf16.mxu0 0
    %1646 = vmatmul.mubr.bf16.gmra.mrb[0].mxu0 %v1608
    %v1647 = vpop.f32.mrb[0].mxu0
    %v1648 = vadd.f32 0.0, %v1647
    %v1649 = vpop.f32.mrb[0].mxu0
    %v1650 = vpop.f32.mrb[0].mxu0
    %v1651 = vpop.f32.mrb[0].mxu0
    %1652 = vdwg.mxu0
    %1654 = vrot.lane.b32.xlu0 %v1603, 96
    %v1655 = vpop.permute.xlu0 %1654
    %v1657 = vsel %vm295, %v1601, 0
    %v1660 = vsel %vm295, %v1655, 0
    %1662 = vmatprep.subr.bf16.mxu0 0
    %1663 = vmatpush1.bf16.xpose.msra.mxu0 %v1660
    %1664 = vmatprep.subr.bf16.mxu0 0
    %1665 = vmatpush1.bf16.xpose.msra.mxu0 0
    %1666 = vmatprep.subr.bf16.mxu0 0
    %1667 = vmatpush1.bf16.xpose.msra.mxu0 0
    %1668 = vmatprep.subr.bf16.mxu0 0
    %1669 = vmatpush1.bf16.xpose.msra.mxu0 0
    %1670 = vmatprep.subr.bf16.mxu0 0
    %1671 = vmatpush1.bf16.xpose.msra.mxu0 0
    %1672 = vmatprep.subr.bf16.mxu0 0
    %1673 = vmatpush1.bf16.xpose.msra.mxu0 0
    %1674 = vmatprep.subr.bf16.mxu0 0
    %1675 = vmatpush1.bf16.xpose.msra.mxu0 0
    %1676 = vmatprep.subr.bf16.mxu0 0
    %1677 = vmatpush1.bf16.xpose.msra.mxu0 0
    %1678 = vmatprep.subr.bf16.mxu0 0
    %1679 = vmatpush1.bf16.xpose.msra.mxu0 0
    %1680 = vmatprep.subr.bf16.mxu0 0
    %1681 = vmatpush1.bf16.xpose.msra.mxu0 0
    %1682 = vmatprep.subr.bf16.mxu0 0
    %1683 = vmatpush1.bf16.xpose.msra.mxu0 0
    %1684 = vmatprep.subr.bf16.mxu0 0
    %1685 = vmatpush1.bf16.xpose.msra.mxu0 0
    %1686 = vmatprep.subr.bf16.mxu0 0
    %1687 = vmatpush1.bf16.xpose.msra.mxu0 0
    %1688 = vmatprep.subr.bf16.mxu0 0
    %1689 = vmatpush1.bf16.xpose.msra.mxu0 0
    %1690 = vmatprep.subr.bf16.mxu0 0
    %1691 = vmatpush1.bf16.xpose.msra.mxu0 0
    %1692 = vmatprep.subr.bf16.mxu0 0
    %1693 = vmatpush1.bf16.xpose.msra.mxu0 0
    %1694 = vmatprep.mubr.bf16.mxu0 0
    %1695 = vmatmul.mubr.bf16.gmra.mrb[0].mxu0 %v1657
    %v1696 = vpop.f32.mrb[0].mxu0
    %v1697 = vadd.f32 0.0, %v1696
    %v1698 = vpop.f32.mrb[0].mxu0
    %v1699 = vpop.f32.mrb[0].mxu0
    %v1700 = vpop.f32.mrb[0].mxu0
    %1701 = vdwg.mxu0
    %v1702 = vsel %vm295, %v1648, -inf
    %1703 = vmax.xlane.f32.xlu0 %v1702
    %v1704 = vpop.xlane.xlu0 %1703
    %v1705 = vsel %vm295, %v1697, -inf
    %1706 = vmax.xlane.f32.xlu0 %v1705
    %v1707 = vpop.xlane.xlu0 %1706
    %v1708 = vsub.f32 %v1648, %v1704
    %v1709 = vsub.f32 %v1697, %v1707
    %v1710 = vmul.f32 %v1708, 1.442695
    %v1711 = vpow.pop %v1710
    %v1712 = vmul.f32 %v1709, 1.442695
    %v1713 = vpow.pop %v1712
    %v1714 = vsel %vm295, %v1711, 0.0
    %1715 = vadd.xlane.f32.xlu0 %v1714
    %v1716 = vpop.xlane.xlu0 %1715
    %v1717 = vsel %vm295, %v1713, 0.0
    %1718 = vadd.xlane.f32.xlu0 %v1717
    %v1719 = vpop.xlane.xlu0 %1718
    %v1720 = vrcp.pop %v1716
    %v1721 = vrcp.pop %v1719
    %v1722 = vmul.f32 %v1711, %v1720
    %v1723 = vmul.f32 %v1713, %v1721
    %v1724 = vpack.c.bf16 %v1722, %v1722
    %v1725 = vpack.c.bf16 %v1723, %v1723
    %1726 = vrot.lane.b32.xlu0 %v1602, 64
    %v1727 = vpop.permute.xlu0 %1726
    %v1729 = vsel %vm295, %v1724, 0
    %v1732 = vsel %vm156, %v1727, 0
    %1734 = vmatprep.subr.bf16.mxu0 0
    %1735 = vmatpush1.bf16.msra.mxu0 %v1732
    %1736 = vmatprep.subr.bf16.mxu0 0
    %1737 = vmatpush1.bf16.msra.mxu0 0
    %1738 = vmatprep.subr.bf16.mxu0 0
    %1739 = vmatpush1.bf16.msra.mxu0 0
    %1740 = vmatprep.subr.bf16.mxu0 0
    %1741 = vmatpush1.bf16.msra.mxu0 0
    %1742 = vmatprep.subr.bf16.mxu0 0
    %1743 = vmatpush1.bf16.msra.mxu0 0
    %1744 = vmatprep.subr.bf16.mxu0 0
    %1745 = vmatpush1.bf16.msra.mxu0 0
    %1746 = vmatprep.subr.bf16.mxu0 0
    %1747 = vmatpush1.bf16.msra.mxu0 0
    %1748 = vmatprep.subr.bf16.mxu0 0
    %1749 = vmatpush1.bf16.msra.mxu0 0
    %1750 = vmatprep.subr.bf16.mxu0 0
    %1751 = vmatpush1.bf16.msra.mxu0 0
    %1752 = vmatprep.subr.bf16.mxu0 0
    %1753 = vmatpush1.bf16.msra.mxu0 0
    %1754 = vmatprep.subr.bf16.mxu0 0
    %1755 = vmatpush1.bf16.msra.mxu0 0
    %1756 = vmatprep.subr.bf16.mxu0 0
    %1757 = vmatpush1.bf16.msra.mxu0 0
    %1758 = vmatprep.subr.bf16.mxu0 0
    %1759 = vmatpush1.bf16.msra.mxu0 0
    %1760 = vmatprep.subr.bf16.mxu0 0
    %1761 = vmatpush1.bf16.msra.mxu0 0
    %1762 = vmatprep.subr.bf16.mxu0 0
    %1763 = vmatpush1.bf16.msra.mxu0 0
    %1764 = vmatprep.subr.bf16.mxu0 0
    %1765 = vmatpush1.bf16.msra.mxu0 0
    %1766 = vmatprep.mubr.bf16.mxu0 0
    %1767 = vmatmul.mubr.bf16.gmra.mrb[0].mxu0 %v1729
    %v1768 = vpop.f32.mrb[0].mxu0
    %v1769 = vadd.f32 0.0, %v1768
    %v1770 = vpop.f32.mrb[0].mxu0
    %v1771 = vpop.f32.mrb[0].mxu0
    %v1772 = vpop.f32.mrb[0].mxu0
    %1773 = vdwg.mxu0
    %1774 = vrot.lane.b32.xlu0 %v1603, 64
    %v1775 = vpop.permute.xlu0 %1774
    %v1777 = vsel %vm295, %v1725, 0
    %v1780 = vsel %vm156, %v1775, 0
    %1782 = vmatprep.subr.bf16.mxu0 0
    %1783 = vmatpush1.bf16.msra.mxu0 %v1780
    %1784 = vmatprep.subr.bf16.mxu0 0
    %1785 = vmatpush1.bf16.msra.mxu0 0
    %1786 = vmatprep.subr.bf16.mxu0 0
    %1787 = vmatpush1.bf16.msra.mxu0 0
    %1788 = vmatprep.subr.bf16.mxu0 0
    %1789 = vmatpush1.bf16.msra.mxu0 0
    %1790 = vmatprep.subr.bf16.mxu0 0
    %1791 = vmatpush1.bf16.msra.mxu0 0
    %1792 = vmatprep.subr.bf16.mxu0 0
    %1793 = vmatpush1.bf16.msra.mxu0 0
    %1794 = vmatprep.subr.bf16.mxu0 0
    %1795 = vmatpush1.bf16.msra.mxu0 0
    %1796 = vmatprep.subr.bf16.mxu0 0
    %1797 = vmatpush1.bf16.msra.mxu0 0
    %1798 = vmatprep.subr.bf16.mxu0 0
    %1799 = vmatpush1.bf16.msra.mxu0 0
    %1800 = vmatprep.subr.bf16.mxu0 0
    %1801 = vmatpush1.bf16.msra.mxu0 0
    %1802 = vmatprep.subr.bf16.mxu0 0
    %1803 = vmatpush1.bf16.msra.mxu0 0
    %1804 = vmatprep.subr.bf16.mxu0 0
    %1805 = vmatpush1.bf16.msra.mxu0 0
    %1806 = vmatprep.subr.bf16.mxu0 0
    %1807 = vmatpush1.bf16.msra.mxu0 0
    %1808 = vmatprep.subr.bf16.mxu0 0
    %1809 = vmatpush1.bf16.msra.mxu0 0
    %1810 = vmatprep.subr.bf16.mxu0 0
    %1811 = vmatpush1.bf16.msra.mxu0 0
    %1812 = vmatprep.subr.bf16.mxu0 0
    %1813 = vmatpush1.bf16.msra.mxu0 0
    %1814 = vmatprep.mubr.bf16.mxu0 0
    %1815 = vmatmul.mubr.bf16.gmra.mrb[0].mxu0 %v1777
    %v1816 = vpop.f32.mrb[0].mxu0
    %v1817 = vadd.f32 0.0, %v1816
    %v1818 = vpop.f32.mrb[0].mxu0
    %v1819 = vpop.f32.mrb[0].mxu0
    %v1820 = vpop.f32.mrb[0].mxu0
    %1821 = vdwg.mxu0
    %1823 = vrot.lane.b32.xlu0 %v1600, 120
    %v1824 = vpop.permute.xlu0 %1823
    %1825 = vrot.lane.b32.xlu0 %v1602, 88
    %v1826 = vpop.permute.xlu0 %1825
    %v1828 = vsel %vm295, %v1824, 0
    %v1831 = vsel %vm295, %v1826, 0
    %1833 = vmatprep.subr.bf16.mxu0 0
    %1834 = vmatpush1.bf16.xpose.msra.mxu0 %v1831
    %1835 = vmatprep.subr.bf16.mxu0 0
    %1836 = vmatpush1.bf16.xpose.msra.mxu0 0
    %1837 = vmatprep.subr.bf16.mxu0 0
    %1838 = vmatpush1.bf16.xpose.msra.mxu0 0
    %1839 = vmatprep.subr.bf16.mxu0 0
    %1840 = vmatpush1.bf16.xpose.msra.mxu0 0
    %1841 = vmatprep.subr.bf16.mxu0 0
    %1842 = vmatpush1.bf16.xpose.msra.mxu0 0
    %1843 = vmatprep.subr.bf16.mxu0 0
    %1844 = vmatpush1.bf16.xpose.msra.mxu0 0
    %1845 = vmatprep.subr.bf16.mxu0 0
    %1846 = vmatpush1.bf16.xpose.msra.mxu0 0
    %1847 = vmatprep.subr.bf16.mxu0 0
    %1848 = vmatpush1.bf16.xpose.msra.mxu0 0
    %1849 = vmatprep.subr.bf16.mxu0 0
    %1850 = vmatpush1.bf16.xpose.msra.mxu0 0
    %1851 = vmatprep.subr.bf16.mxu0 0
    %1852 = vmatpush1.bf16.xpose.msra.mxu0 0
    %1853 = vmatprep.subr.bf16.mxu0 0
    %1854 = vmatpush1.bf16.xpose.msra.mxu0 0
    %1855 = vmatprep.subr.bf16.mxu0 0
    %1856 = vmatpush1.bf16.xpose.msra.mxu0 0
    %1857 = vmatprep.subr.bf16.mxu0 0
    %1858 = vmatpush1.bf16.xpose.msra.mxu0 0
    %1859 = vmatprep.subr.bf16.mxu0 0
    %1860 = vmatpush1.bf16.xpose.msra.mxu0 0
    %1861 = vmatprep.subr.bf16.mxu0 0
    %1862 = vmatpush1.bf16.xpose.msra.mxu0 0
    %1863 = vmatprep.subr.bf16.mxu0 0
    %1864 = vmatpush1.bf16.xpose.msra.mxu0 0
    %1865 = vmatprep.mubr.bf16.mxu0 0
    %1866 = vmatmul.mubr.bf16.gmra.mrb[0].mxu0 %v1828
    %v1867 = vpop.f32.mrb[0].mxu0
    %v1868 = vadd.f32 0.0, %v1867
    %v1869 = vpop.f32.mrb[0].mxu0
    %v1870 = vpop.f32.mrb[0].mxu0
    %v1871 = vpop.f32.mrb[0].mxu0
    %1872 = vdwg.mxu0
    %1874 = vrot.lane.b32.xlu0 %v1601, 120
    %v1875 = vpop.permute.xlu0 %1874
    %1876 = vrot.lane.b32.xlu0 %v1603, 88
    %v1877 = vpop.permute.xlu0 %1876
    %v1879 = vsel %vm295, %v1875, 0
    %v1882 = vsel %vm295, %v1877, 0
    %1884 = vmatprep.subr.bf16.mxu0 0
    %1885 = vmatpush1.bf16.xpose.msra.mxu0 %v1882
    %1886 = vmatprep.subr.bf16.mxu0 0
    %1887 = vmatpush1.bf16.xpose.msra.mxu0 0
    %1888 = vmatprep.subr.bf16.mxu0 0
    %1889 = vmatpush1.bf16.xpose.msra.mxu0 0
    %1890 = vmatprep.subr.bf16.mxu0 0
    %1891 = vmatpush1.bf16.xpose.msra.mxu0 0
    %1892 = vmatprep.subr.bf16.mxu0 0
    %1893 = vmatpush1.bf16.xpose.msra.mxu0 0
    %1894 = vmatprep.subr.bf16.mxu0 0
    %1895 = vmatpush1.bf16.xpose.msra.mxu0 0
    %1896 = vmatprep.subr.bf16.mxu0 0
    %1897 = vmatpush1.bf16.xpose.msra.mxu0 0
    %1898 = vmatprep.subr.bf16.mxu0 0
    %1899 = vmatpush1.bf16.xpose.msra.mxu0 0
    %1900 = vmatprep.subr.bf16.mxu0 0
    %1901 = vmatpush1.bf16.xpose.msra.mxu0 0
    %1902 = vmatprep.subr.bf16.mxu0 0
    %1903 = vmatpush1.bf16.xpose.msra.mxu0 0
    %1904 = vmatprep.subr.bf16.mxu0 0
    %1905 = vmatpush1.bf16.xpose.msra.mxu0 0
    %1906 = vmatprep.subr.bf16.mxu0 0
    %1907 = vmatpush1.bf16.xpose.msra.mxu0 0
    %1908 = vmatprep.subr.bf16.mxu0 0
    %1909 = vmatpush1.bf16.xpose.msra.mxu0 0
    %1910 = vmatprep.subr.bf16.mxu0 0
    %1911 = vmatpush1.bf16.xpose.msra.mxu0 0
    %1912 = vmatprep.subr.bf16.mxu0 0
    %1913 = vmatpush1.bf16.xpose.msra.mxu0 0
    %1914 = vmatprep.subr.bf16.mxu0 0
    %1915 = vmatpush1.bf16.xpose.msra.mxu0 0
    %1916 = vmatprep.mubr.bf16.mxu0 0
    %1917 = vmatmul.mubr.bf16.gmra.mrb[0].mxu0 %v1879
    %v1918 = vpop.f32.mrb[0].mxu0
    %v1919 = vadd.f32 0.0, %v1918
    %v1920 = vpop.f32.mrb[0].mxu0
    %v1921 = vpop.f32.mrb[0].mxu0
    %v1922 = vpop.f32.mrb[0].mxu0
    %1923 = vdwg.mxu0
    %v1924 = vsel %vm295, %v1868, -inf
    %1925 = vmax.xlane.f32.xlu0 %v1924
    %v1926 = vpop.xlane.xlu0 %1925
    %v1927 = vsel %vm295, %v1919, -inf
    %1928 = vmax.xlane.f32.xlu0 %v1927
    %v1929 = vpop.xlane.xlu0 %1928
    %v1930 = vsub.f32 %v1868, %v1926
    %v1931 = vsub.f32 %v1919, %v1929
    %v1932 = vmul.f32 %v1930, 1.442695
    %v1933 = vpow.pop %v1932
    %v1934 = vmul.f32 %v1931, 1.442695
    %v1935 = vpow.pop %v1934
    %v1936 = vsel %vm295, %v1933, 0.0
    %1937 = vadd.xlane.f32.xlu0 %v1936
    %v1938 = vpop.xlane.xlu0 %1937
    %v1939 = vsel %vm295, %v1935, 0.0
    %1940 = vadd.xlane.f32.xlu0 %v1939
    %v1941 = vpop.xlane.xlu0 %1940
    %v1942 = vrcp.pop %v1938
    %v1943 = vrcp.pop %v1941
    %v1944 = vmul.f32 %v1933, %v1942
    %v1945 = vmul.f32 %v1935, %v1943
    %v1946 = vpack.c.bf16 %v1944, %v1944
    %v1947 = vpack.c.bf16 %v1945, %v1945
    %1948 = vrot.lane.b32.xlu0 %v1602, 56
    %v1949 = vpop.permute.xlu0 %1948
    %v1951 = vsel %vm295, %v1946, 0
    %v1954 = vsel %vm156, %v1949, 0
    %1956 = vmatprep.subr.bf16.mxu0 0
    %1957 = vmatpush1.bf16.msra.mxu0 %v1954
    %1958 = vmatprep.subr.bf16.mxu0 0
    %1959 = vmatpush1.bf16.msra.mxu0 0
    %1960 = vmatprep.subr.bf16.mxu0 0
    %1961 = vmatpush1.bf16.msra.mxu0 0
    %1962 = vmatprep.subr.bf16.mxu0 0
    %1963 = vmatpush1.bf16.msra.mxu0 0
    %1964 = vmatprep.subr.bf16.mxu0 0
    %1965 = vmatpush1.bf16.msra.mxu0 0
    %1966 = vmatprep.subr.bf16.mxu0 0
    %1967 = vmatpush1.bf16.msra.mxu0 0
    %1968 = vmatprep.subr.bf16.mxu0 0
    %1969 = vmatpush1.bf16.msra.mxu0 0
    %1970 = vmatprep.subr.bf16.mxu0 0
    %1971 = vmatpush1.bf16.msra.mxu0 0
    %1972 = vmatprep.subr.bf16.mxu0 0
    %1973 = vmatpush1.bf16.msra.mxu0 0
    %1974 = vmatprep.subr.bf16.mxu0 0
    %1975 = vmatpush1.bf16.msra.mxu0 0
    %1976 = vmatprep.subr.bf16.mxu0 0
    %1977 = vmatpush1.bf16.msra.mxu0 0
    %1978 = vmatprep.subr.bf16.mxu0 0
    %1979 = vmatpush1.bf16.msra.mxu0 0
    %1980 = vmatprep.subr.bf16.mxu0 0
    %1981 = vmatpush1.bf16.msra.mxu0 0
    %1982 = vmatprep.subr.bf16.mxu0 0
    %1983 = vmatpush1.bf16.msra.mxu0 0
    %1984 = vmatprep.subr.bf16.mxu0 0
    %1985 = vmatpush1.bf16.msra.mxu0 0
    %1986 = vmatprep.subr.bf16.mxu0 0
    %1987 = vmatpush1.bf16.msra.mxu0 0
    %1988 = vmatprep.mubr.bf16.mxu0 0
    %1989 = vmatmul.mubr.bf16.gmra.mrb[0].mxu0 %v1951
    %v1990 = vpop.f32.mrb[0].mxu0
    %v1991 = vadd.f32 0.0, %v1990
    %v1992 = vpop.f32.mrb[0].mxu0
    %v1993 = vpop.f32.mrb[0].mxu0
    %v1994 = vpop.f32.mrb[0].mxu0
    %1995 = vdwg.mxu0
    %1996 = vrot.lane.b32.xlu0 %v1603, 56
    %v1997 = vpop.permute.xlu0 %1996
    %v1999 = vsel %vm295, %v1947, 0
    %v2002 = vsel %vm156, %v1997, 0
    %2004 = vmatprep.subr.bf16.mxu0 0
    %2005 = vmatpush1.bf16.msra.mxu0 %v2002
    %2006 = vmatprep.subr.bf16.mxu0 0
    %2007 = vmatpush1.bf16.msra.mxu0 0
    %2008 = vmatprep.subr.bf16.mxu0 0
    %2009 = vmatpush1.bf16.msra.mxu0 0
    %2010 = vmatprep.subr.bf16.mxu0 0
    %2011 = vmatpush1.bf16.msra.mxu0 0
    %2012 = vmatprep.subr.bf16.mxu0 0
    %2013 = vmatpush1.bf16.msra.mxu0 0
    %2014 = vmatprep.subr.bf16.mxu0 0
    %2015 = vmatpush1.bf16.msra.mxu0 0
    %2016 = vmatprep.subr.bf16.mxu0 0
    %2017 = vmatpush1.bf16.msra.mxu0 0
    %2018 = vmatprep.subr.bf16.mxu0 0
    %2019 = vmatpush1.bf16.msra.mxu0 0
    %2020 = vmatprep.subr.bf16.mxu0 0
    %2021 = vmatpush1.bf16.msra.mxu0 0
    %2022 = vmatprep.subr.bf16.mxu0 0
    %2023 = vmatpush1.bf16.msra.mxu0 0
    %2024 = vmatprep.subr.bf16.mxu0 0
    %2025 = vmatpush1.bf16.msra.mxu0 0
    %2026 = vmatprep.subr.bf16.mxu0 0
    %2027 = vmatpush1.bf16.msra.mxu0 0
    %2028 = vmatprep.subr.bf16.mxu0 0
    %2029 = vmatpush1.bf16.msra.mxu0 0
    %2030 = vmatprep.subr.bf16.mxu0 0
    %2031 = vmatpush1.bf16.msra.mxu0 0
    %2032 = vmatprep.subr.bf16.mxu0 0
    %2033 = vmatpush1.bf16.msra.mxu0 0
    %2034 = vmatprep.subr.bf16.mxu0 0
    %2035 = vmatpush1.bf16.msra.mxu0 0
    %2036 = vmatprep.mubr.bf16.mxu0 0
    %2037 = vmatmul.mubr.bf16.gmra.mrb[0].mxu0 %v1999
    %v2038 = vpop.f32.mrb[0].mxu0
    %v2039 = vadd.f32 0.0, %v2038
    %v2040 = vpop.f32.mrb[0].mxu0
    %v2041 = vpop.f32.mrb[0].mxu0
    %v2042 = vpop.f32.mrb[0].mxu0
    %2043 = vdwg.mxu0
    %2044 = vrot.lane.b32.xlu0 %v1600, 112
    %v2045 = vpop.permute.xlu0 %2044
    %2046 = vrot.lane.b32.xlu0 %v1602, 80
    %v2047 = vpop.permute.xlu0 %2046
    %v2049 = vsel %vm295, %v2045, 0
    %v2052 = vsel %vm295, %v2047, 0
    %2054 = vmatprep.subr.bf16.mxu0 0
    %2055 = vmatpush1.bf16.xpose.msra.mxu0 %v2052
    %2056 = vmatprep.subr.bf16.mxu0 0
    %2057 = vmatpush1.bf16.xpose.msra.mxu0 0
    %2058 = vmatprep.subr.bf16.mxu0 0
    %2059 = vmatpush1.bf16.xpose.msra.mxu0 0
    %2060 = vmatprep.subr.bf16.mxu0 0
    %2061 = vmatpush1.bf16.xpose.msra.mxu0 0
    %2062 = vmatprep.subr.bf16.mxu0 0
    %2063 = vmatpush1.bf16.xpose.msra.mxu0 0
    %2064 = vmatprep.subr.bf16.mxu0 0
    %2065 = vmatpush1.bf16.xpose.msra.mxu0 0
    %2066 = vmatprep.subr.bf16.mxu0 0
    %2067 = vmatpush1.bf16.xpose.msra.mxu0 0
    %2068 = vmatprep.subr.bf16.mxu0 0
    %2069 = vmatpush1.bf16.xpose.msra.mxu0 0
    %2070 = vmatprep.subr.bf16.mxu0 0
    %2071 = vmatpush1.bf16.xpose.msra.mxu0 0
    %2072 = vmatprep.subr.bf16.mxu0 0
    %2073 = vmatpush1.bf16.xpose.msra.mxu0 0
    %2074 = vmatprep.subr.bf16.mxu0 0
    %2075 = vmatpush1.bf16.xpose.msra.mxu0 0
    %2076 = vmatprep.subr.bf16.mxu0 0
    %2077 = vmatpush1.bf16.xpose.msra.mxu0 0
    %2078 = vmatprep.subr.bf16.mxu0 0
    %2079 = vmatpush1.bf16.xpose.msra.mxu0 0
    %2080 = vmatprep.subr.bf16.mxu0 0
    %2081 = vmatpush1.bf16.xpose.msra.mxu0 0
    %2082 = vmatprep.subr.bf16.mxu0 0
    %2083 = vmatpush1.bf16.xpose.msra.mxu0 0
    %2084 = vmatprep.subr.bf16.mxu0 0
    %2085 = vmatpush1.bf16.xpose.msra.mxu0 0
    %2086 = vmatprep.mubr.bf16.mxu0 0
    %2087 = vmatmul.mubr.bf16.gmra.mrb[0].mxu0 %v2049
    %v2088 = vpop.f32.mrb[0].mxu0
    %v2089 = vadd.f32 0.0, %v2088
    %v2090 = vpop.f32.mrb[0].mxu0
    %v2091 = vpop.f32.mrb[0].mxu0
    %v2092 = vpop.f32.mrb[0].mxu0
    %2093 = vdwg.mxu0
    %2094 = vrot.lane.b32.xlu0 %v1601, 112
    %v2095 = vpop.permute.xlu0 %2094
    %2096 = vrot.lane.b32.xlu0 %v1603, 80
    %v2097 = vpop.permute.xlu0 %2096
    %v2099 = vsel %vm295, %v2095, 0
    %v2102 = vsel %vm295, %v2097, 0
    %2104 = vmatprep.subr.bf16.mxu0 0
    %2105 = vmatpush1.bf16.xpose.msra.mxu0 %v2102
    %2106 = vmatprep.subr.bf16.mxu0 0
    %2107 = vmatpush1.bf16.xpose.msra.mxu0 0
    %2108 = vmatprep.subr.bf16.mxu0 0
    %2109 = vmatpush1.bf16.xpose.msra.mxu0 0
    %2110 = vmatprep.subr.bf16.mxu0 0
    %2111 = vmatpush1.bf16.xpose.msra.mxu0 0
    %2112 = vmatprep.subr.bf16.mxu0 0
    %2113 = vmatpush1.bf16.xpose.msra.mxu0 0
    %2114 = vmatprep.subr.bf16.mxu0 0
    %2115 = vmatpush1.bf16.xpose.msra.mxu0 0
    %2116 = vmatprep.subr.bf16.mxu0 0
    %2117 = vmatpush1.bf16.xpose.msra.mxu0 0
    %2118 = vmatprep.subr.bf16.mxu0 0
    %2119 = vmatpush1.bf16.xpose.msra.mxu0 0
    %2120 = vmatprep.subr.bf16.mxu0 0
    %2121 = vmatpush1.bf16.xpose.msra.mxu0 0
    %2122 = vmatprep.subr.bf16.mxu0 0
    %2123 = vmatpush1.bf16.xpose.msra.mxu0 0
    %2124 = vmatprep.subr.bf16.mxu0 0
    %2125 = vmatpush1.bf16.xpose.msra.mxu0 0
    %2126 = vmatprep.subr.bf16.mxu0 0
    %2127 = vmatpush1.bf16.xpose.msra.mxu0 0
    %2128 = vmatprep.subr.bf16.mxu0 0
    %2129 = vmatpush1.bf16.xpose.msra.mxu0 0
    %2130 = vmatprep.subr.bf16.mxu0 0
    %2131 = vmatpush1.bf16.xpose.msra.mxu0 0
    %2132 = vmatprep.subr.bf16.mxu0 0
    %2133 = vmatpush1.bf16.xpose.msra.mxu0 0
    %2134 = vmatprep.subr.bf16.mxu0 0
    %2135 = vmatpush1.bf16.xpose.msra.mxu0 0
    %2136 = vmatprep.mubr.bf16.mxu0 0
    %2137 = vmatmul.mubr.bf16.gmra.mrb[0].mxu0 %v2099
    %v2138 = vpop.f32.mrb[0].mxu0
    %v2139 = vadd.f32 0.0, %v2138
    %v2140 = vpop.f32.mrb[0].mxu0
    %v2141 = vpop.f32.mrb[0].mxu0
    %v2142 = vpop.f32.mrb[0].mxu0
    %2143 = vdwg.mxu0
    %v2144 = vsel %vm295, %v2089, -inf
    %2145 = vmax.xlane.f32.xlu0 %v2144
    %v2146 = vpop.xlane.xlu0 %2145
    %v2147 = vsel %vm295, %v2139, -inf
    %2148 = vmax.xlane.f32.xlu0 %v2147
    %v2149 = vpop.xlane.xlu0 %2148
    %v2150 = vsub.f32 %v2089, %v2146
    %v2151 = vsub.f32 %v2139, %v2149
    %v2152 = vmul.f32 %v2150, 1.442695
    %v2153 = vpow.pop %v2152
    %v2154 = vmul.f32 %v2151, 1.442695
    %v2155 = vpow.pop %v2154
    %v2156 = vsel %vm295, %v2153, 0.0
    %2157 = vadd.xlane.f32.xlu0 %v2156
    %v2158 = vpop.xlane.xlu0 %2157
    %v2159 = vsel %vm295, %v2155, 0.0
    %2160 = vadd.xlane.f32.xlu0 %v2159
    %v2161 = vpop.xlane.xlu0 %2160
    %v2162 = vrcp.pop %v2158
    %v2163 = vrcp.pop %v2161
    %v2164 = vmul.f32 %v2153, %v2162
    %v2165 = vmul.f32 %v2155, %v2163
    %v2166 = vpack.c.bf16 %v2164, %v2164
    %v2167 = vpack.c.bf16 %v2165, %v2165
    %2168 = vrot.lane.b32.xlu0 %v1602, 48
    %v2169 = vpop.permute.xlu0 %2168
    %v2171 = vsel %vm295, %v2166, 0
    %v2174 = vsel %vm156, %v2169, 0
    %2176 = vmatprep.subr.bf16.mxu0 0
    %2177 = vmatpush1.bf16.msra.mxu0 %v2174
    %2178 = vmatprep.subr.bf16.mxu0 0
    %2179 = vmatpush1.bf16.msra.mxu0 0
    %2180 = vmatprep.subr.bf16.mxu0 0
    %2181 = vmatpush1.bf16.msra.mxu0 0
    %2182 = vmatprep.subr.bf16.mxu0 0
    %2183 = vmatpush1.bf16.msra.mxu0 0
    %2184 = vmatprep.subr.bf16.mxu0 0
    %2185 = vmatpush1.bf16.msra.mxu0 0
    %2186 = vmatprep.subr.bf16.mxu0 0
    %2187 = vmatpush1.bf16.msra.mxu0 0
    %2188 = vmatprep.subr.bf16.mxu0 0
    %2189 = vmatpush1.bf16.msra.mxu0 0
    %2190 = vmatprep.subr.bf16.mxu0 0
    %2191 = vmatpush1.bf16.msra.mxu0 0
    %2192 = vmatprep.subr.bf16.mxu0 0
    %2193 = vmatpush1.bf16.msra.mxu0 0
    %2194 = vmatprep.subr.bf16.mxu0 0
    %2195 = vmatpush1.bf16.msra.mxu0 0
    %2196 = vmatprep.subr.bf16.mxu0 0
    %2197 = vmatpush1.bf16.msra.mxu0 0
    %2198 = vmatprep.subr.bf16.mxu0 0
    %2199 = vmatpush1.bf16.msra.mxu0 0
    %2200 = vmatprep.subr.bf16.mxu0 0
    %2201 = vmatpush1.bf16.msra.mxu0 0
    %2202 = vmatprep.subr.bf16.mxu0 0
    %2203 = vmatpush1.bf16.msra.mxu0 0
    %2204 = vmatprep.subr.bf16.mxu0 0
    %2205 = vmatpush1.bf16.msra.mxu0 0
    %2206 = vmatprep.subr.bf16.mxu0 0
    %2207 = vmatpush1.bf16.msra.mxu0 0
    %2208 = vmatprep.mubr.bf16.mxu0 0
    %2209 = vmatmul.mubr.bf16.gmra.mrb[0].mxu0 %v2171
    %v2210 = vpop.f32.mrb[0].mxu0
    %v2211 = vadd.f32 0.0, %v2210
    %v2212 = vpop.f32.mrb[0].mxu0
    %v2213 = vpop.f32.mrb[0].mxu0
    %v2214 = vpop.f32.mrb[0].mxu0
    %2215 = vdwg.mxu0
    %2216 = vrot.lane.b32.xlu0 %v1603, 48
    %v2217 = vpop.permute.xlu0 %2216
    %v2219 = vsel %vm295, %v2167, 0
    %v2222 = vsel %vm156, %v2217, 0
    %2224 = vmatprep.subr.bf16.mxu0 0
    %2225 = vmatpush1.bf16.msra.mxu0 %v2222
    %2226 = vmatprep.subr.bf16.mxu0 0
    %2227 = vmatpush1.bf16.msra.mxu0 0
    %2228 = vmatprep.subr.bf16.mxu0 0
    %2229 = vmatpush1.bf16.msra.mxu0 0
    %2230 = vmatprep.subr.bf16.mxu0 0
    %2231 = vmatpush1.bf16.msra.mxu0 0
    %2232 = vmatprep.subr.bf16.mxu0 0
    %2233 = vmatpush1.bf16.msra.mxu0 0
    %2234 = vmatprep.subr.bf16.mxu0 0
    %2235 = vmatpush1.bf16.msra.mxu0 0
    %2236 = vmatprep.subr.bf16.mxu0 0
    %2237 = vmatpush1.bf16.msra.mxu0 0
    %2238 = vmatprep.subr.bf16.mxu0 0
    %2239 = vmatpush1.bf16.msra.mxu0 0
    %2240 = vmatprep.subr.bf16.mxu0 0
    %2241 = vmatpush1.bf16.msra.mxu0 0
    %2242 = vmatprep.subr.bf16.mxu0 0
    %2243 = vmatpush1.bf16.msra.mxu0 0
    %2244 = vmatprep.subr.bf16.mxu0 0
    %2245 = vmatpush1.bf16.msra.mxu0 0
    %2246 = vmatprep.subr.bf16.mxu0 0
    %2247 = vmatpush1.bf16.msra.mxu0 0
    %2248 = vmatprep.subr.bf16.mxu0 0
    %2249 = vmatpush1.bf16.msra.mxu0 0
    %2250 = vmatprep.subr.bf16.mxu0 0
    %2251 = vmatpush1.bf16.msra.mxu0 0
    %2252 = vmatprep.subr.bf16.mxu0 0
    %2253 = vmatpush1.bf16.msra.mxu0 0
    %2254 = vmatprep.subr.bf16.mxu0 0
    %2255 = vmatpush1.bf16.msra.mxu0 0
    %2256 = vmatprep.mubr.bf16.mxu0 0
    %2257 = vmatmul.mubr.bf16.gmra.mrb[0].mxu0 %v2219
    %v2258 = vpop.f32.mrb[0].mxu0
    %v2259 = vadd.f32 0.0, %v2258
    %v2260 = vpop.f32.mrb[0].mxu0
    %v2261 = vpop.f32.mrb[0].mxu0
    %v2262 = vpop.f32.mrb[0].mxu0
    %2263 = vdwg.mxu0
    %2264 = vrot.lane.b32.xlu0 %v1600, 104
    %v2265 = vpop.permute.xlu0 %2264
    %2266 = vrot.lane.b32.xlu0 %v1602, 72
    %v2267 = vpop.permute.xlu0 %2266
    %v2269 = vsel %vm295, %v2265, 0
    %v2272 = vsel %vm295, %v2267, 0
    %2274 = vmatprep.subr.bf16.mxu0 0
    %2275 = vmatpush1.bf16.xpose.msra.mxu0 %v2272
    %2276 = vmatprep.subr.bf16.mxu0 0
    %2277 = vmatpush1.bf16.xpose.msra.mxu0 0
    %2278 = vmatprep.subr.bf16.mxu0 0
    %2279 = vmatpush1.bf16.xpose.msra.mxu0 0
    %2280 = vmatprep.subr.bf16.mxu0 0
    %2281 = vmatpush1.bf16.xpose.msra.mxu0 0
    %2282 = vmatprep.subr.bf16.mxu0 0
    %2283 = vmatpush1.bf16.xpose.msra.mxu0 0
    %2284 = vmatprep.subr.bf16.mxu0 0
    %2285 = vmatpush1.bf16.xpose.msra.mxu0 0
    %2286 = vmatprep.subr.bf16.mxu0 0
    %2287 = vmatpush1.bf16.xpose.msra.mxu0 0
    %2288 = vmatprep.subr.bf16.mxu0 0
    %2289 = vmatpush1.bf16.xpose.msra.mxu0 0
    %2290 = vmatprep.subr.bf16.mxu0 0
    %2291 = vmatpush1.bf16.xpose.msra.mxu0 0
    %2292 = vmatprep.subr.bf16.mxu0 0
    %2293 = vmatpush1.bf16.xpose.msra.mxu0 0
    %2294 = vmatprep.subr.bf16.mxu0 0
    %2295 = vmatpush1.bf16.xpose.msra.mxu0 0
    %2296 = vmatprep.subr.bf16.mxu0 0
    %2297 = vmatpush1.bf16.xpose.msra.mxu0 0
    %2298 = vmatprep.subr.bf16.mxu0 0
    %2299 = vmatpush1.bf16.xpose.msra.mxu0 0
    %2300 = vmatprep.subr.bf16.mxu0 0
    %2301 = vmatpush1.bf16.xpose.msra.mxu0 0
    %2302 = vmatprep.subr.bf16.mxu0 0
    %2303 = vmatpush1.bf16.xpose.msra.mxu0 0
    %2304 = vmatprep.subr.bf16.mxu0 0
    %2305 = vmatpush1.bf16.xpose.msra.mxu0 0
    %2306 = vmatprep.mubr.bf16.mxu0 0
    %2307 = vmatmul.mubr.bf16.gmra.mrb[0].mxu0 %v2269
    %v2308 = vpop.f32.mrb[0].mxu0
    %v2309 = vadd.f32 0.0, %v2308
    %v2310 = vpop.f32.mrb[0].mxu0
    %v2311 = vpop.f32.mrb[0].mxu0
    %v2312 = vpop.f32.mrb[0].mxu0
    %2313 = vdwg.mxu0
    %2314 = vrot.lane.b32.xlu0 %v1601, 104
    %v2315 = vpop.permute.xlu0 %2314
    %2316 = vrot.lane.b32.xlu0 %v1603, 72
    %v2317 = vpop.permute.xlu0 %2316
    %v2319 = vsel %vm295, %v2315, 0
    %v2322 = vsel %vm295, %v2317, 0
    %2324 = vmatprep.subr.bf16.mxu0 0
    %2325 = vmatpush1.bf16.xpose.msra.mxu0 %v2322
    %2326 = vmatprep.subr.bf16.mxu0 0
    %2327 = vmatpush1.bf16.xpose.msra.mxu0 0
    %2328 = vmatprep.subr.bf16.mxu0 0
    %2329 = vmatpush1.bf16.xpose.msra.mxu0 0
    %2330 = vmatprep.subr.bf16.mxu0 0
    %2331 = vmatpush1.bf16.xpose.msra.mxu0 0
    %2332 = vmatprep.subr.bf16.mxu0 0
    %2333 = vmatpush1.bf16.xpose.msra.mxu0 0
    %2334 = vmatprep.subr.bf16.mxu0 0
    %2335 = vmatpush1.bf16.xpose.msra.mxu0 0
    %2336 = vmatprep.subr.bf16.mxu0 0
    %2337 = vmatpush1.bf16.xpose.msra.mxu0 0
    %2338 = vmatprep.subr.bf16.mxu0 0
    %2339 = vmatpush1.bf16.xpose.msra.mxu0 0
    %2340 = vmatprep.subr.bf16.mxu0 0
    %2341 = vmatpush1.bf16.xpose.msra.mxu0 0
    %2342 = vmatprep.subr.bf16.mxu0 0
    %2343 = vmatpush1.bf16.xpose.msra.mxu0 0
    %2344 = vmatprep.subr.bf16.mxu0 0
    %2345 = vmatpush1.bf16.xpose.msra.mxu0 0
    %2346 = vmatprep.subr.bf16.mxu0 0
    %2347 = vmatpush1.bf16.xpose.msra.mxu0 0
    %2348 = vmatprep.subr.bf16.mxu0 0
    %2349 = vmatpush1.bf16.xpose.msra.mxu0 0
    %2350 = vmatprep.subr.bf16.mxu0 0
    %2351 = vmatpush1.bf16.xpose.msra.mxu0 0
    %2352 = vmatprep.subr.bf16.mxu0 0
    %2353 = vmatpush1.bf16.xpose.msra.mxu0 0
    %2354 = vmatprep.subr.bf16.mxu0 0
    %2355 = vmatpush1.bf16.xpose.msra.mxu0 0
    %2356 = vmatprep.mubr.bf16.mxu0 0
    %2357 = vmatmul.mubr.bf16.gmra.mrb[0].mxu0 %v2319
    %v2358 = vpop.f32.mrb[0].mxu0
    %v2359 = vadd.f32 0.0, %v2358
    %v2360 = vpop.f32.mrb[0].mxu0
    %v2361 = vpop.f32.mrb[0].mxu0
    %v2362 = vpop.f32.mrb[0].mxu0
    %2363 = vdwg.mxu0
    %v2364 = vsel %vm295, %v2309, -inf
    %2365 = vmax.xlane.f32.xlu0 %v2364
    %v2366 = vpop.xlane.xlu0 %2365
    %v2367 = vsel %vm295, %v2359, -inf
    %2368 = vmax.xlane.f32.xlu0 %v2367
    %v2369 = vpop.xlane.xlu0 %2368
    %v2370 = vsub.f32 %v2309, %v2366
    %v2371 = vsub.f32 %v2359, %v2369
    %v2372 = vmul.f32 %v2370, 1.442695
    %v2373 = vpow.pop %v2372
    %v2374 = vmul.f32 %v2371, 1.442695
    %v2375 = vpow.pop %v2374
    %v2376 = vsel %vm295, %v2373, 0.0
    %2377 = vadd.xlane.f32.xlu0 %v2376
    %v2378 = vpop.xlane.xlu0 %2377
    %v2379 = vsel %vm295, %v2375, 0.0
    %2380 = vadd.xlane.f32.xlu0 %v2379
    %v2381 = vpop.xlane.xlu0 %2380
    %v2382 = vrcp.pop %v2378
    %v2383 = vrcp.pop %v2381
    %v2384 = vmul.f32 %v2373, %v2382
    %v2385 = vmul.f32 %v2375, %v2383
    %v2386 = vpack.c.bf16 %v2384, %v2384
    %v2387 = vpack.c.bf16 %v2385, %v2385
    %2388 = vrot.lane.b32.xlu0 %v1602, 40
    %v2389 = vpop.permute.xlu0 %2388
    %v2391 = vsel %vm295, %v2386, 0
    %v2394 = vsel %vm156, %v2389, 0
    %2396 = vmatprep.subr.bf16.mxu0 0
    %2397 = vmatpush1.bf16.msra.mxu0 %v2394
    %2398 = vmatprep.subr.bf16.mxu0 0
    %2399 = vmatpush1.bf16.msra.mxu0 0
    %2400 = vmatprep.subr.bf16.mxu0 0
    %2401 = vmatpush1.bf16.msra.mxu0 0
    %2402 = vmatprep.subr.bf16.mxu0 0
    %2403 = vmatpush1.bf16.msra.mxu0 0
    %2404 = vmatprep.subr.bf16.mxu0 0
    %2405 = vmatpush1.bf16.msra.mxu0 0
    %2406 = vmatprep.subr.bf16.mxu0 0
    %2407 = vmatpush1.bf16.msra.mxu0 0
    %2408 = vmatprep.subr.bf16.mxu0 0
    %2409 = vmatpush1.bf16.msra.mxu0 0
    %2410 = vmatprep.subr.bf16.mxu0 0
    %2411 = vmatpush1.bf16.msra.mxu0 0
    %2412 = vmatprep.subr.bf16.mxu0 0
    %2413 = vmatpush1.bf16.msra.mxu0 0
    %2414 = vmatprep.subr.bf16.mxu0 0
    %2415 = vmatpush1.bf16.msra.mxu0 0
    %2416 = vmatprep.subr.bf16.mxu0 0
    %2417 = vmatpush1.bf16.msra.mxu0 0
    %2418 = vmatprep.subr.bf16.mxu0 0
    %2419 = vmatpush1.bf16.msra.mxu0 0
    %2420 = vmatprep.subr.bf16.mxu0 0
    %2421 = vmatpush1.bf16.msra.mxu0 0
    %2422 = vmatprep.subr.bf16.mxu0 0
    %2423 = vmatpush1.bf16.msra.mxu0 0
    %2424 = vmatprep.subr.bf16.mxu0 0
    %2425 = vmatpush1.bf16.msra.mxu0 0
    %2426 = vmatprep.subr.bf16.mxu0 0
    %2427 = vmatpush1.bf16.msra.mxu0 0
    %2428 = vmatprep.mubr.bf16.mxu0 0
    %2429 = vmatmul.mubr.bf16.gmra.mrb[0].mxu0 %v2391
    %v2430 = vpop.f32.mrb[0].mxu0
    %v2431 = vadd.f32 0.0, %v2430
    %v2432 = vpop.f32.mrb[0].mxu0
    %v2433 = vpop.f32.mrb[0].mxu0
    %v2434 = vpop.f32.mrb[0].mxu0
    %2435 = vdwg.mxu0
    %2436 = vrot.lane.b32.xlu0 %v1603, 40
    %v2437 = vpop.permute.xlu0 %2436
    %v2439 = vsel %vm295, %v2387, 0
    %v2442 = vsel %vm156, %v2437, 0
    %2444 = vmatprep.subr.bf16.mxu0 0
    %2445 = vmatpush1.bf16.msra.mxu0 %v2442
    %2446 = vmatprep.subr.bf16.mxu0 0
    %2447 = vmatpush1.bf16.msra.mxu0 0
    %2448 = vmatprep.subr.bf16.mxu0 0
    %2449 = vmatpush1.bf16.msra.mxu0 0
    %2450 = vmatprep.subr.bf16.mxu0 0
    %2451 = vmatpush1.bf16.msra.mxu0 0
    %2452 = vmatprep.subr.bf16.mxu0 0
    %2453 = vmatpush1.bf16.msra.mxu0 0
    %2454 = vmatprep.subr.bf16.mxu0 0
    %2455 = vmatpush1.bf16.msra.mxu0 0
    %2456 = vmatprep.subr.bf16.mxu0 0
    %2457 = vmatpush1.bf16.msra.mxu0 0
    %2458 = vmatprep.subr.bf16.mxu0 0
    %2459 = vmatpush1.bf16.msra.mxu0 0
    %2460 = vmatprep.subr.bf16.mxu0 0
    %2461 = vmatpush1.bf16.msra.mxu0 0
    %2462 = vmatprep.subr.bf16.mxu0 0
    %2463 = vmatpush1.bf16.msra.mxu0 0
    %2464 = vmatprep.subr.bf16.mxu0 0
    %2465 = vmatpush1.bf16.msra.mxu0 0
    %2466 = vmatprep.subr.bf16.mxu0 0
    %2467 = vmatpush1.bf16.msra.mxu0 0
    %2468 = vmatprep.subr.bf16.mxu0 0
    %2469 = vmatpush1.bf16.msra.mxu0 0
    %2470 = vmatprep.subr.bf16.mxu0 0
    %2471 = vmatpush1.bf16.msra.mxu0 0
    %2472 = vmatprep.subr.bf16.mxu0 0
    %2473 = vmatpush1.bf16.msra.mxu0 0
    %2474 = vmatprep.subr.bf16.mxu0 0
    %2475 = vmatpush1.bf16.msra.mxu0 0
    %2476 = vmatprep.mubr.bf16.mxu0 0
    %2477 = vmatmul.mubr.bf16.gmra.mrb[0].mxu0 %v2439
    %v2478 = vpop.f32.mrb[0].mxu0
    %v2479 = vadd.f32 0.0, %v2478
    %v2480 = vpop.f32.mrb[0].mxu0
    %v2481 = vpop.f32.mrb[0].mxu0
    %v2482 = vpop.f32.mrb[0].mxu0
    %2483 = vdwg.mxu0
    %2486 = vrot.lane.b32.xlu0 %v1991, 8
    %v2487 = vpop.permute.xlu0 %2486
    %2488 = vrot.lane.b32.xlu0 %v2039, 8
    %v2489 = vpop.permute.xlu0 %2488
    %2494 = vrot.lane.b32.xlu0 %v2211, 16
    %v2495 = vpop.permute.xlu0 %2494
    %2496 = vrot.lane.b32.xlu0 %v2259, 16
    %v2497 = vpop.permute.xlu0 %2496
    %2502 = vrot.lane.b32.xlu0 %v2431, 24
    %v2503 = vpop.permute.xlu0 %2502
    %2504 = vrot.lane.b32.xlu0 %v2479, 24
    %v2505 = vpop.permute.xlu0 %2504
    %v2508 = vsel %vm295, %v1769, %v2487
    %v2509 = vsel %vm295, %v1817, %v2489
    %v2510 = vsel %vm1199, %v2508, %v2495
    %v2511 = vsel %vm1199, %v2509, %v2497
    %v2512 = vsel %vm1202, %v2510, %v2503
    %v2513 = vsel %vm1202, %v2511, %v2505
    %v2514 = vpack.c.bf16 %v2513, %v2512
    %s2515 = scalar_lea.vmem %s6, 16
    %v2516 = vld [vmem:[%s2515] sm:$0xf]
    %v2517 = vld [vmem:[%s2515 + $0x4] sm:$0xf]
    %v2518 = vld [vmem:[%s2515 + $0x8] sm:$0xf]
    %v2519 = vld [vmem:[%s2515 + $0xc] sm:$0xf]
    %v2521 = vlaneseq
    %v2522 = vshrl.u32 %v2521, 7
    %v2523 = vsub.s32 0, %v2522
    %v2524 = vrot.slane %v1517, %v2523
    %v2530 = vunpack.c.l.b16 %v2516
    %v2531 = vunpack.c.l.b16 %v2517
    %v2532 = vunpack.c.l.b16 %v2518
    %v2533 = vunpack.c.l.b16 %v2519
    %v2534 = vpack.c.b16 %v2531, %v2530
    %v2535 = vpack.c.b16 %v2533, %v2532
    %v2539 = vsel %vm241, %v2514, 0
    %2541 = vmatprep.subr.bf16.mxu0 0
    %2542 = vmatpush1.bf16.msra.mxu0 %v2534
    %2543 = vmatprep.subr.bf16.mxu0 0
    %2544 = vmatpush1.bf16.msra.mxu0 %v2535
    %2545 = vmatprep.subr.bf16.mxu0 0
    %2546 = vmatpush1.bf16.msra.mxu0 0
    %2547 = vmatprep.subr.bf16.mxu0 0
    %2548 = vmatpush1.bf16.msra.mxu0 0
    %2549 = vmatprep.subr.bf16.mxu0 0
    %2550 = vmatpush1.bf16.msra.mxu0 0
    %2551 = vmatprep.subr.bf16.mxu0 0
    %2552 = vmatpush1.bf16.msra.mxu0 0
    %2553 = vmatprep.subr.bf16.mxu0 0
    %2554 = vmatpush1.bf16.msra.mxu0 0
    %2555 = vmatprep.subr.bf16.mxu0 0
    %2556 = vmatpush1.bf16.msra.mxu0 0
    %2557 = vmatprep.subr.bf16.mxu0 0
    %2558 = vmatpush1.bf16.msra.mxu0 0
    %2559 = vmatprep.subr.bf16.mxu0 0
    %2560 = vmatpush1.bf16.msra.mxu0 0
    %2561 = vmatprep.subr.bf16.mxu0 0
    %2562 = vmatpush1.bf16.msra.mxu0 0
    %2563 = vmatprep.subr.bf16.mxu0 0
    %2564 = vmatpush1.bf16.msra.mxu0 0
    %2565 = vmatprep.subr.bf16.mxu0 0
    %2566 = vmatpush1.bf16.msra.mxu0 0
    %2567 = vmatprep.subr.bf16.mxu0 0
    %2568 = vmatpush1.bf16.msra.mxu0 0
    %2569 = vmatprep.subr.bf16.mxu0 0
    %2570 = vmatpush1.bf16.msra.mxu0 0
    %2571 = vmatprep.subr.bf16.mxu0 0
    %2572 = vmatpush1.bf16.msra.mxu0 0
    %2573 = vmatprep.mubr.bf16.mxu0 0
    %2574 = vmatmul.mubr.bf16.gmra.mrb[0].mxu0 %v2539
    %v2575 = vpop.f32.mrb[0].mxu0
    %v2576 = vadd.f32 %v2524, %v2575
    %v2577 = vpop.f32.mrb[0].mxu0
    %v2578 = vpop.f32.mrb[0].mxu0
    %v2579 = vadd.f32 %v2524, %v2578
    %v2580 = vpop.f32.mrb[0].mxu0
    %2581 = vdwg.mxu0
    %v2582 = vadd.f32 %v1512, %v2576
    %v2583 = vadd.f32 %v1513, %v2579
    %v2584 = vsel %vm241, %v2582, 0.0
    %2585 = vadd.xlane.f32.xlu0 %v2584
    %v2586 = vpop.xlane.xlu0 %2585
    %v2587 = vsel %vm241, %v2583, 0.0
    %2588 = vadd.xlane.f32.xlu0 %v2587
    %v2589 = vpop.xlane.xlu0 %2588
    %v2590 = vmul.f32 %v2586, %v1280
    %v2591 = vmul.f32 %v2589, %v1280
    %v2592 = vsub.f32 %v2582, %v2590
    %v2593 = vsub.f32 %v2583, %v2591
    %v2594 = vmul.f32 %v2592, %v2592
    %v2595 = vmul.f32 %v2593, %v2593
    %v2596 = vsel %vm241, %v2594, 0.0
    %2597 = vadd.xlane.f32.xlu0 %v2596
    %v2598 = vpop.xlane.xlu0 %2597
    %v2599 = vsel %vm241, %v2595, 0.0
    %2600 = vadd.xlane.f32.xlu0 %v2599
    %v2601 = vpop.xlane.xlu0 %2600
    %v2602 = vmul.f32 %v2598, %v1280
    %v2603 = vmul.f32 %v2601, %v1280
    %v2604 = vadd.f32 %v2602, 1e-05
    %v2605 = vadd.f32 %v2603, 1e-05
    %v2606 = vrsqrt.pop %v2604
    %v2607 = vrsqrt.pop %v2605
    %v2608 = vmul.f32 %v2592, %v2606
    %v2609 = vmul.f32 %v2593, %v2607
    %v2611 = vlaneseq
    %v2612 = vshrl.u32 %v2611, 7
    %v2613 = vsub.s32 0, %v2612
    %v2614 = vrot.slane %v1523, %v2613
    %v2616 = vmul.f32 %v2608, %v2614
    %v2617 = vmul.f32 %v2609, %v2614
    %v2619 = vlaneseq
    %v2620 = vshrl.u32 %v2619, 7
    %v2621 = vsub.s32 0, %v2620
    %v2622 = vrot.slane %v1525, %v2621
    %v2624 = vadd.f32 %v2616, %v2622
    %v2625 = vadd.f32 %v2617, %v2622
    %v2626 = vpack.c.bf16 %v2625, %v2624
    %s2627 = scalar_lea.vmem %s8, 16
    %v2628 = vld [vmem:[%s2627] sm:$0xf]
    %v2629 = vld [vmem:[%s2627 + $0x4] sm:$0xf]
    %v2630 = vld [vmem:[%s2627 + $0x8] sm:$0xf]
    %v2631 = vld [vmem:[%s2627 + $0xc] sm:$0xf]
    %v2633 = vlaneseq
    %v2634 = vshrl.u32 %v2633, 7
    %v2635 = vsub.s32 0, %v2634
    %v2636 = vrot.slane %v1519, %v2635
    %v2642 = vunpack.c.l.b16 %v2628
    %v2643 = vunpack.c.l.b16 %v2629
    %v2644 = vunpack.c.l.b16 %v2630
    %v2645 = vunpack.c.l.b16 %v2631
    %v2646 = vpack.c.b16 %v2643, %v2642
    %v2647 = vpack.c.b16 %v2645, %v2644
    %v2651 = vsel %vm241, %v2626, 0
    %2653 = vmatprep.subr.bf16.mxu0 0
    %2654 = vmatpush1.bf16.msra.mxu0 %v2646
    %2655 = vmatprep.subr.bf16.mxu0 0
    %2656 = vmatpush1.bf16.msra.mxu0 %v2647
    %2657 = vmatprep.subr.bf16.mxu0 0
    %2658 = vmatpush1.bf16.msra.mxu0 0
    %2659 = vmatprep.subr.bf16.mxu0 0
    %2660 = vmatpush1.bf16.msra.mxu0 0
    %2661 = vmatprep.subr.bf16.mxu0 0
    %2662 = vmatpush1.bf16.msra.mxu0 0
    %2663 = vmatprep.subr.bf16.mxu0 0
    %2664 = vmatpush1.bf16.msra.mxu0 0
    %2665 = vmatprep.subr.bf16.mxu0 0
    %2666 = vmatpush1.bf16.msra.mxu0 0
    %2667 = vmatprep.subr.bf16.mxu0 0
    %2668 = vmatpush1.bf16.msra.mxu0 0
    %2669 = vmatprep.subr.bf16.mxu0 0
    %2670 = vmatpush1.bf16.msra.mxu0 0
    %2671 = vmatprep.subr.bf16.mxu0 0
    %2672 = vmatpush1.bf16.msra.mxu0 0
    %2673 = vmatprep.subr.bf16.mxu0 0
    %2674 = vmatpush1.bf16.msra.mxu0 0
    %2675 = vmatprep.subr.bf16.mxu0 0
    %2676 = vmatpush1.bf16.msra.mxu0 0
    %2677 = vmatprep.subr.bf16.mxu0 0
    %2678 = vmatpush1.bf16.msra.mxu0 0
    %2679 = vmatprep.subr.bf16.mxu0 0
    %2680 = vmatpush1.bf16.msra.mxu0 0
    %2681 = vmatprep.subr.bf16.mxu0 0
    %2682 = vmatpush1.bf16.msra.mxu0 0
    %2683 = vmatprep.subr.bf16.mxu0 0
    %2684 = vmatpush1.bf16.msra.mxu0 0
    %2685 = vmatprep.mubr.bf16.mxu0 0
    %2686 = vmatmul.mubr.bf16.gmra.mrb[0].mxu0 %v2651
    %v2687 = vpop.f32.mrb[0].mxu0
    %v2688 = vadd.f32 %v2636, %v2687
    %v2689 = vpop.f32.mrb[0].mxu0
    %v2690 = vpop.f32.mrb[0].mxu0
    %v2691 = vadd.f32 %v2636, %v2690
    %v2692 = vpop.f32.mrb[0].mxu0
    %2693 = vdwg.mxu0
    %v2694 = vmax.f32 %v2688, 0.0
    %v2695 = vmax.f32 %v2691, 0.0
    %v2696 = vpack.c.bf16 %v2695, %v2694
    %s2697 = scalar_lea.vmem %s10, 32
    %v2698 = vld [vmem:[%s2697] sm:$0xf]
    %v2699 = vld [vmem:[%s2697 + $0x4] sm:$0xf]
    %v2700 = vld [vmem:[%s2697 + $0x8] sm:$0xf]
    %v2701 = vld [vmem:[%s2697 + $0xc] sm:$0xf]
    %v2702 = vld [vmem:[%s2697 + $0x10] sm:$0xf]
    %v2703 = vld [vmem:[%s2697 + $0x14] sm:$0xf]
    %v2704 = vld [vmem:[%s2697 + $0x18] sm:$0xf]
    %v2705 = vld [vmem:[%s2697 + $0x1c] sm:$0xf]
    %v2707 = vlaneseq
    %v2708 = vshrl.u32 %v2707, 7
    %v2709 = vsub.s32 0, %v2708
    %v2710 = vrot.slane %v1521, %v2709
    %v2720 = vunpack.c.l.b16 %v2698
    %v2721 = vunpack.c.l.b16 %v2699
    %v2722 = vunpack.c.l.b16 %v2700
    %v2723 = vunpack.c.l.b16 %v2701
    %v2724 = vunpack.c.l.b16 %v2702
    %v2725 = vunpack.c.l.b16 %v2703
    %v2726 = vunpack.c.l.b16 %v2704
    %v2727 = vunpack.c.l.b16 %v2705
    %v2728 = vpack.c.b16 %v2721, %v2720
    %v2729 = vpack.c.b16 %v2723, %v2722
    %v2730 = vpack.c.b16 %v2725, %v2724
    %v2731 = vpack.c.b16 %v2727, %v2726
    %v2737 = vsel %vm1425, %v2696, 0
    %2739 = vmatprep.subr.bf16.mxu0 0
    %2740 = vmatpush1.bf16.msra.mxu0 %v2728
    %2741 = vmatprep.subr.bf16.mxu0 0
    %2742 = vmatpush1.bf16.msra.mxu0 %v2729
    %2743 = vmatprep.subr.bf16.mxu0 0
    %2744 = vmatpush1.bf16.msra.mxu0 %v2730
    %2745 = vmatprep.subr.bf16.mxu0 0
    %2746 = vmatpush1.bf16.msra.mxu0 %v2731
    %2747 = vmatprep.subr.bf16.mxu0 0
    %2748 = vmatpush1.bf16.msra.mxu0 0
    %2749 = vmatprep.subr.bf16.mxu0 0
    %2750 = vmatpush1.bf16.msra.mxu0 0
    %2751 = vmatprep.subr.bf16.mxu0 0
    %2752 = vmatpush1.bf16.msra.mxu0 0
    %2753 = vmatprep.subr.bf16.mxu0 0
    %2754 = vmatpush1.bf16.msra.mxu0 0
    %2755 = vmatprep.subr.bf16.mxu0 0
    %2756 = vmatpush1.bf16.msra.mxu0 0
    %2757 = vmatprep.subr.bf16.mxu0 0
    %2758 = vmatpush1.bf16.msra.mxu0 0
    %2759 = vmatprep.subr.bf16.mxu0 0
    %2760 = vmatpush1.bf16.msra.mxu0 0
    %2761 = vmatprep.subr.bf16.mxu0 0
    %2762 = vmatpush1.bf16.msra.mxu0 0
    %2763 = vmatprep.subr.bf16.mxu0 0
    %2764 = vmatpush1.bf16.msra.mxu0 0
    %2765 = vmatprep.subr.bf16.mxu0 0
    %2766 = vmatpush1.bf16.msra.mxu0 0
    %2767 = vmatprep.subr.bf16.mxu0 0
    %2768 = vmatpush1.bf16.msra.mxu0 0
    %2769 = vmatprep.subr.bf16.mxu0 0
    %2770 = vmatpush1.bf16.msra.mxu0 0
    %2771 = vmatprep.mubr.bf16.mxu0 0
    %2772 = vmatmul.mubr.bf16.gmra.mrb[0].mxu0 %v2737
    %v2773 = vpop.f32.mrb[0].mxu0
    %v2774 = vadd.f32 %v2710, %v2773
    %v2775 = vpop.f32.mrb[0].mxu0
    %v2776 = vpop.f32.mrb[0].mxu0
    %v2777 = vadd.f32 %v2710, %v2776
    %v2778 = vpop.f32.mrb[0].mxu0
    %2779 = vdwg.mxu0
    %v2780 = vadd.f32 %v2624, %v2774
    %v2781 = vadd.f32 %v2625, %v2777
    %v2782 = vsel %vm241, %v2780, 0.0
    %2783 = vadd.xlane.f32.xlu0 %v2782
    %v2784 = vpop.xlane.xlu0 %2783
    %v2785 = vsel %vm241, %v2781, 0.0
    %2786 = vadd.xlane.f32.xlu0 %v2785
    %v2787 = vpop.xlane.xlu0 %2786
    %v2788 = vmul.f32 %v2784, %v1280
    %v2789 = vmul.f32 %v2787, %v1280
    %v2790 = vsub.f32 %v2780, %v2788
    %v2791 = vsub.f32 %v2781, %v2789
    %v2792 = vmul.f32 %v2790, %v2790
    %v2793 = vmul.f32 %v2791, %v2791
    %v2794 = vsel %vm241, %v2792, 0.0
    %2795 = vadd.xlane.f32.xlu0 %v2794
    %v2796 = vpop.xlane.xlu0 %2795
    %v2797 = vsel %vm241, %v2793, 0.0
    %2798 = vadd.xlane.f32.xlu0 %v2797
    %v2799 = vpop.xlane.xlu0 %2798
    %v2800 = vmul.f32 %v2796, %v1280
    %v2801 = vmul.f32 %v2799, %v1280
    %v2802 = vadd.f32 %v2800, 1e-05
    %v2803 = vadd.f32 %v2801, 1e-05
    %v2804 = vrsqrt.pop %v2802
    %v2805 = vrsqrt.pop %v2803
    %v2806 = vmul.f32 %v2790, %v2804
    %v2807 = vmul.f32 %v2791, %v2805
    %v2809 = vlaneseq
    %v2810 = vshrl.u32 %v2809, 7
    %v2811 = vsub.s32 0, %v2810
    %v2812 = vrot.slane %v1527, %v2811
    %v2814 = vmul.f32 %v2806, %v2812
    %v2815 = vmul.f32 %v2807, %v2812
    %v2817 = vlaneseq
    %v2818 = vshrl.u32 %v2817, 7
    %v2819 = vsub.s32 0, %v2818
    %v2820 = vrot.slane %v1529, %v2819
    %v2822 = vadd.f32 %v2814, %v2820
    %v2823 = vadd.f32 %v2815, %v2820
    %v2824 = vld [vmem:[%s16] sm:$0x1]
    %v2825 = vld [vmem:[%s17] sm:$0x1]
    %v2826 = vsel %vm241, %v2822, 0.0
    %2827 = vadd.xlane.f32.xlu0 %v2826
    %v2828 = vpop.xlane.xlu0 %2827
    %v2829 = vsel %vm241, %v2823, 0.0
    %2830 = vadd.xlane.f32.xlu0 %v2829
    %v2831 = vpop.xlane.xlu0 %2830
    %v2832 = vmul.f32 %v2828, %v1280
    %v2833 = vmul.f32 %v2831, %v1280
    %v2834 = vsub.f32 %v2822, %v2832
    %v2835 = vsub.f32 %v2823, %v2833
    %v2836 = vmul.f32 %v2834, %v2834
    %v2837 = vmul.f32 %v2835, %v2835
    %v2838 = vsel %vm241, %v2836, 0.0
    %2839 = vadd.xlane.f32.xlu0 %v2838
    %v2840 = vpop.xlane.xlu0 %2839
    %v2841 = vsel %vm241, %v2837, 0.0
    %2842 = vadd.xlane.f32.xlu0 %v2841
    %v2843 = vpop.xlane.xlu0 %2842
    %v2844 = vmul.f32 %v2840, %v1280
    %v2845 = vmul.f32 %v2843, %v1280
    %v2846 = vadd.f32 %v2844, 1e-05
    %v2847 = vadd.f32 %v2845, 1e-05
    %v2848 = vrsqrt.pop %v2846
    %v2849 = vrsqrt.pop %v2847
    %v2850 = vmul.f32 %v2834, %v2848
    %v2851 = vmul.f32 %v2835, %v2849
    %v2853 = vlaneseq
    %v2854 = vshrl.u32 %v2853, 7
    %v2855 = vsub.s32 0, %v2854
    %v2856 = vrot.slane %v2824, %v2855
    %v2858 = vmul.f32 %v2850, %v2856
    %v2859 = vmul.f32 %v2851, %v2856
    %v2861 = vlaneseq
    %v2862 = vshrl.u32 %v2861, 7
    %v2863 = vsub.s32 0, %v2862
    %v2864 = vrot.slane %v2825, %v2863
    %v2866 = vadd.f32 %v2858, %v2864
    %v2867 = vadd.f32 %v2859, %v2864
    %v2868 = vpack.c.bf16 %v2867, %v2866
    %v2869 = vld [vmem:[%s18] sm:$0xf]
    %v2870 = vld [vmem:[%s18 + $0x4] sm:$0xf]
    %v2871 = vld [vmem:[%s18 + $0x8] sm:$0xf]
    %v2872 = vld [vmem:[%s18 + $0xc] sm:$0xf]
    %v2873 = vld [vmem:[%s19] sm:$0x1]
    %v2875 = vlaneseq
    %v2876 = vshrl.u32 %v2875, 7
    %v2877 = vsub.s32 0, %v2876
    %v2878 = vrot.slane %v2873, %v2877
    %v2884 = vunpack.c.l.b16 %v2869
    %v2885 = vunpack.c.l.b16 %v2870
    %v2886 = vunpack.c.l.b16 %v2871
    %v2887 = vunpack.c.l.b16 %v2872
    %v2888 = vpack.c.b16 %v2885, %v2884
    %v2889 = vpack.c.b16 %v2887, %v2886
    %v2893 = vsel %vm241, %v2868, 0
    %2895 = vmatprep.subr.bf16.mxu0 0
    %2896 = vmatpush1.bf16.msra.mxu0 %v2888
    %2897 = vmatprep.subr.bf16.mxu0 0
    %2898 = vmatpush1.bf16.msra.mxu0 %v2889
    %2899 = vmatprep.subr.bf16.mxu0 0
    %2900 = vmatpush1.bf16.msra.mxu0 0
    %2901 = vmatprep.subr.bf16.mxu0 0
    %2902 = vmatpush1.bf16.msra.mxu0 0
    %2903 = vmatprep.subr.bf16.mxu0 0
    %2904 = vmatpush1.bf16.msra.mxu0 0
    %2905 = vmatprep.subr.bf16.mxu0 0
    %2906 = vmatpush1.bf16.msra.mxu0 0
    %2907 = vmatprep.subr.bf16.mxu0 0
    %2908 = vmatpush1.bf16.msra.mxu0 0
    %2909 = vmatprep.subr.bf16.mxu0 0
    %2910 = vmatpush1.bf16.msra.mxu0 0
    %2911 = vmatprep.subr.bf16.mxu0 0
    %2912 = vmatpush1.bf16.msra.mxu0 0
    %2913 = vmatprep.subr.bf16.mxu0 0
    %2914 = vmatpush1.bf16.msra.mxu0 0
    %2915 = vmatprep.subr.bf16.mxu0 0
    %2916 = vmatpush1.bf16.msra.mxu0 0
    %2917 = vmatprep.subr.bf16.mxu0 0
    %2918 = vmatpush1.bf16.msra.mxu0 0
    %2919 = vmatprep.subr.bf16.mxu0 0
    %2920 = vmatpush1.bf16.msra.mxu0 0
    %2921 = vmatprep.subr.bf16.mxu0 0
    %2922 = vmatpush1.bf16.msra.mxu0 0
    %2923 = vmatprep.subr.bf16.mxu0 0
    %2924 = vmatpush1.bf16.msra.mxu0 0
    %2925 = vmatprep.subr.bf16.mxu0 0
    %2926 = vmatpush1.bf16.msra.mxu0 0
    %2927 = vmatprep.mubr.bf16.mxu0 0
    %2928 = vmatmul.mubr.bf16.gmra.mrb[0].mxu0 %v2893
    %v2929 = vpop.f32.mrb[0].mxu0
    %v2930 = vadd.f32 %v2878, %v2929
    %v2931 = vpop.f32.mrb[0].mxu0
    %v2932 = vpop.f32.mrb[0].mxu0
    %v2933 = vadd.f32 %v2878, %v2932
    %v2934 = vpop.f32.mrb[0].mxu0
    %2935 = vdwg.mxu0
    %v2936 = vxor.u32 %v2930, 2147483648
    %v2937 = vxor.u32 %v2933, 2147483648
    %v2938 = vmul.f32 %v2936, 1.442695
    %v2939 = vpow.pop %v2938
    %v2940 = vmul.f32 %v2937, 1.442695
    %v2941 = vpow.pop %v2940
    %v2942 = vadd.f32 %v2939, 1.0
    %v2943 = vadd.f32 %v2941, 1.0
    %v2944 = vrcp.pop %v2942
    %v2945 = vmul.f32 1.0, %v2944
    %v2946 = vrcp.pop %v2943
    %v2947 = vmul.f32 1.0, %v2946
    %v2948 = vtanh.pop %v2930
    %v2949 = vtanh.pop %v2933
    %v2950 = vmul.f32 %v2948, 0.5
    %v2951 = vmul.f32 %v2949, 0.5
    %vm2952 = vcmask 23552
    %v2953 = vsel %vm2952, %v2930, %v2945
    %v2954 = vsel %vm2952, %v2933, %v2947
    %vm2955 = vcmask 48128
    %v2956 = vsel %vm2955, %v2953, %v2950
    %v2957 = vsel %vm2955, %v2954, %v2951
    %2958 = vst.msk [vmem:[#allocation11] sm:$0xff] %vm152, %v2956
    %2959 = vst.msk [vmem:[#allocation11 + $0x8] sm:$0xff] %vm152, %v2957
    // Predicated region
    $region102: #{tpu_custom_call.1} parent=1 // pred_check
      _
    $region103: #{tpu_custom_call.1} parent=1 // pred_check_branch
      %2961 = sbr.rel (0) target = $region105
    $region104: #{tpu_custom_call.1} parent=1 // pred_region
      %s2963 = ssub.s32 256, 256
      %2964 = vsyncadd [#allocation4], %s2963
      %s2965 = sshll.u32 [#allocation11], 4
      %s2966 = int_to_ptr.vmem [resolvable:$true] %s2965
      %2971 = dma.vmem_to_hbm [thread:$0]  %s2966, 256, %s20, [#allocation4], 128, 128, 8
    $region105: #{tpu_custom_call.1} parent=1 // pred_fallthru
      _
    // Predicated region
    $region106: #{tpu_custom_call.1} parent=1 // pred_check
      _
    $region107: #{tpu_custom_call.1} parent=1 // pred_check_branch
      %2973 = sbr.rel (0) target = $region109
    $region108: #{tpu_custom_call.1} parent=1 // pred_region
      %2974 = dma.done [#allocation4], 256
    $region109: #{tpu_custom_call.1} parent=1 // pred_fallthru
      _
    %2975 = vsyncpa [#allocation3], 1
    %2976 = vsyncpa [#allocation6], 1
    %2977 = vsyncpa [#allocation9], 1
    %2978 = vsyncpa [#allocation4], 1

</llo_original>
